<compile_context>
chip_gen: v5e
topology: v5e:2x2
jax: 0.10.0
libtpu: 0.0.40
codegen_flags: <defaults>
</compile_context>

<pallas_src>
import functools

import jax
import jax.numpy as jnp
from jax.experimental import pallas as pl
from jax.experimental.pallas import tpu as pltpu  # noqa: F401  (TPU backend)


# ------------------------------ fused kernel ---------------------------------

def seq2seq_kernel(enc_pre_ref,                 # (S, B, 3Hp) input-side pre-activations
                   enc_wh_ref, enc_bh_ref,      # (Hp, 3Hp), (1, 3Hp)
                   oh0_ref,                     # (B, V) one-hot start token
                   dec_tab_ref,                 # (V, 3Hp) emb @ W_ih.T + b_ih, padded
                   dec_wh_ref, dec_bh_ref,      # (Hp, 3Hp), (1, 3Hp)
                   w_out_ref, b_out_ref,        # (Hp, V), (1, V)
                   out_ref):                    # (T, B, V) log-probs
    f32 = jnp.float32
    S, B, hp3 = enc_pre_ref.shape
    Hp = hp3 // 3
    T, _, V = out_ref.shape

    # Weights loaded once (VMEM-resident values; hoisted out of the loops).
    enc_wh = enc_wh_ref[...]
    enc_bh = enc_bh_ref[...]
    dec_tab = dec_tab_ref[...]
    dec_wh = dec_wh_ref[...]
    dec_bh = dec_bh_ref[...]
    w_out = w_out_ref[...]
    b_out = b_out_ref[...]

    def gru(x_pre, h, w_h, b_h):
        # x_pre already contains x @ W_ih.T + b_ih in padded gate layout.
        hh = jnp.dot(h, w_h, preferred_element_type=f32) + b_h          # (B, 3Hp)
        r = jax.nn.sigmoid(x_pre[:, :Hp] + hh[:, :Hp])
        z = jax.nn.sigmoid(x_pre[:, Hp:2 * Hp] + hh[:, Hp:2 * Hp])
        n = jnp.tanh(x_pre[:, 2 * Hp:] + r * hh[:, 2 * Hp:])
        return (1.0 - z) * n + z * h

    # ----- encoder: only the h-side matmul sits on the serial chain -----
    def enc_body(t, h):
        return gru(enc_pre_ref[t], h, enc_wh, enc_bh)

    h = jax.lax.fori_loop(0, S, enc_body, jnp.zeros((B, Hp), f32), unroll=True)

    # ----- greedy decoder -----
    lane = jax.lax.broadcasted_iota(jnp.int32, (B, V), 1)               # hoisted

    def dec_body(t, carry):
        h, oh = carry
        # Embedding lookup + input-side gate matmul fused into one one-hot matmul.
        x_pre = jnp.dot(oh, dec_tab, preferred_element_type=f32)        # (B, 3Hp)
        h = gru(x_pre, h, dec_wh, dec_bh)
        logits = jnp.dot(h, w_out, preferred_element_type=f32) + b_out  # (B, V)
        m = jnp.max(logits, axis=-1, keepdims=True)
        lse = jnp.log(jnp.sum(jnp.exp(logits - m), axis=-1, keepdims=True))
        out_ref[t] = logits - m - lse                                    # log_softmax
        # Greedy argmax (first-max tie break) -> next one-hot token.
        idx = jnp.min(jnp.where(logits == m, lane, V), axis=-1, keepdims=True)
        return h, (lane == idx).astype(f32)

    jax.lax.fori_loop(0, T, dec_body, (h, oh0_ref[...]), unroll=True)


def _run_seq2seq(enc_pre, enc_wh, enc_bh, onehot0, dec_tab, dec_wh, dec_bh,
                 w_out_t, b_out, out_seq_len):
    S, B, _ = enc_pre.shape
    V = w_out_t.shape[1]
    # Single invocation (no grid): every operand is DMA'd to VMEM exactly once and
    # the whole (T, B, V) output is flushed to HBM once at the end.
    return pl.pallas_call(
        seq2seq_kernel,
        out_shape=jax.ShapeDtypeStruct((out_seq_len, B, V), jnp.float32),
    )(enc_pre, enc_wh, enc_bh, onehot0, dec_tab, dec_wh, dec_bh, w_out_t, b_out)


# ------------------------------- parameters -----------------------------------

def init_params(key, vocab, emb, hidden):
    """PyTorch-layout parameters (gate order r, z, n)."""
    ks = jax.random.split(key, 12)

    def nrm(k, shape, s):
        return s * jax.random.normal(k, shape, jnp.float32)

    return {
        "enc_emb": nrm(ks[0], (vocab, emb), 0.3),
        "enc_w_ih": nrm(ks[1], (3 * hidden, emb), 0.3),
        "enc_w_hh": nrm(ks[2], (3 * hidden, hidden), 0.3),
        "enc_b_ih": nrm(ks[3], (3 * hidden,), 0.1),
        "enc_b_hh": nrm(ks[4], (3 * hidden,), 0.1),
        "dec_emb": nrm(ks[5], (vocab, emb), 0.3),
        "dec_w_ih": nrm(ks[6], (3 * hidden, emb), 0.3),
        "dec_w_hh": nrm(ks[7], (3 * hidden, hidden), 0.3),
        "dec_b_ih": nrm(ks[8], (3 * hidden,), 0.1),
        "dec_b_hh": nrm(ks[9], (3 * hidden,), 0.1),
        "out_w": nrm(ks[10], (vocab, hidden), 1.0),
        "out_b": nrm(ks[11], (vocab,), 0.1),
    }


def _round_up(x, m):
    return ((x + m - 1) // m) * m


def _pack_gru(w_ih, w_hh, b_ih, b_hh, H, Hp):
    """PyTorch (3H, .) GRU params -> lane-aligned padded layout.
    Returns W_x (in_dim, 3Hp), b_x (3Hp,), W_h (Hp, 3Hp), b_h (3Hp,).
    Gate g lives in columns [g*Hp, g*Hp+H); padded columns/rows are zero, which
    keeps the padded hidden-state columns exactly zero for all time steps."""
    in_dim = w_ih.shape[1]
    W_x = jnp.zeros((in_dim, 3 * Hp), jnp.float32)
    W_h = jnp.zeros((Hp, 3 * Hp), jnp.float32)
    b_x = jnp.zeros((3 * Hp,), jnp.float32)
    b_h = jnp.zeros((3 * Hp,), jnp.float32)
    for g in range(3):
        src = slice(g * H, (g + 1) * H)
        dst = slice(g * Hp, g * Hp + H)
        W_x = W_x.at[:, dst].set(w_ih[src].T)
        W_h = W_h.at[:H, dst].set(w_hh[src].T)
        b_x = b_x.at[dst].set(b_ih[src])
        b_h = b_h.at[dst].set(b_hh[src])
    return W_x, b_x, W_h, b_h


# --------------------------------- forward -------------------------------------

@functools.partial(jax.jit, static_argnames=("out_seq_len", "attention"))
def seq2seq_forward(source, params, out_seq_len=None, attention=False):
    """source: (B, S) int32 token ids -> (B, out_seq_len, V) log-probs."""
    if attention:
        # TODO(synk): attention path of the decoder (self.attention=True) not implemented.
        raise NotImplementedError("attention=True path is not implemented")

    B, S = source.shape
    if out_seq_len is None:
        out_seq_len = S
    H = params["enc_w_hh"].shape[1]
    V, E = params["dec_emb"].shape
    Hp = _round_up(H, 128)
    hi = jax.lax.Precision.HIGHEST

    enc_Wx, enc_bx, enc_Wh, enc_bh = _pack_gru(
        params["enc_w_ih"], params["enc_w_hh"], params["enc_b_ih"], params["enc_b_hh"], H, Hp)
    dec_Wx, dec_bx, dec_Wh, dec_bh = _pack_gru(
        params["dec_w_ih"], params["dec_w_hh"], params["dec_b_ih"], params["dec_b_hh"], H, Hp)

    # Encoder input-side matmul hoisted: gather straight into (S, B, E) layout and do
    # one large batched matmul for all S steps (off the recurrent chain).
    enc_emb_sbe = jnp.take(params["enc_emb"], source.T, axis=0)          # (S, B, E)
    enc_pre = jnp.dot(enc_emb_sbe, enc_Wx, precision=hi) + enc_bx        # (S, B, 3Hp)

    # Decoder: fold embedding table and input-side matmul/bias into one (V, 3Hp) table.
    dec_tab = jnp.dot(params["dec_emb"], dec_Wx, precision=hi) + dec_bx  # (V, 3Hp)

    w_out_t = jnp.zeros((Hp, V), jnp.float32).at[:H].set(params["out_w"].T)
    b_out = params["out_b"][None, :]
    onehot0 = jax.nn.one_hot(source[:, 0], V, dtype=jnp.float32)

    logp_tbv = _run_seq2seq(enc_pre, enc_Wh, enc_bh[None, :], onehot0, dec_tab,
                            dec_Wh, dec_bh[None, :], w_out_t, b_out, out_seq_len)
    return jnp.transpose(logp_tbv, (1, 0, 2))                            # (B, T, V)


# ---------------------------- pure-JAX reference --------------------------------

def seq2seq_reference(source, params, out_seq_len=None):
    """Plain-JAX (no Pallas) reference with PyTorch GRU semantics."""
    hi = jax.lax.Precision.HIGHEST

    def gru(x, h, w_ih, w_hh, b_ih, b_hh):
        gi = jnp.dot(x, w_ih.T, precision=hi) + b_ih
        gh = jnp.dot(h, w_hh.T, precision=hi) + b_hh
        i_r, i_z, i_n = jnp.split(gi, 3, axis=-1)
        h_r, h_z, h_n = jnp.split(gh, 3, axis=-1)
        r = jax.nn.sigmoid(i_r + h_r)
        z = jax.nn.sigmoid(i_z + h_z)
        n = jnp.tanh(i_n + r * h_n)
        return (1.0 - z) * n + z * h

    B, S = source.shape
    if out_seq_len is None:
        out_seq_len = S
    H = params["enc_w_hh"].shape[1]

    h = jnp.zeros((B, H), jnp.float32)
    emb = jnp.take(params["enc_emb"], source, axis=0)
    for t in range(S):
        h = gru(emb[:, t], h, params["enc_w_ih"], params["enc_w_hh"],
                params["enc_b_ih"], params["enc_b_hh"])

    tok = source[:, 0]
    outs = []
    for _ in range(out_seq_len):
        x = jnp.take(params["dec_emb"], tok, axis=0)
        h = gru(x, h, params["dec_w_ih"], params["dec_w_hh"],
                params["dec_b_ih"], params["dec_b_hh"])
        logits = jnp.dot(h, params["out_w"].T, precision=hi) + params["out_b"]
        logp = jax.nn.log_softmax(logits, axis=-1)
        outs.append(logp)
        tok = jnp.argmax(logp, axis=-1)
    return jnp.stack(outs, axis=1)


# ----------------------------------- main ---------------------------------------

if __name__ == "__main__":
    BATCH = 2
    SEQ_LEN = 8
    VOCAB = 32
    EMB_DIM = 16
    HIDDEN = 32

    key = jax.random.PRNGKey(0)
    k_param, k_src = jax.random.split(key)

    params = init_params(k_param, VOCAB, EMB_DIM, HIDDEN)
    source = jax.random.randint(k_src, (BATCH, SEQ_LEN), 0, VOCAB, dtype=jnp.int32)

    outputs = seq2seq_forward(source, params)
    outputs = jax.block_until_ready(outputs)

    assert outputs.shape == (BATCH, SEQ_LEN, VOCAB)
    assert outputs.dtype == jnp.float32
    assert bool(jnp.all(jnp.isfinite(outputs)))

    ref = seq2seq_reference(source, params)
    max_err = float(jnp.max(jnp.abs(outputs - ref)))
    assert bool(jnp.allclose(outputs, ref, atol=1e-3, rtol=1e-3)), max_err

    print("KERNEL_OK")
</pallas_src>

<mosaic_0001>
module attributes {stable_mosaic.version = 11 : i64} {
  func.func @seq2seq_kernel(%arg0: memref<8x2x384xf32, #tpu.memory_space<vmem>>, %arg1: memref<128x384xf32, #tpu.memory_space<vmem>>, %arg2: memref<1x384xf32, #tpu.memory_space<vmem>>, %arg3: memref<2x32xf32, #tpu.memory_space<vmem>>, %arg4: memref<32x384xf32, #tpu.memory_space<vmem>>, %arg5: memref<128x384xf32, #tpu.memory_space<vmem>>, %arg6: memref<1x384xf32, #tpu.memory_space<vmem>>, %arg7: memref<128x32xf32, #tpu.memory_space<vmem>>, %arg8: memref<1x32xf32, #tpu.memory_space<vmem>>, %arg9: memref<8x2x32xf32, #tpu.memory_space<vmem>>) attributes {dimension_semantics = [], scalar_prefetch = 0 : i64, scratch_operands = 0 : i64, tpu.core_type = #tpu.core_type<tc>} {
    %c0 = arith.constant 0 : index
    %c0_0 = arith.constant 0 : index
    %0 = vector.load %arg1[%c0, %c0_0] : memref<128x384xf32, #tpu.memory_space<vmem>>, vector<128x384xf32>
    %c0_1 = arith.constant 0 : index
    %c0_2 = arith.constant 0 : index
    %1 = vector.load %arg2[%c0_1, %c0_2] : memref<1x384xf32, #tpu.memory_space<vmem>>, vector<1x384xf32>
    %c0_3 = arith.constant 0 : index
    %c0_4 = arith.constant 0 : index
    %2 = vector.load %arg4[%c0_3, %c0_4] : memref<32x384xf32, #tpu.memory_space<vmem>>, vector<32x384xf32>
    %c0_5 = arith.constant 0 : index
    %c0_6 = arith.constant 0 : index
    %3 = vector.load %arg5[%c0_5, %c0_6] : memref<128x384xf32, #tpu.memory_space<vmem>>, vector<128x384xf32>
    %c0_7 = arith.constant 0 : index
    %c0_8 = arith.constant 0 : index
    %4 = vector.load %arg6[%c0_7, %c0_8] : memref<1x384xf32, #tpu.memory_space<vmem>>, vector<1x384xf32>
    %c0_9 = arith.constant 0 : index
    %c0_10 = arith.constant 0 : index
    %5 = vector.load %arg7[%c0_9, %c0_10] : memref<128x32xf32, #tpu.memory_space<vmem>>, vector<128x32xf32>
    %c0_11 = arith.constant 0 : index
    %c0_12 = arith.constant 0 : index
    %6 = vector.load %arg8[%c0_11, %c0_12] : memref<1x32xf32, #tpu.memory_space<vmem>>, vector<1x32xf32>
    %cst = arith.constant 0.000000e+00 : f32
    %7 = vector.broadcast %cst : f32 to vector<2x128xf32>
    %c0_i32 = arith.constant 0 : i32
    %8 = arith.index_cast %c0_i32 : i32 to index
    %c0_13 = arith.constant 0 : index
    %c0_14 = arith.constant 0 : index
    %9 = vector.load %arg0[%8, %c0_13, %c0_14] : memref<8x2x384xf32, #tpu.memory_space<vmem>>, vector<1x2x384xf32>
    %10 = vector.shape_cast %9 : vector<1x2x384xf32> to vector<2x384xf32>
    %cst_15 = arith.constant dense<0.000000e+00> : vector<2x384xf32>
    %11 = tpu.matmul %7, %0, %cst_15 {dimension_numbers = #tpu.dot_dimension_numbers<[1], [0], [0], [1], [0, 0, 1, 1], [], []>} : vector<2x128xf32>, vector<128x384xf32>, vector<2x384xf32> -> vector<2x384xf32>
    %12 = vector.broadcast %1 : vector<1x384xf32> to vector<2x384xf32>
    %13 = arith.addf %11, %12 : vector<2x384xf32>
    %14 = vector.extract_strided_slice %10 {offsets = [0, 0], sizes = [2, 128], strides = [1, 1]} : vector<2x384xf32> to vector<2x128xf32>
    %15 = vector.extract_strided_slice %13 {offsets = [0, 0], sizes = [2, 128], strides = [1, 1]} : vector<2x384xf32> to vector<2x128xf32>
    %16 = arith.addf %14, %15 : vector<2x128xf32>
    %17 = arith.negf %16 : vector<2x128xf32>
    %18 = math.exp %17 : vector<2x128xf32>
    %cst_16 = arith.constant 1.000000e+00 : f32
    %19 = vector.broadcast %cst_16 : f32 to vector<2x128xf32>
    %20 = arith.addf %19, %18 : vector<2x128xf32>
    %21 = arith.divf %19, %20 : vector<2x128xf32>
    %22 = vector.extract_strided_slice %10 {offsets = [0, 128], sizes = [2, 128], strides = [1, 1]} : vector<2x384xf32> to vector<2x128xf32>
    %23 = vector.extract_strided_slice %13 {offsets = [0, 128], sizes = [2, 128], strides = [1, 1]} : vector<2x384xf32> to vector<2x128xf32>
    %24 = arith.addf %22, %23 : vector<2x128xf32>
    %25 = arith.negf %24 : vector<2x128xf32>
    %26 = math.exp %25 : vector<2x128xf32>
    %cst_17 = arith.constant 1.000000e+00 : f32
    %27 = vector.broadcast %cst_17 : f32 to vector<2x128xf32>
    %28 = arith.addf %27, %26 : vector<2x128xf32>
    %29 = arith.divf %27, %28 : vector<2x128xf32>
    %30 = vector.extract_strided_slice %10 {offsets = [0, 256], sizes = [2, 128], strides = [1, 1]} : vector<2x384xf32> to vector<2x128xf32>
    %31 = vector.extract_strided_slice %13 {offsets = [0, 256], sizes = [2, 128], strides = [1, 1]} : vector<2x384xf32> to vector<2x128xf32>
    %32 = arith.mulf %21, %31 : vector<2x128xf32>
    %33 = arith.addf %30, %32 : vector<2x128xf32>
    %34 = math.tanh %33 : vector<2x128xf32>
    %cst_18 = arith.constant 1.000000e+00 : f32
    %35 = vector.broadcast %cst_18 : f32 to vector<2x128xf32>
    %36 = arith.subf %35, %29 : vector<2x128xf32>
    %37 = arith.mulf %36, %34 : vector<2x128xf32>
    %38 = arith.mulf %29, %7 : vector<2x128xf32>
    %39 = arith.addf %37, %38 : vector<2x128xf32>
    %c1_i32 = arith.constant 1 : i32
    %40 = arith.index_cast %c1_i32 : i32 to index
    %c0_19 = arith.constant 0 : index
    %c0_20 = arith.constant 0 : index
    %41 = vector.load %arg0[%40, %c0_19, %c0_20] : memref<8x2x384xf32, #tpu.memory_space<vmem>>, vector<1x2x384xf32>
    %42 = vector.shape_cast %41 : vector<1x2x384xf32> to vector<2x384xf32>
    %cst_21 = arith.constant dense<0.000000e+00> : vector<2x384xf32>
    %43 = tpu.matmul %39, %0, %cst_21 {dimension_numbers = #tpu.dot_dimension_numbers<[1], [0], [0], [1], [0, 0, 1, 1], [], []>} : vector<2x128xf32>, vector<128x384xf32>, vector<2x384xf32> -> vector<2x384xf32>
    %44 = vector.broadcast %1 : vector<1x384xf32> to vector<2x384xf32>
    %45 = arith.addf %43, %44 : vector<2x384xf32>
    %46 = vector.extract_strided_slice %42 {offsets = [0, 0], sizes = [2, 128], strides = [1, 1]} : vector<2x384xf32> to vector<2x128xf32>
    %47 = vector.extract_strided_slice %45 {offsets = [0, 0], sizes = [2, 128], strides = [1, 1]} : vector<2x384xf32> to vector<2x128xf32>
    %48 = arith.addf %46, %47 : vector<2x128xf32>
    %49 = arith.negf %48 : vector<2x128xf32>
    %50 = math.exp %49 : vector<2x128xf32>
    %cst_22 = arith.constant 1.000000e+00 : f32
    %51 = vector.broadcast %cst_22 : f32 to vector<2x128xf32>
    %52 = arith.addf %51, %50 : vector<2x128xf32>
    %53 = arith.divf %51, %52 : vector<2x128xf32>
    %54 = vector.extract_strided_slice %42 {offsets = [0, 128], sizes = [2, 128], strides = [1, 1]} : vector<2x384xf32> to vector<2x128xf32>
    %55 = vector.extract_strided_slice %45 {offsets = [0, 128], sizes = [2, 128], strides = [1, 1]} : vector<2x384xf32> to vector<2x128xf32>
    %56 = arith.addf %54, %55 : vector<2x128xf32>
    %57 = arith.negf %56 : vector<2x128xf32>
    %58 = math.exp %57 : vector<2x128xf32>
    %cst_23 = arith.constant 1.000000e+00 : f32
    %59 = vector.broadcast %cst_23 : f32 to vector<2x128xf32>
    %60 = arith.addf %59, %58 : vector<2x128xf32>
    %61 = arith.divf %59, %60 : vector<2x128xf32>
    %62 = vector.extract_strided_slice %42 {offsets = [0, 256], sizes = [2, 128], strides = [1, 1]} : vector<2x384xf32> to vector<2x128xf32>
    %63 = vector.extract_strided_slice %45 {offsets = [0, 256], sizes = [2, 128], strides = [1, 1]} : vector<2x384xf32> to vector<2x128xf32>
    %64 = arith.mulf %53, %63 : vector<2x128xf32>
    %65 = arith.addf %62, %64 : vector<2x128xf32>
    %66 = math.tanh %65 : vector<2x128xf32>
    %cst_24 = arith.constant 1.000000e+00 : f32
    %67 = vector.broadcast %cst_24 : f32 to vector<2x128xf32>
    %68 = arith.subf %67, %61 : vector<2x128xf32>
    %69 = arith.mulf %68, %66 : vector<2x128xf32>
    %70 = arith.mulf %61, %39 : vector<2x128xf32>
    %71 = arith.addf %69, %70 : vector<2x128xf32>
    %c2_i32 = arith.constant 2 : i32
    %72 = arith.index_cast %c2_i32 : i32 to index
    %c0_25 = arith.constant 0 : index
    %c0_26 = arith.constant 0 : index
    %73 = vector.load %arg0[%72, %c0_25, %c0_26] : memref<8x2x384xf32, #tpu.memory_space<vmem>>, vector<1x2x384xf32>
    %74 = vector.shape_cast %73 : vector<1x2x384xf32> to vector<2x384xf32>
    %cst_27 = arith.constant dense<0.000000e+00> : vector<2x384xf32>
    %75 = tpu.matmul %71, %0, %cst_27 {dimension_numbers = #tpu.dot_dimension_numbers<[1], [0], [0], [1], [0, 0, 1, 1], [], []>} : vector<2x128xf32>, vector<128x384xf32>, vector<2x384xf32> -> vector<2x384xf32>
    %76 = vector.broadcast %1 : vector<1x384xf32> to vector<2x384xf32>
    %77 = arith.addf %75, %76 : vector<2x384xf32>
    %78 = vector.extract_strided_slice %74 {offsets = [0, 0], sizes = [2, 128], strides = [1, 1]} : vector<2x384xf32> to vector<2x128xf32>
    %79 = vector.extract_strided_slice %77 {offsets = [0, 0], sizes = [2, 128], strides = [1, 1]} : vector<2x384xf32> to vector<2x128xf32>
    %80 = arith.addf %78, %79 : vector<2x128xf32>
    %81 = arith.negf %80 : vector<2x128xf32>
    %82 = math.exp %81 : vector<2x128xf32>
    %cst_28 = arith.constant 1.000000e+00 : f32
    %83 = vector.broadcast %cst_28 : f32 to vector<2x128xf32>
    %84 = arith.addf %83, %82 : vector<2x128xf32>
    %85 = arith.divf %83, %84 : vector<2x128xf32>
    %86 = vector.extract_strided_slice %74 {offsets = [0, 128], sizes = [2, 128], strides = [1, 1]} : vector<2x384xf32> to vector<2x128xf32>
    %87 = vector.extract_strided_slice %77 {offsets = [0, 128], sizes = [2, 128], strides = [1, 1]} : vector<2x384xf32> to vector<2x128xf32>
    %88 = arith.addf %86, %87 : vector<2x128xf32>
    %89 = arith.negf %88 : vector<2x128xf32>
    %90 = math.exp %89 : vector<2x128xf32>
    %cst_29 = arith.constant 1.000000e+00 : f32
    %91 = vector.broadcast %cst_29 : f32 to vector<2x128xf32>
    %92 = arith.addf %91, %90 : vector<2x128xf32>
    %93 = arith.divf %91, %92 : vector<2x128xf32>
    %94 = vector.extract_strided_slice %74 {offsets = [0, 256], sizes = [2, 128], strides = [1, 1]} : vector<2x384xf32> to vector<2x128xf32>
    %95 = vector.extract_strided_slice %77 {offsets = [0, 256], sizes = [2, 128], strides = [1, 1]} : vector<2x384xf32> to vector<2x128xf32>
    %96 = arith.mulf %85, %95 : vector<2x128xf32>
    %97 = arith.addf %94, %96 : vector<2x128xf32>
    %98 = math.tanh %97 : vector<2x128xf32>
    %cst_30 = arith.constant 1.000000e+00 : f32
    %99 = vector.broadcast %cst_30 : f32 to vector<2x128xf32>
    %100 = arith.subf %99, %93 : vector<2x128xf32>
    %101 = arith.mulf %100, %98 : vector<2x128xf32>
    %102 = arith.mulf %93, %71 : vector<2x128xf32>
    %103 = arith.addf %101, %102 : vector<2x128xf32>
    %c3_i32 = arith.constant 3 : i32
    %104 = arith.index_cast %c3_i32 : i32 to index
    %c0_31 = arith.constant 0 : index
    %c0_32 = arith.constant 0 : index
    %105 = vector.load %arg0[%104, %c0_31, %c0_32] : memref<8x2x384xf32, #tpu.memory_space<vmem>>, vector<1x2x384xf32>
    %106 = vector.shape_cast %105 : vector<1x2x384xf32> to vector<2x384xf32>
    %cst_33 = arith.constant dense<0.000000e+00> : vector<2x384xf32>
    %107 = tpu.matmul %103, %0, %cst_33 {dimension_numbers = #tpu.dot_dimension_numbers<[1], [0], [0], [1], [0, 0, 1, 1], [], []>} : vector<2x128xf32>, vector<128x384xf32>, vector<2x384xf32> -> vector<2x384xf32>
    %108 = vector.broadcast %1 : vector<1x384xf32> to vector<2x384xf32>
    %109 = arith.addf %107, %108 : vector<2x384xf32>
    %110 = vector.extract_strided_slice %106 {offsets = [0, 0], sizes = [2, 128], strides = [1, 1]} : vector<2x384xf32> to vector<2x128xf32>
    %111 = vector.extract_strided_slice %109 {offsets = [0, 0], sizes = [2, 128], strides = [1, 1]} : vector<2x384xf32> to vector<2x128xf32>
    %112 = arith.addf %110, %111 : vector<2x128xf32>
    %113 = arith.negf %112 : vector<2x128xf32>
    %114 = math.exp %113 : vector<2x128xf32>
    %cst_34 = arith.constant 1.000000e+00 : f32
    %115 = vector.broadcast %cst_34 : f32 to vector<2x128xf32>
    %116 = arith.addf %115, %114 : vector<2x128xf32>
    %117 = arith.divf %115, %116 : vector<2x128xf32>
    %118 = vector.extract_strided_slice %106 {offsets = [0, 128], sizes = [2, 128], strides = [1, 1]} : vector<2x384xf32> to vector<2x128xf32>
    %119 = vector.extract_strided_slice %109 {offsets = [0, 128], sizes = [2, 128], strides = [1, 1]} : vector<2x384xf32> to vector<2x128xf32>
    %120 = arith.addf %118, %119 : vector<2x128xf32>
    %121 = arith.negf %120 : vector<2x128xf32>
    %122 = math.exp %121 : vector<2x128xf32>
    %cst_35 = arith.constant 1.000000e+00 : f32
    %123 = vector.broadcast %cst_35 : f32 to vector<2x128xf32>
    %124 = arith.addf %123, %122 : vector<2x128xf32>
    %125 = arith.divf %123, %124 : vector<2x128xf32>
    %126 = vector.extract_strided_slice %106 {offsets = [0, 256], sizes = [2, 128], strides = [1, 1]} : vector<2x384xf32> to vector<2x128xf32>
    %127 = vector.extract_strided_slice %109 {offsets = [0, 256], sizes = [2, 128], strides = [1, 1]} : vector<2x384xf32> to vector<2x128xf32>
    %128 = arith.mulf %117, %127 : vector<2x128xf32>
    %129 = arith.addf %126, %128 : vector<2x128xf32>
    %130 = math.tanh %129 : vector<2x128xf32>
    %cst_36 = arith.constant 1.000000e+00 : f32
    %131 = vector.broadcast %cst_36 : f32 to vector<2x128xf32>
    %132 = arith.subf %131, %125 : vector<2x128xf32>
    %133 = arith.mulf %132, %130 : vector<2x128xf32>
    %134 = arith.mulf %125, %103 : vector<2x128xf32>
    %135 = arith.addf %133, %134 : vector<2x128xf32>
    %c4_i32 = arith.constant 4 : i32
    %136 = arith.index_cast %c4_i32 : i32 to index
    %c0_37 = arith.constant 0 : index
    %c0_38 = arith.constant 0 : index
    %137 = vector.load %arg0[%136, %c0_37, %c0_38] : memref<8x2x384xf32, #tpu.memory_space<vmem>>, vector<1x2x384xf32>
    %138 = vector.shape_cast %137 : vector<1x2x384xf32> to vector<2x384xf32>
    %cst_39 = arith.constant dense<0.000000e+00> : vector<2x384xf32>
    %139 = tpu.matmul %135, %0, %cst_39 {dimension_numbers = #tpu.dot_dimension_numbers<[1], [0], [0], [1], [0, 0, 1, 1], [], []>} : vector<2x128xf32>, vector<128x384xf32>, vector<2x384xf32> -> vector<2x384xf32>
    %140 = vector.broadcast %1 : vector<1x384xf32> to vector<2x384xf32>
    %141 = arith.addf %139, %140 : vector<2x384xf32>
    %142 = vector.extract_strided_slice %138 {offsets = [0, 0], sizes = [2, 128], strides = [1, 1]} : vector<2x384xf32> to vector<2x128xf32>
    %143 = vector.extract_strided_slice %141 {offsets = [0, 0], sizes = [2, 128], strides = [1, 1]} : vector<2x384xf32> to vector<2x128xf32>
    %144 = arith.addf %142, %143 : vector<2x128xf32>
    %145 = arith.negf %144 : vector<2x128xf32>
    %146 = math.exp %145 : vector<2x128xf32>
    %cst_40 = arith.constant 1.000000e+00 : f32
    %147 = vector.broadcast %cst_40 : f32 to vector<2x128xf32>
    %148 = arith.addf %147, %146 : vector<2x128xf32>
    %149 = arith.divf %147, %148 : vector<2x128xf32>
    %150 = vector.extract_strided_slice %138 {offsets = [0, 128], sizes = [2, 128], strides = [1, 1]} : vector<2x384xf32> to vector<2x128xf32>
    %151 = vector.extract_strided_slice %141 {offsets = [0, 128], sizes = [2, 128], strides = [1, 1]} : vector<2x384xf32> to vector<2x128xf32>
    %152 = arith.addf %150, %151 : vector<2x128xf32>
    %153 = arith.negf %152 : vector<2x128xf32>
    %154 = math.exp %153 : vector<2x128xf32>
    %cst_41 = arith.constant 1.000000e+00 : f32
    %155 = vector.broadcast %cst_41 : f32 to vector<2x128xf32>
    %156 = arith.addf %155, %154 : vector<2x128xf32>
    %157 = arith.divf %155, %156 : vector<2x128xf32>
    %158 = vector.extract_strided_slice %138 {offsets = [0, 256], sizes = [2, 128], strides = [1, 1]} : vector<2x384xf32> to vector<2x128xf32>
    %159 = vector.extract_strided_slice %141 {offsets = [0, 256], sizes = [2, 128], strides = [1, 1]} : vector<2x384xf32> to vector<2x128xf32>
    %160 = arith.mulf %149, %159 : vector<2x128xf32>
    %161 = arith.addf %158, %160 : vector<2x128xf32>
    %162 = math.tanh %161 : vector<2x128xf32>
    %cst_42 = arith.constant 1.000000e+00 : f32
    %163 = vector.broadcast %cst_42 : f32 to vector<2x128xf32>
    %164 = arith.subf %163, %157 : vector<2x128xf32>
    %165 = arith.mulf %164, %162 : vector<2x128xf32>
    %166 = arith.mulf %157, %135 : vector<2x128xf32>
    %167 = arith.addf %165, %166 : vector<2x128xf32>
    %c5_i32 = arith.constant 5 : i32
    %168 = arith.index_cast %c5_i32 : i32 to index
    %c0_43 = arith.constant 0 : index
    %c0_44 = arith.constant 0 : index
    %169 = vector.load %arg0[%168, %c0_43, %c0_44] : memref<8x2x384xf32, #tpu.memory_space<vmem>>, vector<1x2x384xf32>
    %170 = vector.shape_cast %169 : vector<1x2x384xf32> to vector<2x384xf32>
    %cst_45 = arith.constant dense<0.000000e+00> : vector<2x384xf32>
    %171 = tpu.matmul %167, %0, %cst_45 {dimension_numbers = #tpu.dot_dimension_numbers<[1], [0], [0], [1], [0, 0, 1, 1], [], []>} : vector<2x128xf32>, vector<128x384xf32>, vector<2x384xf32> -> vector<2x384xf32>
    %172 = vector.broadcast %1 : vector<1x384xf32> to vector<2x384xf32>
    %173 = arith.addf %171, %172 : vector<2x384xf32>
    %174 = vector.extract_strided_slice %170 {offsets = [0, 0], sizes = [2, 128], strides = [1, 1]} : vector<2x384xf32> to vector<2x128xf32>
    %175 = vector.extract_strided_slice %173 {offsets = [0, 0], sizes = [2, 128], strides = [1, 1]} : vector<2x384xf32> to vector<2x128xf32>
    %176 = arith.addf %174, %175 : vector<2x128xf32>
    %177 = arith.negf %176 : vector<2x128xf32>
    %178 = math.exp %177 : vector<2x128xf32>
    %cst_46 = arith.constant 1.000000e+00 : f32
    %179 = vector.broadcast %cst_46 : f32 to vector<2x128xf32>
    %180 = arith.addf %179, %178 : vector<2x128xf32>
    %181 = arith.divf %179, %180 : vector<2x128xf32>
    %182 = vector.extract_strided_slice %170 {offsets = [0, 128], sizes = [2, 128], strides = [1, 1]} : vector<2x384xf32> to vector<2x128xf32>
    %183 = vector.extract_strided_slice %173 {offsets = [0, 128], sizes = [2, 128], strides = [1, 1]} : vector<2x384xf32> to vector<2x128xf32>
    %184 = arith.addf %182, %183 : vector<2x128xf32>
    %185 = arith.negf %184 : vector<2x128xf32>
    %186 = math.exp %185 : vector<2x128xf32>
    %cst_47 = arith.constant 1.000000e+00 : f32
    %187 = vector.broadcast %cst_47 : f32 to vector<2x128xf32>
    %188 = arith.addf %187, %186 : vector<2x128xf32>
    %189 = arith.divf %187, %188 : vector<2x128xf32>
    %190 = vector.extract_strided_slice %170 {offsets = [0, 256], sizes = [2, 128], strides = [1, 1]} : vector<2x384xf32> to vector<2x128xf32>
    %191 = vector.extract_strided_slice %173 {offsets = [0, 256], sizes = [2, 128], strides = [1, 1]} : vector<2x384xf32> to vector<2x128xf32>
    %192 = arith.mulf %181, %191 : vector<2x128xf32>
    %193 = arith.addf %190, %192 : vector<2x128xf32>
    %194 = math.tanh %193 : vector<2x128xf32>
    %cst_48 = arith.constant 1.000000e+00 : f32
    %195 = vector.broadcast %cst_48 : f32 to vector<2x128xf32>
    %196 = arith.subf %195, %189 : vector<2x128xf32>
    %197 = arith.mulf %196, %194 : vector<2x128xf32>
    %198 = arith.mulf %189, %167 : vector<2x128xf32>
    %199 = arith.addf %197, %198 : vector<2x128xf32>
    %c6_i32 = arith.constant 6 : i32
    %200 = arith.index_cast %c6_i32 : i32 to index
    %c0_49 = arith.constant 0 : index
    %c0_50 = arith.constant 0 : index
    %201 = vector.load %arg0[%200, %c0_49, %c0_50] : memref<8x2x384xf32, #tpu.memory_space<vmem>>, vector<1x2x384xf32>
    %202 = vector.shape_cast %201 : vector<1x2x384xf32> to vector<2x384xf32>
    %cst_51 = arith.constant dense<0.000000e+00> : vector<2x384xf32>
    %203 = tpu.matmul %199, %0, %cst_51 {dimension_numbers = #tpu.dot_dimension_numbers<[1], [0], [0], [1], [0, 0, 1, 1], [], []>} : vector<2x128xf32>, vector<128x384xf32>, vector<2x384xf32> -> vector<2x384xf32>
    %204 = vector.broadcast %1 : vector<1x384xf32> to vector<2x384xf32>
    %205 = arith.addf %203, %204 : vector<2x384xf32>
    %206 = vector.extract_strided_slice %202 {offsets = [0, 0], sizes = [2, 128], strides = [1, 1]} : vector<2x384xf32> to vector<2x128xf32>
    %207 = vector.extract_strided_slice %205 {offsets = [0, 0], sizes = [2, 128], strides = [1, 1]} : vector<2x384xf32> to vector<2x128xf32>
    %208 = arith.addf %206, %207 : vector<2x128xf32>
    %209 = arith.negf %208 : vector<2x128xf32>
    %210 = math.exp %209 : vector<2x128xf32>
    %cst_52 = arith.constant 1.000000e+00 : f32
    %211 = vector.broadcast %cst_52 : f32 to vector<2x128xf32>
    %212 = arith.addf %211, %210 : vector<2x128xf32>
    %213 = arith.divf %211, %212 : vector<2x128xf32>
    %214 = vector.extract_strided_slice %202 {offsets = [0, 128], sizes = [2, 128], strides = [1, 1]} : vector<2x384xf32> to vector<2x128xf32>
    %215 = vector.extract_strided_slice %205 {offsets = [0, 128], sizes = [2, 128], strides = [1, 1]} : vector<2x384xf32> to vector<2x128xf32>
    %216 = arith.addf %214, %215 : vector<2x128xf32>
    %217 = arith.negf %216 : vector<2x128xf32>
    %218 = math.exp %217 : vector<2x128xf32>
    %cst_53 = arith.constant 1.000000e+00 : f32
    %219 = vector.broadcast %cst_53 : f32 to vector<2x128xf32>
    %220 = arith.addf %219, %218 : vector<2x128xf32>
    %221 = arith.divf %219, %220 : vector<2x128xf32>
    %222 = vector.extract_strided_slice %202 {offsets = [0, 256], sizes = [2, 128], strides = [1, 1]} : vector<2x384xf32> to vector<2x128xf32>
    %223 = vector.extract_strided_slice %205 {offsets = [0, 256], sizes = [2, 128], strides = [1, 1]} : vector<2x384xf32> to vector<2x128xf32>
    %224 = arith.mulf %213, %223 : vector<2x128xf32>
    %225 = arith.addf %222, %224 : vector<2x128xf32>
    %226 = math.tanh %225 : vector<2x128xf32>
    %cst_54 = arith.constant 1.000000e+00 : f32
    %227 = vector.broadcast %cst_54 : f32 to vector<2x128xf32>
    %228 = arith.subf %227, %221 : vector<2x128xf32>
    %229 = arith.mulf %228, %226 : vector<2x128xf32>
    %230 = arith.mulf %221, %199 : vector<2x128xf32>
    %231 = arith.addf %229, %230 : vector<2x128xf32>
    %c7_i32 = arith.constant 7 : i32
    %232 = arith.index_cast %c7_i32 : i32 to index
    %c0_55 = arith.constant 0 : index
    %c0_56 = arith.constant 0 : index
    %233 = vector.load %arg0[%232, %c0_55, %c0_56] : memref<8x2x384xf32, #tpu.memory_space<vmem>>, vector<1x2x384xf32>
    %234 = vector.shape_cast %233 : vector<1x2x384xf32> to vector<2x384xf32>
    %cst_57 = arith.constant dense<0.000000e+00> : vector<2x384xf32>
    %235 = tpu.matmul %231, %0, %cst_57 {dimension_numbers = #tpu.dot_dimension_numbers<[1], [0], [0], [1], [0, 0, 1, 1], [], []>} : vector<2x128xf32>, vector<128x384xf32>, vector<2x384xf32> -> vector<2x384xf32>
    %236 = vector.broadcast %1 : vector<1x384xf32> to vector<2x384xf32>
    %237 = arith.addf %235, %236 : vector<2x384xf32>
    %238 = vector.extract_strided_slice %234 {offsets = [0, 0], sizes = [2, 128], strides = [1, 1]} : vector<2x384xf32> to vector<2x128xf32>
    %239 = vector.extract_strided_slice %237 {offsets = [0, 0], sizes = [2, 128], strides = [1, 1]} : vector<2x384xf32> to vector<2x128xf32>
    %240 = arith.addf %238, %239 : vector<2x128xf32>
    %241 = arith.negf %240 : vector<2x128xf32>
    %242 = math.exp %241 : vector<2x128xf32>
    %cst_58 = arith.constant 1.000000e+00 : f32
    %243 = vector.broadcast %cst_58 : f32 to vector<2x128xf32>
    %244 = arith.addf %243, %242 : vector<2x128xf32>
    %245 = arith.divf %243, %244 : vector<2x128xf32>
    %246 = vector.extract_strided_slice %234 {offsets = [0, 128], sizes = [2, 128], strides = [1, 1]} : vector<2x384xf32> to vector<2x128xf32>
    %247 = vector.extract_strided_slice %237 {offsets = [0, 128], sizes = [2, 128], strides = [1, 1]} : vector<2x384xf32> to vector<2x128xf32>
    %248 = arith.addf %246, %247 : vector<2x128xf32>
    %249 = arith.negf %248 : vector<2x128xf32>
    %250 = math.exp %249 : vector<2x128xf32>
    %cst_59 = arith.constant 1.000000e+00 : f32
    %251 = vector.broadcast %cst_59 : f32 to vector<2x128xf32>
    %252 = arith.addf %251, %250 : vector<2x128xf32>
    %253 = arith.divf %251, %252 : vector<2x128xf32>
    %254 = vector.extract_strided_slice %234 {offsets = [0, 256], sizes = [2, 128], strides = [1, 1]} : vector<2x384xf32> to vector<2x128xf32>
    %255 = vector.extract_strided_slice %237 {offsets = [0, 256], sizes = [2, 128], strides = [1, 1]} : vector<2x384xf32> to vector<2x128xf32>
    %256 = arith.mulf %245, %255 : vector<2x128xf32>
    %257 = arith.addf %254, %256 : vector<2x128xf32>
    %258 = math.tanh %257 : vector<2x128xf32>
    %cst_60 = arith.constant 1.000000e+00 : f32
    %259 = vector.broadcast %cst_60 : f32 to vector<2x128xf32>
    %260 = arith.subf %259, %253 : vector<2x128xf32>
    %261 = arith.mulf %260, %258 : vector<2x128xf32>
    %262 = arith.mulf %253, %231 : vector<2x128xf32>
    %263 = arith.addf %261, %262 : vector<2x128xf32>
    %c8_i32 = arith.constant 8 : i32
    %264 = tpu.iota {dimensions = array<i32: 1>} : vector<2x32xi32>
    %c0_61 = arith.constant 0 : index
    %c0_62 = arith.constant 0 : index
    %265 = vector.load %arg3[%c0_61, %c0_62] : memref<2x32xf32, #tpu.memory_space<vmem>>, vector<2x32xf32>
    %c0_i32_63 = arith.constant 0 : i32
    %cst_64 = arith.constant dense<0.000000e+00> : vector<2x384xf32>
    %266 = tpu.matmul %265, %2, %cst_64 {dimension_numbers = #tpu.dot_dimension_numbers<[1], [0], [0], [1], [0, 0, 1, 1], [], []>} : vector<2x32xf32>, vector<32x384xf32>, vector<2x384xf32> -> vector<2x384xf32>
    %cst_65 = arith.constant dense<0.000000e+00> : vector<2x384xf32>
    %267 = tpu.matmul %263, %3, %cst_65 {dimension_numbers = #tpu.dot_dimension_numbers<[1], [0], [0], [1], [0, 0, 1, 1], [], []>} : vector<2x128xf32>, vector<128x384xf32>, vector<2x384xf32> -> vector<2x384xf32>
    %268 = vector.broadcast %4 : vector<1x384xf32> to vector<2x384xf32>
    %269 = arith.addf %267, %268 : vector<2x384xf32>
    %270 = vector.extract_strided_slice %266 {offsets = [0, 0], sizes = [2, 128], strides = [1, 1]} : vector<2x384xf32> to vector<2x128xf32>
    %271 = vector.extract_strided_slice %269 {offsets = [0, 0], sizes = [2, 128], strides = [1, 1]} : vector<2x384xf32> to vector<2x128xf32>
    %272 = arith.addf %270, %271 : vector<2x128xf32>
    %273 = arith.negf %272 : vector<2x128xf32>
    %274 = math.exp %273 : vector<2x128xf32>
    %cst_66 = arith.constant 1.000000e+00 : f32
    %275 = vector.broadcast %cst_66 : f32 to vector<2x128xf32>
    %276 = arith.addf %275, %274 : vector<2x128xf32>
    %277 = arith.divf %275, %276 : vector<2x128xf32>
    %278 = vector.extract_strided_slice %266 {offsets = [0, 128], sizes = [2, 128], strides = [1, 1]} : vector<2x384xf32> to vector<2x128xf32>
    %279 = vector.extract_strided_slice %269 {offsets = [0, 128], sizes = [2, 128], strides = [1, 1]} : vector<2x384xf32> to vector<2x128xf32>
    %280 = arith.addf %278, %279 : vector<2x128xf32>
    %281 = arith.negf %280 : vector<2x128xf32>
    %282 = math.exp %281 : vector<2x128xf32>
    %cst_67 = arith.constant 1.000000e+00 : f32
    %283 = vector.broadcast %cst_67 : f32 to vector<2x128xf32>
    %284 = arith.addf %283, %282 : vector<2x128xf32>
    %285 = arith.divf %283, %284 : vector<2x128xf32>
    %286 = vector.extract_strided_slice %266 {offsets = [0, 256], sizes = [2, 128], strides = [1, 1]} : vector<2x384xf32> to vector<2x128xf32>
    %287 = vector.extract_strided_slice %269 {offsets = [0, 256], sizes = [2, 128], strides = [1, 1]} : vector<2x384xf32> to vector<2x128xf32>
    %288 = arith.mulf %277, %287 : vector<2x128xf32>
    %289 = arith.addf %286, %288 : vector<2x128xf32>
    %290 = math.tanh %289 : vector<2x128xf32>
    %cst_68 = arith.constant 1.000000e+00 : f32
    %291 = vector.broadcast %cst_68 : f32 to vector<2x128xf32>
    %292 = arith.subf %291, %285 : vector<2x128xf32>
    %293 = arith.mulf %292, %290 : vector<2x128xf32>
    %294 = arith.mulf %285, %263 : vector<2x128xf32>
    %295 = arith.addf %293, %294 : vector<2x128xf32>
    %cst_69 = arith.constant dense<0.000000e+00> : vector<2x32xf32>
    %296 = tpu.matmul %295, %5, %cst_69 {dimension_numbers = #tpu.dot_dimension_numbers<[1], [0], [0], [1], [0, 0, 1, 1], [], []>} : vector<2x128xf32>, vector<128x32xf32>, vector<2x32xf32> -> vector<2x32xf32>
    %297 = vector.broadcast %6 : vector<1x32xf32> to vector<2x32xf32>
    %298 = arith.addf %296, %297 : vector<2x32xf32>
    %cst_70 = arith.constant dense<0xFF800000> : vector<2xf32>
    %299 = vector.multi_reduction <maximumf>, %298, %cst_70 [1] : vector<2x32xf32> to vector<2xf32>
    %300 = vector.shape_cast %299 : vector<2xf32> to vector<2x1xf32>
    %301 = vector.broadcast %300 : vector<2x1xf32> to vector<2x32xf32>
    %302 = arith.subf %298, %301 : vector<2x32xf32>
    %303 = math.exp %302 : vector<2x32xf32>
    %cst_71 = arith.constant dense<0.000000e+00> : vector<2xf32>
    %304 = vector.multi_reduction <add>, %303, %cst_71 [1] : vector<2x32xf32> to vector<2xf32>
    %305 = vector.shape_cast %304 : vector<2xf32> to vector<2x1xf32>
    %306 = math.log %305 : vector<2x1xf32>
    %307 = vector.broadcast %300 : vector<2x1xf32> to vector<2x32xf32>
    %308 = arith.subf %298, %307 : vector<2x32xf32>
    %309 = vector.broadcast %306 : vector<2x1xf32> to vector<2x32xf32>
    %310 = arith.subf %308, %309 : vector<2x32xf32>
    %311 = arith.index_cast %c0_i32_63 : i32 to index
    %c0_72 = arith.constant 0 : index
    %c0_73 = arith.constant 0 : index
    %312 = vector.load %arg9[%311, %c0_72, %c0_73] : memref<8x2x32xf32, #tpu.memory_space<vmem>>, vector<1x2x32xf32>
    %313 = vector.shape_cast %312 : vector<1x2x32xf32> to vector<2x32xf32>
    %314 = vector.shape_cast %310 : vector<2x32xf32> to vector<1x2x32xf32>
    tpu.vector_store %arg9[%311, %c0_72, %c0_73], %314 {strides = array<i32>} : memref<8x2x32xf32, #tpu.memory_space<vmem>>, vector<1x2x32xf32>,
    %315 = vector.broadcast %300 : vector<2x1xf32> to vector<2x32xf32>
    %316 = arith.cmpf oeq, %298, %315 : vector<2x32xf32>
    %c32_i32 = arith.constant 32 : i32
    %317 = vector.broadcast %c32_i32 : i32 to vector<2x32xi32>
    %318 = arith.select %316, %264, %317 : vector<2x32xi1>, vector<2x32xi32>
    %cst_74 = arith.constant dense<2147483647> : vector<2xi32>
    %319 = vector.multi_reduction <minsi>, %318, %cst_74 [1] : vector<2x32xi32> to vector<2xi32>
    %320 = vector.shape_cast %319 : vector<2xi32> to vector<2x1xi32>
    %321 = vector.broadcast %320 : vector<2x1xi32> to vector<2x32xi32>
    %322 = arith.cmpi eq, %264, %321 : vector<2x32xi32>
    %323 = arith.extui %322 : vector<2x32xi1> to vector<2x32xi32>
    %324 = arith.sitofp %323 : vector<2x32xi32> to vector<2x32xf32>
    %c1_i32_75 = arith.constant 1 : i32
    %cst_76 = arith.constant dense<0.000000e+00> : vector<2x384xf32>
    %325 = tpu.matmul %324, %2, %cst_76 {dimension_numbers = #tpu.dot_dimension_numbers<[1], [0], [0], [1], [0, 0, 1, 1], [], []>} : vector<2x32xf32>, vector<32x384xf32>, vector<2x384xf32> -> vector<2x384xf32>
    %cst_77 = arith.constant dense<0.000000e+00> : vector<2x384xf32>
    %326 = tpu.matmul %295, %3, %cst_77 {dimension_numbers = #tpu.dot_dimension_numbers<[1], [0], [0], [1], [0, 0, 1, 1], [], []>} : vector<2x128xf32>, vector<128x384xf32>, vector<2x384xf32> -> vector<2x384xf32>
    %327 = vector.broadcast %4 : vector<1x384xf32> to vector<2x384xf32>
    %328 = arith.addf %326, %327 : vector<2x384xf32>
    %329 = vector.extract_strided_slice %325 {offsets = [0, 0], sizes = [2, 128], strides = [1, 1]} : vector<2x384xf32> to vector<2x128xf32>
    %330 = vector.extract_strided_slice %328 {offsets = [0, 0], sizes = [2, 128], strides = [1, 1]} : vector<2x384xf32> to vector<2x128xf32>
    %331 = arith.addf %329, %330 : vector<2x128xf32>
    %332 = arith.negf %331 : vector<2x128xf32>
    %333 = math.exp %332 : vector<2x128xf32>
    %cst_78 = arith.constant 1.000000e+00 : f32
    %334 = vector.broadcast %cst_78 : f32 to vector<2x128xf32>
    %335 = arith.addf %334, %333 : vector<2x128xf32>
    %336 = arith.divf %334, %335 : vector<2x128xf32>
    %337 = vector.extract_strided_slice %325 {offsets = [0, 128], sizes = [2, 128], strides = [1, 1]} : vector<2x384xf32> to vector<2x128xf32>
    %338 = vector.extract_strided_slice %328 {offsets = [0, 128], sizes = [2, 128], strides = [1, 1]} : vector<2x384xf32> to vector<2x128xf32>
    %339 = arith.addf %337, %338 : vector<2x128xf32>
    %340 = arith.negf %339 : vector<2x128xf32>
    %341 = math.exp %340 : vector<2x128xf32>
    %cst_79 = arith.constant 1.000000e+00 : f32
    %342 = vector.broadcast %cst_79 : f32 to vector<2x128xf32>
    %343 = arith.addf %342, %341 : vector<2x128xf32>
    %344 = arith.divf %342, %343 : vector<2x128xf32>
    %345 = vector.extract_strided_slice %325 {offsets = [0, 256], sizes = [2, 128], strides = [1, 1]} : vector<2x384xf32> to vector<2x128xf32>
    %346 = vector.extract_strided_slice %328 {offsets = [0, 256], sizes = [2, 128], strides = [1, 1]} : vector<2x384xf32> to vector<2x128xf32>
    %347 = arith.mulf %336, %346 : vector<2x128xf32>
    %348 = arith.addf %345, %347 : vector<2x128xf32>
    %349 = math.tanh %348 : vector<2x128xf32>
    %cst_80 = arith.constant 1.000000e+00 : f32
    %350 = vector.broadcast %cst_80 : f32 to vector<2x128xf32>
    %351 = arith.subf %350, %344 : vector<2x128xf32>
    %352 = arith.mulf %351, %349 : vector<2x128xf32>
    %353 = arith.mulf %344, %295 : vector<2x128xf32>
    %354 = arith.addf %352, %353 : vector<2x128xf32>
    %cst_81 = arith.constant dense<0.000000e+00> : vector<2x32xf32>
    %355 = tpu.matmul %354, %5, %cst_81 {dimension_numbers = #tpu.dot_dimension_numbers<[1], [0], [0], [1], [0, 0, 1, 1], [], []>} : vector<2x128xf32>, vector<128x32xf32>, vector<2x32xf32> -> vector<2x32xf32>
    %356 = vector.broadcast %6 : vector<1x32xf32> to vector<2x32xf32>
    %357 = arith.addf %355, %356 : vector<2x32xf32>
    %cst_82 = arith.constant dense<0xFF800000> : vector<2xf32>
    %358 = vector.multi_reduction <maximumf>, %357, %cst_82 [1] : vector<2x32xf32> to vector<2xf32>
    %359 = vector.shape_cast %358 : vector<2xf32> to vector<2x1xf32>
    %360 = vector.broadcast %359 : vector<2x1xf32> to vector<2x32xf32>
    %361 = arith.subf %357, %360 : vector<2x32xf32>
    %362 = math.exp %361 : vector<2x32xf32>
    %cst_83 = arith.constant dense<0.000000e+00> : vector<2xf32>
    %363 = vector.multi_reduction <add>, %362, %cst_83 [1] : vector<2x32xf32> to vector<2xf32>
    %364 = vector.shape_cast %363 : vector<2xf32> to vector<2x1xf32>
    %365 = math.log %364 : vector<2x1xf32>
    %366 = vector.broadcast %359 : vector<2x1xf32> to vector<2x32xf32>
    %367 = arith.subf %357, %366 : vector<2x32xf32>
    %368 = vector.broadcast %365 : vector<2x1xf32> to vector<2x32xf32>
    %369 = arith.subf %367, %368 : vector<2x32xf32>
    %370 = arith.index_cast %c1_i32_75 : i32 to index
    %c0_84 = arith.constant 0 : index
    %c0_85 = arith.constant 0 : index
    %371 = vector.load %arg9[%370, %c0_84, %c0_85] : memref<8x2x32xf32, #tpu.memory_space<vmem>>, vector<1x2x32xf32>
    %372 = vector.shape_cast %371 : vector<1x2x32xf32> to vector<2x32xf32>
    %373 = vector.shape_cast %369 : vector<2x32xf32> to vector<1x2x32xf32>
    tpu.vector_store %arg9[%370, %c0_84, %c0_85], %373 {strides = array<i32>} : memref<8x2x32xf32, #tpu.memory_space<vmem>>, vector<1x2x32xf32>,
    %374 = vector.broadcast %359 : vector<2x1xf32> to vector<2x32xf32>
    %375 = arith.cmpf oeq, %357, %374 : vector<2x32xf32>
    %c32_i32_86 = arith.constant 32 : i32
    %376 = vector.broadcast %c32_i32_86 : i32 to vector<2x32xi32>
    %377 = arith.select %375, %264, %376 : vector<2x32xi1>, vector<2x32xi32>
    %cst_87 = arith.constant dense<2147483647> : vector<2xi32>
    %378 = vector.multi_reduction <minsi>, %377, %cst_87 [1] : vector<2x32xi32> to vector<2xi32>
    %379 = vector.shape_cast %378 : vector<2xi32> to vector<2x1xi32>
    %380 = vector.broadcast %379 : vector<2x1xi32> to vector<2x32xi32>
    %381 = arith.cmpi eq, %264, %380 : vector<2x32xi32>
    %382 = arith.extui %381 : vector<2x32xi1> to vector<2x32xi32>
    %383 = arith.sitofp %382 : vector<2x32xi32> to vector<2x32xf32>
    %c2_i32_88 = arith.constant 2 : i32
    %cst_89 = arith.constant dense<0.000000e+00> : vector<2x384xf32>
    %384 = tpu.matmul %383, %2, %cst_89 {dimension_numbers = #tpu.dot_dimension_numbers<[1], [0], [0], [1], [0, 0, 1, 1], [], []>} : vector<2x32xf32>, vector<32x384xf32>, vector<2x384xf32> -> vector<2x384xf32>
    %cst_90 = arith.constant dense<0.000000e+00> : vector<2x384xf32>
    %385 = tpu.matmul %354, %3, %cst_90 {dimension_numbers = #tpu.dot_dimension_numbers<[1], [0], [0], [1], [0, 0, 1, 1], [], []>} : vector<2x128xf32>, vector<128x384xf32>, vector<2x384xf32> -> vector<2x384xf32>
    %386 = vector.broadcast %4 : vector<1x384xf32> to vector<2x384xf32>
    %387 = arith.addf %385, %386 : vector<2x384xf32>
    %388 = vector.extract_strided_slice %384 {offsets = [0, 0], sizes = [2, 128], strides = [1, 1]} : vector<2x384xf32> to vector<2x128xf32>
    %389 = vector.extract_strided_slice %387 {offsets = [0, 0], sizes = [2, 128], strides = [1, 1]} : vector<2x384xf32> to vector<2x128xf32>
    %390 = arith.addf %388, %389 : vector<2x128xf32>
    %391 = arith.negf %390 : vector<2x128xf32>
    %392 = math.exp %391 : vector<2x128xf32>
    %cst_91 = arith.constant 1.000000e+00 : f32
    %393 = vector.broadcast %cst_91 : f32 to vector<2x128xf32>
    %394 = arith.addf %393, %392 : vector<2x128xf32>
    %395 = arith.divf %393, %394 : vector<2x128xf32>
    %396 = vector.extract_strided_slice %384 {offsets = [0, 128], sizes = [2, 128], strides = [1, 1]} : vector<2x384xf32> to vector<2x128xf32>
    %397 = vector.extract_strided_slice %387 {offsets = [0, 128], sizes = [2, 128], strides = [1, 1]} : vector<2x384xf32> to vector<2x128xf32>
    %398 = arith.addf %396, %397 : vector<2x128xf32>
    %399 = arith.negf %398 : vector<2x128xf32>
    %400 = math.exp %399 : vector<2x128xf32>
    %cst_92 = arith.constant 1.000000e+00 : f32
    %401 = vector.broadcast %cst_92 : f32 to vector<2x128xf32>
    %402 = arith.addf %401, %400 : vector<2x128xf32>
    %403 = arith.divf %401, %402 : vector<2x128xf32>
    %404 = vector.extract_strided_slice %384 {offsets = [0, 256], sizes = [2, 128], strides = [1, 1]} : vector<2x384xf32> to vector<2x128xf32>
    %405 = vector.extract_strided_slice %387 {offsets = [0, 256], sizes = [2, 128], strides = [1, 1]} : vector<2x384xf32> to vector<2x128xf32>
    %406 = arith.mulf %395, %405 : vector<2x128xf32>
    %407 = arith.addf %404, %406 : vector<2x128xf32>
    %408 = math.tanh %407 : vector<2x128xf32>
    %cst_93 = arith.constant 1.000000e+00 : f32
    %409 = vector.broadcast %cst_93 : f32 to vector<2x128xf32>
    %410 = arith.subf %409, %403 : vector<2x128xf32>
    %411 = arith.mulf %410, %408 : vector<2x128xf32>
    %412 = arith.mulf %403, %354 : vector<2x128xf32>
    %413 = arith.addf %411, %412 : vector<2x128xf32>
    %cst_94 = arith.constant dense<0.000000e+00> : vector<2x32xf32>
    %414 = tpu.matmul %413, %5, %cst_94 {dimension_numbers = #tpu.dot_dimension_numbers<[1], [0], [0], [1], [0, 0, 1, 1], [], []>} : vector<2x128xf32>, vector<128x32xf32>, vector<2x32xf32> -> vector<2x32xf32>
    %415 = vector.broadcast %6 : vector<1x32xf32> to vector<2x32xf32>
    %416 = arith.addf %414, %415 : vector<2x32xf32>
    %cst_95 = arith.constant dense<0xFF800000> : vector<2xf32>
    %417 = vector.multi_reduction <maximumf>, %416, %cst_95 [1] : vector<2x32xf32> to vector<2xf32>
    %418 = vector.shape_cast %417 : vector<2xf32> to vector<2x1xf32>
    %419 = vector.broadcast %418 : vector<2x1xf32> to vector<2x32xf32>
    %420 = arith.subf %416, %419 : vector<2x32xf32>
    %421 = math.exp %420 : vector<2x32xf32>
    %cst_96 = arith.constant dense<0.000000e+00> : vector<2xf32>
    %422 = vector.multi_reduction <add>, %421, %cst_96 [1] : vector<2x32xf32> to vector<2xf32>
    %423 = vector.shape_cast %422 : vector<2xf32> to vector<2x1xf32>
    %424 = math.log %423 : vector<2x1xf32>
    %425 = vector.broadcast %418 : vector<2x1xf32> to vector<2x32xf32>
    %426 = arith.subf %416, %425 : vector<2x32xf32>
    %427 = vector.broadcast %424 : vector<2x1xf32> to vector<2x32xf32>
    %428 = arith.subf %426, %427 : vector<2x32xf32>
    %429 = arith.index_cast %c2_i32_88 : i32 to index
    %c0_97 = arith.constant 0 : index
    %c0_98 = arith.constant 0 : index
    %430 = vector.load %arg9[%429, %c0_97, %c0_98] : memref<8x2x32xf32, #tpu.memory_space<vmem>>, vector<1x2x32xf32>
    %431 = vector.shape_cast %430 : vector<1x2x32xf32> to vector<2x32xf32>
    %432 = vector.shape_cast %428 : vector<2x32xf32> to vector<1x2x32xf32>
    tpu.vector_store %arg9[%429, %c0_97, %c0_98], %432 {strides = array<i32>} : memref<8x2x32xf32, #tpu.memory_space<vmem>>, vector<1x2x32xf32>,
    %433 = vector.broadcast %418 : vector<2x1xf32> to vector<2x32xf32>
    %434 = arith.cmpf oeq, %416, %433 : vector<2x32xf32>
    %c32_i32_99 = arith.constant 32 : i32
    %435 = vector.broadcast %c32_i32_99 : i32 to vector<2x32xi32>
    %436 = arith.select %434, %264, %435 : vector<2x32xi1>, vector<2x32xi32>
    %cst_100 = arith.constant dense<2147483647> : vector<2xi32>
    %437 = vector.multi_reduction <minsi>, %436, %cst_100 [1] : vector<2x32xi32> to vector<2xi32>
    %438 = vector.shape_cast %437 : vector<2xi32> to vector<2x1xi32>
    %439 = vector.broadcast %438 : vector<2x1xi32> to vector<2x32xi32>
    %440 = arith.cmpi eq, %264, %439 : vector<2x32xi32>
    %441 = arith.extui %440 : vector<2x32xi1> to vector<2x32xi32>
    %442 = arith.sitofp %441 : vector<2x32xi32> to vector<2x32xf32>
    %c3_i32_101 = arith.constant 3 : i32
    %cst_102 = arith.constant dense<0.000000e+00> : vector<2x384xf32>
    %443 = tpu.matmul %442, %2, %cst_102 {dimension_numbers = #tpu.dot_dimension_numbers<[1], [0], [0], [1], [0, 0, 1, 1], [], []>} : vector<2x32xf32>, vector<32x384xf32>, vector<2x384xf32> -> vector<2x384xf32>
    %cst_103 = arith.constant dense<0.000000e+00> : vector<2x384xf32>
    %444 = tpu.matmul %413, %3, %cst_103 {dimension_numbers = #tpu.dot_dimension_numbers<[1], [0], [0], [1], [0, 0, 1, 1], [], []>} : vector<2x128xf32>, vector<128x384xf32>, vector<2x384xf32> -> vector<2x384xf32>
    %445 = vector.broadcast %4 : vector<1x384xf32> to vector<2x384xf32>
    %446 = arith.addf %444, %445 : vector<2x384xf32>
    %447 = vector.extract_strided_slice %443 {offsets = [0, 0], sizes = [2, 128], strides = [1, 1]} : vector<2x384xf32> to vector<2x128xf32>
    %448 = vector.extract_strided_slice %446 {offsets = [0, 0], sizes = [2, 128], strides = [1, 1]} : vector<2x384xf32> to vector<2x128xf32>
    %449 = arith.addf %447, %448 : vector<2x128xf32>
    %450 = arith.negf %449 : vector<2x128xf32>
    %451 = math.exp %450 : vector<2x128xf32>
    %cst_104 = arith.constant 1.000000e+00 : f32
    %452 = vector.broadcast %cst_104 : f32 to vector<2x128xf32>
    %453 = arith.addf %452, %451 : vector<2x128xf32>
    %454 = arith.divf %452, %453 : vector<2x128xf32>
    %455 = vector.extract_strided_slice %443 {offsets = [0, 128], sizes = [2, 128], strides = [1, 1]} : vector<2x384xf32> to vector<2x128xf32>
    %456 = vector.extract_strided_slice %446 {offsets = [0, 128], sizes = [2, 128], strides = [1, 1]} : vector<2x384xf32> to vector<2x128xf32>
    %457 = arith.addf %455, %456 : vector<2x128xf32>
    %458 = arith.negf %457 : vector<2x128xf32>
    %459 = math.exp %458 : vector<2x128xf32>
    %cst_105 = arith.constant 1.000000e+00 : f32
    %460 = vector.broadcast %cst_105 : f32 to vector<2x128xf32>
    %461 = arith.addf %460, %459 : vector<2x128xf32>
    %462 = arith.divf %460, %461 : vector<2x128xf32>
    %463 = vector.extract_strided_slice %443 {offsets = [0, 256], sizes = [2, 128], strides = [1, 1]} : vector<2x384xf32> to vector<2x128xf32>
    %464 = vector.extract_strided_slice %446 {offsets = [0, 256], sizes = [2, 128], strides = [1, 1]} : vector<2x384xf32> to vector<2x128xf32>
    %465 = arith.mulf %454, %464 : vector<2x128xf32>
    %466 = arith.addf %463, %465 : vector<2x128xf32>
    %467 = math.tanh %466 : vector<2x128xf32>
    %cst_106 = arith.constant 1.000000e+00 : f32
    %468 = vector.broadcast %cst_106 : f32 to vector<2x128xf32>
    %469 = arith.subf %468, %462 : vector<2x128xf32>
    %470 = arith.mulf %469, %467 : vector<2x128xf32>
    %471 = arith.mulf %462, %413 : vector<2x128xf32>
    %472 = arith.addf %470, %471 : vector<2x128xf32>
    %cst_107 = arith.constant dense<0.000000e+00> : vector<2x32xf32>
    %473 = tpu.matmul %472, %5, %cst_107 {dimension_numbers = #tpu.dot_dimension_numbers<[1], [0], [0], [1], [0, 0, 1, 1], [], []>} : vector<2x128xf32>, vector<128x32xf32>, vector<2x32xf32> -> vector<2x32xf32>
    %474 = vector.broadcast %6 : vector<1x32xf32> to vector<2x32xf32>
    %475 = arith.addf %473, %474 : vector<2x32xf32>
    %cst_108 = arith.constant dense<0xFF800000> : vector<2xf32>
    %476 = vector.multi_reduction <maximumf>, %475, %cst_108 [1] : vector<2x32xf32> to vector<2xf32>
    %477 = vector.shape_cast %476 : vector<2xf32> to vector<2x1xf32>
    %478 = vector.broadcast %477 : vector<2x1xf32> to vector<2x32xf32>
    %479 = arith.subf %475, %478 : vector<2x32xf32>
    %480 = math.exp %479 : vector<2x32xf32>
    %cst_109 = arith.constant dense<0.000000e+00> : vector<2xf32>
    %481 = vector.multi_reduction <add>, %480, %cst_109 [1] : vector<2x32xf32> to vector<2xf32>
    %482 = vector.shape_cast %481 : vector<2xf32> to vector<2x1xf32>
    %483 = math.log %482 : vector<2x1xf32>
    %484 = vector.broadcast %477 : vector<2x1xf32> to vector<2x32xf32>
    %485 = arith.subf %475, %484 : vector<2x32xf32>
    %486 = vector.broadcast %483 : vector<2x1xf32> to vector<2x32xf32>
    %487 = arith.subf %485, %486 : vector<2x32xf32>
    %488 = arith.index_cast %c3_i32_101 : i32 to index
    %c0_110 = arith.constant 0 : index
    %c0_111 = arith.constant 0 : index
    %489 = vector.load %arg9[%488, %c0_110, %c0_111] : memref<8x2x32xf32, #tpu.memory_space<vmem>>, vector<1x2x32xf32>
    %490 = vector.shape_cast %489 : vector<1x2x32xf32> to vector<2x32xf32>
    %491 = vector.shape_cast %487 : vector<2x32xf32> to vector<1x2x32xf32>
    tpu.vector_store %arg9[%488, %c0_110, %c0_111], %491 {strides = array<i32>} : memref<8x2x32xf32, #tpu.memory_space<vmem>>, vector<1x2x32xf32>,
    %492 = vector.broadcast %477 : vector<2x1xf32> to vector<2x32xf32>
    %493 = arith.cmpf oeq, %475, %492 : vector<2x32xf32>
    %c32_i32_112 = arith.constant 32 : i32
    %494 = vector.broadcast %c32_i32_112 : i32 to vector<2x32xi32>
    %495 = arith.select %493, %264, %494 : vector<2x32xi1>, vector<2x32xi32>
    %cst_113 = arith.constant dense<2147483647> : vector<2xi32>
    %496 = vector.multi_reduction <minsi>, %495, %cst_113 [1] : vector<2x32xi32> to vector<2xi32>
    %497 = vector.shape_cast %496 : vector<2xi32> to vector<2x1xi32>
    %498 = vector.broadcast %497 : vector<2x1xi32> to vector<2x32xi32>
    %499 = arith.cmpi eq, %264, %498 : vector<2x32xi32>
    %500 = arith.extui %499 : vector<2x32xi1> to vector<2x32xi32>
    %501 = arith.sitofp %500 : vector<2x32xi32> to vector<2x32xf32>
    %c4_i32_114 = arith.constant 4 : i32
    %cst_115 = arith.constant dense<0.000000e+00> : vector<2x384xf32>
    %502 = tpu.matmul %501, %2, %cst_115 {dimension_numbers = #tpu.dot_dimension_numbers<[1], [0], [0], [1], [0, 0, 1, 1], [], []>} : vector<2x32xf32>, vector<32x384xf32>, vector<2x384xf32> -> vector<2x384xf32>
    %cst_116 = arith.constant dense<0.000000e+00> : vector<2x384xf32>
    %503 = tpu.matmul %472, %3, %cst_116 {dimension_numbers = #tpu.dot_dimension_numbers<[1], [0], [0], [1], [0, 0, 1, 1], [], []>} : vector<2x128xf32>, vector<128x384xf32>, vector<2x384xf32> -> vector<2x384xf32>
    %504 = vector.broadcast %4 : vector<1x384xf32> to vector<2x384xf32>
    %505 = arith.addf %503, %504 : vector<2x384xf32>
    %506 = vector.extract_strided_slice %502 {offsets = [0, 0], sizes = [2, 128], strides = [1, 1]} : vector<2x384xf32> to vector<2x128xf32>
    %507 = vector.extract_strided_slice %505 {offsets = [0, 0], sizes = [2, 128], strides = [1, 1]} : vector<2x384xf32> to vector<2x128xf32>
    %508 = arith.addf %506, %507 : vector<2x128xf32>
    %509 = arith.negf %508 : vector<2x128xf32>
    %510 = math.exp %509 : vector<2x128xf32>
    %cst_117 = arith.constant 1.000000e+00 : f32
    %511 = vector.broadcast %cst_117 : f32 to vector<2x128xf32>
    %512 = arith.addf %511, %510 : vector<2x128xf32>
    %513 = arith.divf %511, %512 : vector<2x128xf32>
    %514 = vector.extract_strided_slice %502 {offsets = [0, 128], sizes = [2, 128], strides = [1, 1]} : vector<2x384xf32> to vector<2x128xf32>
    %515 = vector.extract_strided_slice %505 {offsets = [0, 128], sizes = [2, 128], strides = [1, 1]} : vector<2x384xf32> to vector<2x128xf32>
    %516 = arith.addf %514, %515 : vector<2x128xf32>
    %517 = arith.negf %516 : vector<2x128xf32>
    %518 = math.exp %517 : vector<2x128xf32>
    %cst_118 = arith.constant 1.000000e+00 : f32
    %519 = vector.broadcast %cst_118 : f32 to vector<2x128xf32>
    %520 = arith.addf %519, %518 : vector<2x128xf32>
    %521 = arith.divf %519, %520 : vector<2x128xf32>
    %522 = vector.extract_strided_slice %502 {offsets = [0, 256], sizes = [2, 128], strides = [1, 1]} : vector<2x384xf32> to vector<2x128xf32>
    %523 = vector.extract_strided_slice %505 {offsets = [0, 256], sizes = [2, 128], strides = [1, 1]} : vector<2x384xf32> to vector<2x128xf32>
    %524 = arith.mulf %513, %523 : vector<2x128xf32>
    %525 = arith.addf %522, %524 : vector<2x128xf32>
    %526 = math.tanh %525 : vector<2x128xf32>
    %cst_119 = arith.constant 1.000000e+00 : f32
    %527 = vector.broadcast %cst_119 : f32 to vector<2x128xf32>
    %528 = arith.subf %527, %521 : vector<2x128xf32>
    %529 = arith.mulf %528, %526 : vector<2x128xf32>
    %530 = arith.mulf %521, %472 : vector<2x128xf32>
    %531 = arith.addf %529, %530 : vector<2x128xf32>
    %cst_120 = arith.constant dense<0.000000e+00> : vector<2x32xf32>
    %532 = tpu.matmul %531, %5, %cst_120 {dimension_numbers = #tpu.dot_dimension_numbers<[1], [0], [0], [1], [0, 0, 1, 1], [], []>} : vector<2x128xf32>, vector<128x32xf32>, vector<2x32xf32> -> vector<2x32xf32>
    %533 = vector.broadcast %6 : vector<1x32xf32> to vector<2x32xf32>
    %534 = arith.addf %532, %533 : vector<2x32xf32>
    %cst_121 = arith.constant dense<0xFF800000> : vector<2xf32>
    %535 = vector.multi_reduction <maximumf>, %534, %cst_121 [1] : vector<2x32xf32> to vector<2xf32>
    %536 = vector.shape_cast %535 : vector<2xf32> to vector<2x1xf32>
    %537 = vector.broadcast %536 : vector<2x1xf32> to vector<2x32xf32>
    %538 = arith.subf %534, %537 : vector<2x32xf32>
    %539 = math.exp %538 : vector<2x32xf32>
    %cst_122 = arith.constant dense<0.000000e+00> : vector<2xf32>
    %540 = vector.multi_reduction <add>, %539, %cst_122 [1] : vector<2x32xf32> to vector<2xf32>
    %541 = vector.shape_cast %540 : vector<2xf32> to vector<2x1xf32>
    %542 = math.log %541 : vector<2x1xf32>
    %543 = vector.broadcast %536 : vector<2x1xf32> to vector<2x32xf32>
    %544 = arith.subf %534, %543 : vector<2x32xf32>
    %545 = vector.broadcast %542 : vector<2x1xf32> to vector<2x32xf32>
    %546 = arith.subf %544, %545 : vector<2x32xf32>
    %547 = arith.index_cast %c4_i32_114 : i32 to index
    %c0_123 = arith.constant 0 : index
    %c0_124 = arith.constant 0 : index
    %548 = vector.load %arg9[%547, %c0_123, %c0_124] : memref<8x2x32xf32, #tpu.memory_space<vmem>>, vector<1x2x32xf32>
    %549 = vector.shape_cast %548 : vector<1x2x32xf32> to vector<2x32xf32>
    %550 = vector.shape_cast %546 : vector<2x32xf32> to vector<1x2x32xf32>
    tpu.vector_store %arg9[%547, %c0_123, %c0_124], %550 {strides = array<i32>} : memref<8x2x32xf32, #tpu.memory_space<vmem>>, vector<1x2x32xf32>,
    %551 = vector.broadcast %536 : vector<2x1xf32> to vector<2x32xf32>
    %552 = arith.cmpf oeq, %534, %551 : vector<2x32xf32>
    %c32_i32_125 = arith.constant 32 : i32
    %553 = vector.broadcast %c32_i32_125 : i32 to vector<2x32xi32>
    %554 = arith.select %552, %264, %553 : vector<2x32xi1>, vector<2x32xi32>
    %cst_126 = arith.constant dense<2147483647> : vector<2xi32>
    %555 = vector.multi_reduction <minsi>, %554, %cst_126 [1] : vector<2x32xi32> to vector<2xi32>
    %556 = vector.shape_cast %555 : vector<2xi32> to vector<2x1xi32>
    %557 = vector.broadcast %556 : vector<2x1xi32> to vector<2x32xi32>
    %558 = arith.cmpi eq, %264, %557 : vector<2x32xi32>
    %559 = arith.extui %558 : vector<2x32xi1> to vector<2x32xi32>
    %560 = arith.sitofp %559 : vector<2x32xi32> to vector<2x32xf32>
    %c5_i32_127 = arith.constant 5 : i32
    %cst_128 = arith.constant dense<0.000000e+00> : vector<2x384xf32>
    %561 = tpu.matmul %560, %2, %cst_128 {dimension_numbers = #tpu.dot_dimension_numbers<[1], [0], [0], [1], [0, 0, 1, 1], [], []>} : vector<2x32xf32>, vector<32x384xf32>, vector<2x384xf32> -> vector<2x384xf32>
    %cst_129 = arith.constant dense<0.000000e+00> : vector<2x384xf32>
    %562 = tpu.matmul %531, %3, %cst_129 {dimension_numbers = #tpu.dot_dimension_numbers<[1], [0], [0], [1], [0, 0, 1, 1], [], []>} : vector<2x128xf32>, vector<128x384xf32>, vector<2x384xf32> -> vector<2x384xf32>
    %563 = vector.broadcast %4 : vector<1x384xf32> to vector<2x384xf32>
    %564 = arith.addf %562, %563 : vector<2x384xf32>
    %565 = vector.extract_strided_slice %561 {offsets = [0, 0], sizes = [2, 128], strides = [1, 1]} : vector<2x384xf32> to vector<2x128xf32>
    %566 = vector.extract_strided_slice %564 {offsets = [0, 0], sizes = [2, 128], strides = [1, 1]} : vector<2x384xf32> to vector<2x128xf32>
    %567 = arith.addf %565, %566 : vector<2x128xf32>
    %568 = arith.negf %567 : vector<2x128xf32>
    %569 = math.exp %568 : vector<2x128xf32>
    %cst_130 = arith.constant 1.000000e+00 : f32
    %570 = vector.broadcast %cst_130 : f32 to vector<2x128xf32>
    %571 = arith.addf %570, %569 : vector<2x128xf32>
    %572 = arith.divf %570, %571 : vector<2x128xf32>
    %573 = vector.extract_strided_slice %561 {offsets = [0, 128], sizes = [2, 128], strides = [1, 1]} : vector<2x384xf32> to vector<2x128xf32>
    %574 = vector.extract_strided_slice %564 {offsets = [0, 128], sizes = [2, 128], strides = [1, 1]} : vector<2x384xf32> to vector<2x128xf32>
    %575 = arith.addf %573, %574 : vector<2x128xf32>
    %576 = arith.negf %575 : vector<2x128xf32>
    %577 = math.exp %576 : vector<2x128xf32>
    %cst_131 = arith.constant 1.000000e+00 : f32
    %578 = vector.broadcast %cst_131 : f32 to vector<2x128xf32>
    %579 = arith.addf %578, %577 : vector<2x128xf32>
    %580 = arith.divf %578, %579 : vector<2x128xf32>
    %581 = vector.extract_strided_slice %561 {offsets = [0, 256], sizes = [2, 128], strides = [1, 1]} : vector<2x384xf32> to vector<2x128xf32>
    %582 = vector.extract_strided_slice %564 {offsets = [0, 256], sizes = [2, 128], strides = [1, 1]} : vector<2x384xf32> to vector<2x128xf32>
    %583 = arith.mulf %572, %582 : vector<2x128xf32>
    %584 = arith.addf %581, %583 : vector<2x128xf32>
    %585 = math.tanh %584 : vector<2x128xf32>
    %cst_132 = arith.constant 1.000000e+00 : f32
    %586 = vector.broadcast %cst_132 : f32 to vector<2x128xf32>
    %587 = arith.subf %586, %580 : vector<2x128xf32>
    %588 = arith.mulf %587, %585 : vector<2x128xf32>
    %589 = arith.mulf %580, %531 : vector<2x128xf32>
    %590 = arith.addf %588, %589 : vector<2x128xf32>
    %cst_133 = arith.constant dense<0.000000e+00> : vector<2x32xf32>
    %591 = tpu.matmul %590, %5, %cst_133 {dimension_numbers = #tpu.dot_dimension_numbers<[1], [0], [0], [1], [0, 0, 1, 1], [], []>} : vector<2x128xf32>, vector<128x32xf32>, vector<2x32xf32> -> vector<2x32xf32>
    %592 = vector.broadcast %6 : vector<1x32xf32> to vector<2x32xf32>
    %593 = arith.addf %591, %592 : vector<2x32xf32>
    %cst_134 = arith.constant dense<0xFF800000> : vector<2xf32>
    %594 = vector.multi_reduction <maximumf>, %593, %cst_134 [1] : vector<2x32xf32> to vector<2xf32>
    %595 = vector.shape_cast %594 : vector<2xf32> to vector<2x1xf32>
    %596 = vector.broadcast %595 : vector<2x1xf32> to vector<2x32xf32>
    %597 = arith.subf %593, %596 : vector<2x32xf32>
    %598 = math.exp %597 : vector<2x32xf32>
    %cst_135 = arith.constant dense<0.000000e+00> : vector<2xf32>
    %599 = vector.multi_reduction <add>, %598, %cst_135 [1] : vector<2x32xf32> to vector<2xf32>
    %600 = vector.shape_cast %599 : vector<2xf32> to vector<2x1xf32>
    %601 = math.log %600 : vector<2x1xf32>
    %602 = vector.broadcast %595 : vector<2x1xf32> to vector<2x32xf32>
    %603 = arith.subf %593, %602 : vector<2x32xf32>
    %604 = vector.broadcast %601 : vector<2x1xf32> to vector<2x32xf32>
    %605 = arith.subf %603, %604 : vector<2x32xf32>
    %606 = arith.index_cast %c5_i32_127 : i32 to index
    %c0_136 = arith.constant 0 : index
    %c0_137 = arith.constant 0 : index
    %607 = vector.load %arg9[%606, %c0_136, %c0_137] : memref<8x2x32xf32, #tpu.memory_space<vmem>>, vector<1x2x32xf32>
    %608 = vector.shape_cast %607 : vector<1x2x32xf32> to vector<2x32xf32>
    %609 = vector.shape_cast %605 : vector<2x32xf32> to vector<1x2x32xf32>
    tpu.vector_store %arg9[%606, %c0_136, %c0_137], %609 {strides = array<i32>} : memref<8x2x32xf32, #tpu.memory_space<vmem>>, vector<1x2x32xf32>,
    %610 = vector.broadcast %595 : vector<2x1xf32> to vector<2x32xf32>
    %611 = arith.cmpf oeq, %593, %610 : vector<2x32xf32>
    %c32_i32_138 = arith.constant 32 : i32
    %612 = vector.broadcast %c32_i32_138 : i32 to vector<2x32xi32>
    %613 = arith.select %611, %264, %612 : vector<2x32xi1>, vector<2x32xi32>
    %cst_139 = arith.constant dense<2147483647> : vector<2xi32>
    %614 = vector.multi_reduction <minsi>, %613, %cst_139 [1] : vector<2x32xi32> to vector<2xi32>
    %615 = vector.shape_cast %614 : vector<2xi32> to vector<2x1xi32>
    %616 = vector.broadcast %615 : vector<2x1xi32> to vector<2x32xi32>
    %617 = arith.cmpi eq, %264, %616 : vector<2x32xi32>
    %618 = arith.extui %617 : vector<2x32xi1> to vector<2x32xi32>
    %619 = arith.sitofp %618 : vector<2x32xi32> to vector<2x32xf32>
    %c6_i32_140 = arith.constant 6 : i32
    %cst_141 = arith.constant dense<0.000000e+00> : vector<2x384xf32>
    %620 = tpu.matmul %619, %2, %cst_141 {dimension_numbers = #tpu.dot_dimension_numbers<[1], [0], [0], [1], [0, 0, 1, 1], [], []>} : vector<2x32xf32>, vector<32x384xf32>, vector<2x384xf32> -> vector<2x384xf32>
    %cst_142 = arith.constant dense<0.000000e+00> : vector<2x384xf32>
    %621 = tpu.matmul %590, %3, %cst_142 {dimension_numbers = #tpu.dot_dimension_numbers<[1], [0], [0], [1], [0, 0, 1, 1], [], []>} : vector<2x128xf32>, vector<128x384xf32>, vector<2x384xf32> -> vector<2x384xf32>
    %622 = vector.broadcast %4 : vector<1x384xf32> to vector<2x384xf32>
    %623 = arith.addf %621, %622 : vector<2x384xf32>
    %624 = vector.extract_strided_slice %620 {offsets = [0, 0], sizes = [2, 128], strides = [1, 1]} : vector<2x384xf32> to vector<2x128xf32>
    %625 = vector.extract_strided_slice %623 {offsets = [0, 0], sizes = [2, 128], strides = [1, 1]} : vector<2x384xf32> to vector<2x128xf32>
    %626 = arith.addf %624, %625 : vector<2x128xf32>
    %627 = arith.negf %626 : vector<2x128xf32>
    %628 = math.exp %627 : vector<2x128xf32>
    %cst_143 = arith.constant 1.000000e+00 : f32
    %629 = vector.broadcast %cst_143 : f32 to vector<2x128xf32>
    %630 = arith.addf %629, %628 : vector<2x128xf32>
    %631 = arith.divf %629, %630 : vector<2x128xf32>
    %632 = vector.extract_strided_slice %620 {offsets = [0, 128], sizes = [2, 128], strides = [1, 1]} : vector<2x384xf32> to vector<2x128xf32>
    %633 = vector.extract_strided_slice %623 {offsets = [0, 128], sizes = [2, 128], strides = [1, 1]} : vector<2x384xf32> to vector<2x128xf32>
    %634 = arith.addf %632, %633 : vector<2x128xf32>
    %635 = arith.negf %634 : vector<2x128xf32>
    %636 = math.exp %635 : vector<2x128xf32>
    %cst_144 = arith.constant 1.000000e+00 : f32
    %637 = vector.broadcast %cst_144 : f32 to vector<2x128xf32>
    %638 = arith.addf %637, %636 : vector<2x128xf32>
    %639 = arith.divf %637, %638 : vector<2x128xf32>
    %640 = vector.extract_strided_slice %620 {offsets = [0, 256], sizes = [2, 128], strides = [1, 1]} : vector<2x384xf32> to vector<2x128xf32>
    %641 = vector.extract_strided_slice %623 {offsets = [0, 256], sizes = [2, 128], strides = [1, 1]} : vector<2x384xf32> to vector<2x128xf32>
    %642 = arith.mulf %631, %641 : vector<2x128xf32>
    %643 = arith.addf %640, %642 : vector<2x128xf32>
    %644 = math.tanh %643 : vector<2x128xf32>
    %cst_145 = arith.constant 1.000000e+00 : f32
    %645 = vector.broadcast %cst_145 : f32 to vector<2x128xf32>
    %646 = arith.subf %645, %639 : vector<2x128xf32>
    %647 = arith.mulf %646, %644 : vector<2x128xf32>
    %648 = arith.mulf %639, %590 : vector<2x128xf32>
    %649 = arith.addf %647, %648 : vector<2x128xf32>
    %cst_146 = arith.constant dense<0.000000e+00> : vector<2x32xf32>
    %650 = tpu.matmul %649, %5, %cst_146 {dimension_numbers = #tpu.dot_dimension_numbers<[1], [0], [0], [1], [0, 0, 1, 1], [], []>} : vector<2x128xf32>, vector<128x32xf32>, vector<2x32xf32> -> vector<2x32xf32>
    %651 = vector.broadcast %6 : vector<1x32xf32> to vector<2x32xf32>
    %652 = arith.addf %650, %651 : vector<2x32xf32>
    %cst_147 = arith.constant dense<0xFF800000> : vector<2xf32>
    %653 = vector.multi_reduction <maximumf>, %652, %cst_147 [1] : vector<2x32xf32> to vector<2xf32>
    %654 = vector.shape_cast %653 : vector<2xf32> to vector<2x1xf32>
    %655 = vector.broadcast %654 : vector<2x1xf32> to vector<2x32xf32>
    %656 = arith.subf %652, %655 : vector<2x32xf32>
    %657 = math.exp %656 : vector<2x32xf32>
    %cst_148 = arith.constant dense<0.000000e+00> : vector<2xf32>
    %658 = vector.multi_reduction <add>, %657, %cst_148 [1] : vector<2x32xf32> to vector<2xf32>
    %659 = vector.shape_cast %658 : vector<2xf32> to vector<2x1xf32>
    %660 = math.log %659 : vector<2x1xf32>
    %661 = vector.broadcast %654 : vector<2x1xf32> to vector<2x32xf32>
    %662 = arith.subf %652, %661 : vector<2x32xf32>
    %663 = vector.broadcast %660 : vector<2x1xf32> to vector<2x32xf32>
    %664 = arith.subf %662, %663 : vector<2x32xf32>
    %665 = arith.index_cast %c6_i32_140 : i32 to index
    %c0_149 = arith.constant 0 : index
    %c0_150 = arith.constant 0 : index
    %666 = vector.load %arg9[%665, %c0_149, %c0_150] : memref<8x2x32xf32, #tpu.memory_space<vmem>>, vector<1x2x32xf32>
    %667 = vector.shape_cast %666 : vector<1x2x32xf32> to vector<2x32xf32>
    %668 = vector.shape_cast %664 : vector<2x32xf32> to vector<1x2x32xf32>
    tpu.vector_store %arg9[%665, %c0_149, %c0_150], %668 {strides = array<i32>} : memref<8x2x32xf32, #tpu.memory_space<vmem>>, vector<1x2x32xf32>,
    %669 = vector.broadcast %654 : vector<2x1xf32> to vector<2x32xf32>
    %670 = arith.cmpf oeq, %652, %669 : vector<2x32xf32>
    %c32_i32_151 = arith.constant 32 : i32
    %671 = vector.broadcast %c32_i32_151 : i32 to vector<2x32xi32>
    %672 = arith.select %670, %264, %671 : vector<2x32xi1>, vector<2x32xi32>
    %cst_152 = arith.constant dense<2147483647> : vector<2xi32>
    %673 = vector.multi_reduction <minsi>, %672, %cst_152 [1] : vector<2x32xi32> to vector<2xi32>
    %674 = vector.shape_cast %673 : vector<2xi32> to vector<2x1xi32>
    %675 = vector.broadcast %674 : vector<2x1xi32> to vector<2x32xi32>
    %676 = arith.cmpi eq, %264, %675 : vector<2x32xi32>
    %677 = arith.extui %676 : vector<2x32xi1> to vector<2x32xi32>
    %678 = arith.sitofp %677 : vector<2x32xi32> to vector<2x32xf32>
    %c7_i32_153 = arith.constant 7 : i32
    %cst_154 = arith.constant dense<0.000000e+00> : vector<2x384xf32>
    %679 = tpu.matmul %678, %2, %cst_154 {dimension_numbers = #tpu.dot_dimension_numbers<[1], [0], [0], [1], [0, 0, 1, 1], [], []>} : vector<2x32xf32>, vector<32x384xf32>, vector<2x384xf32> -> vector<2x384xf32>
    %cst_155 = arith.constant dense<0.000000e+00> : vector<2x384xf32>
    %680 = tpu.matmul %649, %3, %cst_155 {dimension_numbers = #tpu.dot_dimension_numbers<[1], [0], [0], [1], [0, 0, 1, 1], [], []>} : vector<2x128xf32>, vector<128x384xf32>, vector<2x384xf32> -> vector<2x384xf32>
    %681 = vector.broadcast %4 : vector<1x384xf32> to vector<2x384xf32>
    %682 = arith.addf %680, %681 : vector<2x384xf32>
    %683 = vector.extract_strided_slice %679 {offsets = [0, 0], sizes = [2, 128], strides = [1, 1]} : vector<2x384xf32> to vector<2x128xf32>
    %684 = vector.extract_strided_slice %682 {offsets = [0, 0], sizes = [2, 128], strides = [1, 1]} : vector<2x384xf32> to vector<2x128xf32>
    %685 = arith.addf %683, %684 : vector<2x128xf32>
    %686 = arith.negf %685 : vector<2x128xf32>
    %687 = math.exp %686 : vector<2x128xf32>
    %cst_156 = arith.constant 1.000000e+00 : f32
    %688 = vector.broadcast %cst_156 : f32 to vector<2x128xf32>
    %689 = arith.addf %688, %687 : vector<2x128xf32>
    %690 = arith.divf %688, %689 : vector<2x128xf32>
    %691 = vector.extract_strided_slice %679 {offsets = [0, 128], sizes = [2, 128], strides = [1, 1]} : vector<2x384xf32> to vector<2x128xf32>
    %692 = vector.extract_strided_slice %682 {offsets = [0, 128], sizes = [2, 128], strides = [1, 1]} : vector<2x384xf32> to vector<2x128xf32>
    %693 = arith.addf %691, %692 : vector<2x128xf32>
    %694 = arith.negf %693 : vector<2x128xf32>
    %695 = math.exp %694 : vector<2x128xf32>
    %cst_157 = arith.constant 1.000000e+00 : f32
    %696 = vector.broadcast %cst_157 : f32 to vector<2x128xf32>
    %697 = arith.addf %696, %695 : vector<2x128xf32>
    %698 = arith.divf %696, %697 : vector<2x128xf32>
    %699 = vector.extract_strided_slice %679 {offsets = [0, 256], sizes = [2, 128], strides = [1, 1]} : vector<2x384xf32> to vector<2x128xf32>
    %700 = vector.extract_strided_slice %682 {offsets = [0, 256], sizes = [2, 128], strides = [1, 1]} : vector<2x384xf32> to vector<2x128xf32>
    %701 = arith.mulf %690, %700 : vector<2x128xf32>
    %702 = arith.addf %699, %701 : vector<2x128xf32>
    %703 = math.tanh %702 : vector<2x128xf32>
    %cst_158 = arith.constant 1.000000e+00 : f32
    %704 = vector.broadcast %cst_158 : f32 to vector<2x128xf32>
    %705 = arith.subf %704, %698 : vector<2x128xf32>
    %706 = arith.mulf %705, %703 : vector<2x128xf32>
    %707 = arith.mulf %698, %649 : vector<2x128xf32>
    %708 = arith.addf %706, %707 : vector<2x128xf32>
    %cst_159 = arith.constant dense<0.000000e+00> : vector<2x32xf32>
    %709 = tpu.matmul %708, %5, %cst_159 {dimension_numbers = #tpu.dot_dimension_numbers<[1], [0], [0], [1], [0, 0, 1, 1], [], []>} : vector<2x128xf32>, vector<128x32xf32>, vector<2x32xf32> -> vector<2x32xf32>
    %710 = vector.broadcast %6 : vector<1x32xf32> to vector<2x32xf32>
    %711 = arith.addf %709, %710 : vector<2x32xf32>
    %cst_160 = arith.constant dense<0xFF800000> : vector<2xf32>
    %712 = vector.multi_reduction <maximumf>, %711, %cst_160 [1] : vector<2x32xf32> to vector<2xf32>
    %713 = vector.shape_cast %712 : vector<2xf32> to vector<2x1xf32>
    %714 = vector.broadcast %713 : vector<2x1xf32> to vector<2x32xf32>
    %715 = arith.subf %711, %714 : vector<2x32xf32>
    %716 = math.exp %715 : vector<2x32xf32>
    %cst_161 = arith.constant dense<0.000000e+00> : vector<2xf32>
    %717 = vector.multi_reduction <add>, %716, %cst_161 [1] : vector<2x32xf32> to vector<2xf32>
    %718 = vector.shape_cast %717 : vector<2xf32> to vector<2x1xf32>
    %719 = math.log %718 : vector<2x1xf32>
    %720 = vector.broadcast %713 : vector<2x1xf32> to vector<2x32xf32>
    %721 = arith.subf %711, %720 : vector<2x32xf32>
    %722 = vector.broadcast %719 : vector<2x1xf32> to vector<2x32xf32>
    %723 = arith.subf %721, %722 : vector<2x32xf32>
    %724 = arith.index_cast %c7_i32_153 : i32 to index
    %c0_162 = arith.constant 0 : index
    %c0_163 = arith.constant 0 : index
    %725 = vector.load %arg9[%724, %c0_162, %c0_163] : memref<8x2x32xf32, #tpu.memory_space<vmem>>, vector<1x2x32xf32>
    %726 = vector.shape_cast %725 : vector<1x2x32xf32> to vector<2x32xf32>
    %727 = vector.shape_cast %723 : vector<2x32xf32> to vector<1x2x32xf32>
    tpu.vector_store %arg9[%724, %c0_162, %c0_163], %727 {strides = array<i32>} : memref<8x2x32xf32, #tpu.memory_space<vmem>>, vector<1x2x32xf32>,
    %728 = vector.broadcast %713 : vector<2x1xf32> to vector<2x32xf32>
    %729 = arith.cmpf oeq, %711, %728 : vector<2x32xf32>
    %c32_i32_164 = arith.constant 32 : i32
    %730 = vector.broadcast %c32_i32_164 : i32 to vector<2x32xi32>
    %731 = arith.select %729, %264, %730 : vector<2x32xi1>, vector<2x32xi32>
    %cst_165 = arith.constant dense<2147483647> : vector<2xi32>
    %732 = vector.multi_reduction <minsi>, %731, %cst_165 [1] : vector<2x32xi32> to vector<2xi32>
    %733 = vector.shape_cast %732 : vector<2xi32> to vector<2x1xi32>
    %734 = vector.broadcast %733 : vector<2x1xi32> to vector<2x32xi32>
    %735 = arith.cmpi eq, %264, %734 : vector<2x32xi32>
    %736 = arith.extui %735 : vector<2x32xi1> to vector<2x32xi32>
    %737 = arith.sitofp %736 : vector<2x32xi32> to vector<2x32xf32>
    %c8_i32_166 = arith.constant 8 : i32
    return
  }
}

</mosaic_0001>

<llo_original>
// kernel: seq2seq_forward.1
$region0: #{seq2seq_forward.1}
  #allocation0 [shape = 'u32[]', space=smem, size = 0x4, offset = 0x4, fixed_abs, tag = 'smem constant byte address 0x4 - core index']
  #allocation1 [shape = 'u32[72,128]{1,0:T(1,128)}', space=vmem, size = 0x9000, scoped, tag = 'internal scratch']
  %s0 = inlined_call_operand.vmem [shape: f32[8,2,384], index: 0, kind: input, shape index: {}]
  %s1 = inlined_call_operand.vmem [shape: f32[128,384], index: 1, kind: input, shape index: {}]
  %s2 = inlined_call_operand.vmem [shape: f32[1,384], index: 2, kind: input, shape index: {}]
  %s3 = inlined_call_operand.vmem [shape: f32[2,32], index: 3, kind: input, shape index: {}]
  %s4 = inlined_call_operand.vmem [shape: f32[32,384], index: 4, kind: input, shape index: {}]
  %s5 = inlined_call_operand.vmem [shape: f32[128,384], index: 5, kind: input, shape index: {}]
  %s6 = inlined_call_operand.vmem [shape: f32[1,384], index: 6, kind: input, shape index: {}]
  %s7 = inlined_call_operand.vmem [shape: f32[128,32], index: 7, kind: input, shape index: {}]
  %s8 = inlined_call_operand.vmem [shape: f32[1,32], index: 8, kind: input, shape index: {}]
  %s9 = inlined_call_operand.vmem [shape: f32[8,2,32], index: 9, kind: output, shape index: {}]
  %s10 = sld [smem:[#allocation0]]
  $region46: #{seq2seq_forward.1} parent=0
    _
  %s12 = ssub.s32 1, %s10
  %s13 = scalar_select 0, %s12, %s10
  // Predicated region
  $region2: #{seq2seq_forward.1} parent=0 // pred_check
    _
  $region3: #{seq2seq_forward.1} parent=0 // pred_check_branch
    %15 = sbr.rel (0) target = $region5
  $region4: #{seq2seq_forward.1} parent=0 // pred_region
    _
  $region5: #{seq2seq_forward.1} parent=0 // pred_fallthru
    _
  // Predicated region
  $region6: #{seq2seq_forward.1} parent=0 // pred_check
    _
  $region7: #{seq2seq_forward.1} parent=0 // pred_check_branch
    %17 = sbr.rel (0) target = $region9
  $region8: #{seq2seq_forward.1} parent=0 // pred_region
    _
  $region9: #{seq2seq_forward.1} parent=0 // pred_fallthru
    _
  // Predicated region
  $region10: #{seq2seq_forward.1} parent=0 // pred_check
    _
  $region11: #{seq2seq_forward.1} parent=0 // pred_check_branch
    %19 = sbr.rel (0) target = $region13
  $region12: #{seq2seq_forward.1} parent=0 // pred_region
    _
  $region13: #{seq2seq_forward.1} parent=0 // pred_fallthru
    _
  // Predicated region
  $region14: #{seq2seq_forward.1} parent=0 // pred_check
    _
  $region15: #{seq2seq_forward.1} parent=0 // pred_check_branch
    %21 = sbr.rel (0) target = $region17
  $region16: #{seq2seq_forward.1} parent=0 // pred_region
    _
  $region17: #{seq2seq_forward.1} parent=0 // pred_fallthru
    _
  // Predicated region
  $region18: #{seq2seq_forward.1} parent=0 // pred_check
    _
  $region19: #{seq2seq_forward.1} parent=0 // pred_check_branch
    %23 = sbr.rel (0) target = $region21
  $region20: #{seq2seq_forward.1} parent=0 // pred_region
    _
  $region21: #{seq2seq_forward.1} parent=0 // pred_fallthru
    _
  // Predicated region
  $region22: #{seq2seq_forward.1} parent=0 // pred_check
    _
  $region23: #{seq2seq_forward.1} parent=0 // pred_check_branch
    %25 = sbr.rel (0) target = $region25
  $region24: #{seq2seq_forward.1} parent=0 // pred_region
    _
  $region25: #{seq2seq_forward.1} parent=0 // pred_fallthru
    _
  // Predicated region
  $region26: #{seq2seq_forward.1} parent=0 // pred_check
    _
  $region27: #{seq2seq_forward.1} parent=0 // pred_check_branch
    %27 = sbr.rel (0) target = $region29
  $region28: #{seq2seq_forward.1} parent=0 // pred_region
    _
  $region29: #{seq2seq_forward.1} parent=0 // pred_fallthru
    _
  // Predicated region
  $region30: #{seq2seq_forward.1} parent=0 // pred_check
    _
  $region31: #{seq2seq_forward.1} parent=0 // pred_check_branch
    %29 = sbr.rel (0) target = $region33
  $region32: #{seq2seq_forward.1} parent=0 // pred_region
    _
  $region33: #{seq2seq_forward.1} parent=0 // pred_fallthru
    _
  // Predicated region
  $region34: #{seq2seq_forward.1} parent=0 // pred_check
    _
  $region35: #{seq2seq_forward.1} parent=0 // pred_check_branch
    %31 = sbr.rel (0) target = $region37
  $region36: #{seq2seq_forward.1} parent=0 // pred_region
    _
  $region37: #{seq2seq_forward.1} parent=0 // pred_fallthru
    _
  %v32 = vld [vmem:[%s1] sm:$0xff]
  %v33 = vld [vmem:[%s1 + $0x8] sm:$0xff]
  %v34 = vld [vmem:[%s1 + $0x10] sm:$0xff]
  %v35 = vld [vmem:[%s1 + $0x18] sm:$0xff]
  %v36 = vld [vmem:[%s1 + $0x20] sm:$0xff]
  %v37 = vld [vmem:[%s1 + $0x28] sm:$0xff]
  %v38 = vld [vmem:[%s1 + $0x30] sm:$0xff]
  %v39 = vld [vmem:[%s1 + $0x38] sm:$0xff]
  %v40 = vld [vmem:[%s1 + $0x40] sm:$0xff]
  %v41 = vld [vmem:[%s1 + $0x48] sm:$0xff]
  %v42 = vld [vmem:[%s1 + $0x50] sm:$0xff]
  %v43 = vld [vmem:[%s1 + $0x58] sm:$0xff]
  %v44 = vld [vmem:[%s1 + $0x60] sm:$0xff]
  %v45 = vld [vmem:[%s1 + $0x68] sm:$0xff]
  %v46 = vld [vmem:[%s1 + $0x70] sm:$0xff]
  %v47 = vld [vmem:[%s1 + $0x78] sm:$0xff]
  %v48 = vld [vmem:[%s1 + $0x80] sm:$0xff]
  %v49 = vld [vmem:[%s1 + $0x88] sm:$0xff]
  %v50 = vld [vmem:[%s1 + $0x90] sm:$0xff]
  %v51 = vld [vmem:[%s1 + $0x98] sm:$0xff]
  %v52 = vld [vmem:[%s1 + $0xa0] sm:$0xff]
  %v53 = vld [vmem:[%s1 + $0xa8] sm:$0xff]
  %v54 = vld [vmem:[%s1 + $0xb0] sm:$0xff]
  %v55 = vld [vmem:[%s1 + $0xb8] sm:$0xff]
  %v56 = vld [vmem:[%s1 + $0xc0] sm:$0xff]
  %v57 = vld [vmem:[%s1 + $0xc8] sm:$0xff]
  %v58 = vld [vmem:[%s1 + $0xd0] sm:$0xff]
  %v59 = vld [vmem:[%s1 + $0xd8] sm:$0xff]
  %v60 = vld [vmem:[%s1 + $0xe0] sm:$0xff]
  %v61 = vld [vmem:[%s1 + $0xe8] sm:$0xff]
  %v62 = vld [vmem:[%s1 + $0xf0] sm:$0xff]
  %v63 = vld [vmem:[%s1 + $0xf8] sm:$0xff]
  %v64 = vld [vmem:[%s1 + $0x100] sm:$0xff]
  %v65 = vld [vmem:[%s1 + $0x108] sm:$0xff]
  %v66 = vld [vmem:[%s1 + $0x110] sm:$0xff]
  %v67 = vld [vmem:[%s1 + $0x118] sm:$0xff]
  %v68 = vld [vmem:[%s1 + $0x120] sm:$0xff]
  %v69 = vld [vmem:[%s1 + $0x128] sm:$0xff]
  %v70 = vld [vmem:[%s1 + $0x130] sm:$0xff]
  %v71 = vld [vmem:[%s1 + $0x138] sm:$0xff]
  %v72 = vld [vmem:[%s1 + $0x140] sm:$0xff]
  %v73 = vld [vmem:[%s1 + $0x148] sm:$0xff]
  %v74 = vld [vmem:[%s1 + $0x150] sm:$0xff]
  %v75 = vld [vmem:[%s1 + $0x158] sm:$0xff]
  %v76 = vld [vmem:[%s1 + $0x160] sm:$0xff]
  %v77 = vld [vmem:[%s1 + $0x168] sm:$0xff]
  %v78 = vld [vmem:[%s1 + $0x170] sm:$0xff]
  %v79 = vld [vmem:[%s1 + $0x178] sm:$0xff]
  %v80 = vld [vmem:[%s2] sm:$0x7]
  %v81 = vld [vmem:[%s4] sm:$0xff]
  %v82 = vld [vmem:[%s4 + $0x8] sm:$0xff]
  %v83 = vld [vmem:[%s4 + $0x10] sm:$0xff]
  %v84 = vld [vmem:[%s4 + $0x18] sm:$0xff]
  %v85 = vld [vmem:[%s4 + $0x20] sm:$0xff]
  %v86 = vld [vmem:[%s4 + $0x28] sm:$0xff]
  %v87 = vld [vmem:[%s4 + $0x30] sm:$0xff]
  %v88 = vld [vmem:[%s4 + $0x38] sm:$0xff]
  %v89 = vld [vmem:[%s4 + $0x40] sm:$0xff]
  %v90 = vld [vmem:[%s4 + $0x48] sm:$0xff]
  %v91 = vld [vmem:[%s4 + $0x50] sm:$0xff]
  %v92 = vld [vmem:[%s4 + $0x58] sm:$0xff]
  %v93 = vld [vmem:[%s5] sm:$0xff]
  %v94 = vld [vmem:[%s5 + $0x8] sm:$0xff]
  %v95 = vld [vmem:[%s5 + $0x10] sm:$0xff]
  %v96 = vld [vmem:[%s5 + $0x18] sm:$0xff]
  %v97 = vld [vmem:[%s5 + $0x20] sm:$0xff]
  %v98 = vld [vmem:[%s5 + $0x28] sm:$0xff]
  %v99 = vld [vmem:[%s5 + $0x30] sm:$0xff]
  %v100 = vld [vmem:[%s5 + $0x38] sm:$0xff]
  %v101 = vld [vmem:[%s5 + $0x40] sm:$0xff]
  %v102 = vld [vmem:[%s5 + $0x48] sm:$0xff]
  %v103 = vld [vmem:[%s5 + $0x50] sm:$0xff]
  %v104 = vld [vmem:[%s5 + $0x58] sm:$0xff]
  %v105 = vld [vmem:[%s5 + $0x60] sm:$0xff]
  %v106 = vld [vmem:[%s5 + $0x68] sm:$0xff]
  %v107 = vld [vmem:[%s5 + $0x70] sm:$0xff]
  %v108 = vld [vmem:[%s5 + $0x78] sm:$0xff]
  %v109 = vld [vmem:[%s5 + $0x80] sm:$0xff]
  %v110 = vld [vmem:[%s5 + $0x88] sm:$0xff]
  %v111 = vld [vmem:[%s5 + $0x90] sm:$0xff]
  %v112 = vld [vmem:[%s5 + $0x98] sm:$0xff]
  %v113 = vld [vmem:[%s5 + $0xa0] sm:$0xff]
  %v114 = vld [vmem:[%s5 + $0xa8] sm:$0xff]
  %v115 = vld [vmem:[%s5 + $0xb0] sm:$0xff]
  %v116 = vld [vmem:[%s5 + $0xb8] sm:$0xff]
  %v117 = vld [vmem:[%s5 + $0xc0] sm:$0xff]
  %v118 = vld [vmem:[%s5 + $0xc8] sm:$0xff]
  %v119 = vld [vmem:[%s5 + $0xd0] sm:$0xff]
  %v120 = vld [vmem:[%s5 + $0xd8] sm:$0xff]
  %v121 = vld [vmem:[%s5 + $0xe0] sm:$0xff]
  %v122 = vld [vmem:[%s5 + $0xe8] sm:$0xff]
  %v123 = vld [vmem:[%s5 + $0xf0] sm:$0xff]
  %v124 = vld [vmem:[%s5 + $0xf8] sm:$0xff]
  %v125 = vld [vmem:[%s5 + $0x100] sm:$0xff]
  %v126 = vld [vmem:[%s5 + $0x108] sm:$0xff]
  %v127 = vld [vmem:[%s5 + $0x110] sm:$0xff]
  %v128 = vld [vmem:[%s5 + $0x118] sm:$0xff]
  %v129 = vld [vmem:[%s5 + $0x120] sm:$0xff]
  %v130 = vld [vmem:[%s5 + $0x128] sm:$0xff]
  %v131 = vld [vmem:[%s5 + $0x130] sm:$0xff]
  %v132 = vld [vmem:[%s5 + $0x138] sm:$0xff]
  %v133 = vld [vmem:[%s5 + $0x140] sm:$0xff]
  %v134 = vld [vmem:[%s5 + $0x148] sm:$0xff]
  %v135 = vld [vmem:[%s5 + $0x150] sm:$0xff]
  %v136 = vld [vmem:[%s5 + $0x158] sm:$0xff]
  %v137 = vld [vmem:[%s5 + $0x160] sm:$0xff]
  %v138 = vld [vmem:[%s5 + $0x168] sm:$0xff]
  %v139 = vld [vmem:[%s5 + $0x170] sm:$0xff]
  %v140 = vld [vmem:[%s5 + $0x178] sm:$0xff]
  %v141 = vld [vmem:[%s6] sm:$0x7]
  %v142 = vld [vmem:[%s7] sm:$0xff]
  %v143 = vld [vmem:[%s7 + $0x8] sm:$0xff]
  %v144 = vld [vmem:[%s7 + $0x10] sm:$0xff]
  %v145 = vld [vmem:[%s7 + $0x18] sm:$0xff]
  %v146 = vld [vmem:[%s7 + $0x20] sm:$0xff]
  %v147 = vld [vmem:[%s7 + $0x28] sm:$0xff]
  %v148 = vld [vmem:[%s7 + $0x30] sm:$0xff]
  %v149 = vld [vmem:[%s7 + $0x38] sm:$0xff]
  %v150 = vld [vmem:[%s7 + $0x40] sm:$0xff]
  %v151 = vld [vmem:[%s7 + $0x48] sm:$0xff]
  %v152 = vld [vmem:[%s7 + $0x50] sm:$0xff]
  %v153 = vld [vmem:[%s7 + $0x58] sm:$0xff]
  %v154 = vld [vmem:[%s7 + $0x60] sm:$0xff]
  %v155 = vld [vmem:[%s7 + $0x68] sm:$0xff]
  %v156 = vld [vmem:[%s7 + $0x70] sm:$0xff]
  %v157 = vld [vmem:[%s7 + $0x78] sm:$0xff]
  %v158 = vld [vmem:[%s8] sm:$0x1]
  %v159 = vld [vmem:[%s0] sm:$0x3f]
  %v161 = vperm.slane %v80, 0
  %v162 = vperm.slane %v80, 1
  %v163 = vperm.slane %v80, 2
  %167 = vmatpush.msra.mxu0 %v77
  %168 = vmatpush.msra.mxu0 %v74
  %169 = vmatpush.msra.mxu0 %v71
  %170 = vmatpush.msra.mxu0 %v68
  %171 = vmatpush.msra.mxu0 %v65
  %172 = vmatpush.msra.mxu0 %v62
  %173 = vmatpush.msra.mxu0 %v59
  %174 = vmatpush.msra.mxu0 %v56
  %175 = vmatpush.msra.mxu0 %v53
  %176 = vmatpush.msra.mxu0 %v50
  %177 = vmatpush.msra.mxu0 %v47
  %178 = vmatpush.msra.mxu0 %v44
  %179 = vmatpush.msra.mxu0 %v41
  %180 = vmatpush.msra.mxu0 %v38
  %181 = vmatpush.msra.mxu0 %v35
  %182 = vmatpush.msra.mxu0 %v32
  %183 = vmatmul.f32.gmra.mxu0 0.0
  %v184 = vpop.f32.mrf.mxu0
  %v185 = vadd.f32 %v161, %v184
  %186 = vdwg.mxu0
  %187 = vmatpush.msra.mxu0 %v78
  %188 = vmatpush.msra.mxu0 %v75
  %189 = vmatpush.msra.mxu0 %v72
  %190 = vmatpush.msra.mxu0 %v69
  %191 = vmatpush.msra.mxu0 %v66
  %192 = vmatpush.msra.mxu0 %v63
  %193 = vmatpush.msra.mxu0 %v60
  %194 = vmatpush.msra.mxu0 %v57
  %195 = vmatpush.msra.mxu0 %v54
  %196 = vmatpush.msra.mxu0 %v51
  %197 = vmatpush.msra.mxu0 %v48
  %198 = vmatpush.msra.mxu0 %v45
  %199 = vmatpush.msra.mxu0 %v42
  %200 = vmatpush.msra.mxu0 %v39
  %201 = vmatpush.msra.mxu0 %v36
  %202 = vmatpush.msra.mxu0 %v33
  %203 = vmatmul.f32.gmra.mxu0 0.0
  %v204 = vpop.f32.mrf.mxu0
  %v205 = vadd.f32 %v162, %v204
  %206 = vdwg.mxu0
  %207 = vmatpush.msra.mxu0 %v79
  %208 = vmatpush.msra.mxu0 %v76
  %209 = vmatpush.msra.mxu0 %v73
  %210 = vmatpush.msra.mxu0 %v70
  %211 = vmatpush.msra.mxu0 %v67
  %212 = vmatpush.msra.mxu0 %v64
  %213 = vmatpush.msra.mxu0 %v61
  %214 = vmatpush.msra.mxu0 %v58
  %215 = vmatpush.msra.mxu0 %v55
  %216 = vmatpush.msra.mxu0 %v52
  %217 = vmatpush.msra.mxu0 %v49
  %218 = vmatpush.msra.mxu0 %v46
  %219 = vmatpush.msra.mxu0 %v43
  %220 = vmatpush.msra.mxu0 %v40
  %221 = vmatpush.msra.mxu0 %v37
  %222 = vmatpush.msra.mxu0 %v34
  %223 = vmatmul.f32.gmra.mxu0 0.0
  %v224 = vpop.f32.mrf.mxu0
  %v225 = vadd.f32 %v163, %v224
  %226 = vdwg.mxu0
  %v227 = vadd.f32 %v159, %v185
  %v228 = vxor.u32 %v227, 2147483648
  %v229 = vmul.f32 %v228, 1.442695
  %v230 = vpow.pop %v229
  %v231 = vadd.f32 %v230, 1.0
  %v232 = vrcp.pop %v231
  %v233 = vmul.f32 %v231, %v232
  %v234 = vsub.f32 1.0, %v233
  %v235 = vmul.f32 %v232, %v234
  %v236 = vadd.f32 %v232, %v235
  %vm237 = vweird.f32 %v231
  %vm238 = vweird.f32 %v232
  %vm239 = vmor %vm237, %vm238
  %v240 = vsel %vm239, %v232, %v236
  %v241 = vand.u32 2147483647, %v231
  %vm242 = vcmp.eq.f32.partialorder %v241, 8.507059e+37
  %v243 = vand.u32 %v231, 2147483648
  %v244 = vor.u32 1.1754944e-38, %v243
  %v245 = vsel %vm242, %v244, %v240
  %v246 = vmul.f32 1.0, %v245
  %v248 = vrot.slane %v159, 2
  %v250 = vadd.f32 %v248, %v205
  %v251 = vxor.u32 %v250, 2147483648
  %v252 = vmul.f32 %v251, 1.442695
  %v253 = vpow.pop %v252
  %v254 = vadd.f32 %v253, 1.0
  %v255 = vrcp.pop %v254
  %v256 = vmul.f32 %v254, %v255
  %v257 = vsub.f32 1.0, %v256
  %v258 = vmul.f32 %v255, %v257
  %v259 = vadd.f32 %v255, %v258
  %vm260 = vweird.f32 %v254
  %vm261 = vweird.f32 %v255
  %vm262 = vmor %vm260, %vm261
  %v263 = vsel %vm262, %v255, %v259
  %v264 = vand.u32 2147483647, %v254
  %vm265 = vcmp.eq.f32.partialorder %v264, 8.507059e+37
  %v266 = vand.u32 %v254, 2147483648
  %v267 = vor.u32 1.1754944e-38, %v266
  %v268 = vsel %vm265, %v267, %v263
  %v269 = vmul.f32 1.0, %v268
  %v270 = vmul.f32 %v246, %v225
  %v271 = vrot.slane %v159, 4
  %v273 = vadd.f32 %v271, %v270
  %v274 = vtanh.pop %v273
  %v275 = vsub.f32 1.0, %v269
  %v276 = vmul.f32 %v275, %v274
  %v277 = vmul.f32 %v269, 0.0
  %v278 = vadd.f32 %v276, %v277
  %s279 = scalar_lea.vmem %s0, 6
  %v280 = vld [vmem:[%s279] sm:$0x3f]
  %281 = vmatpush.msra.mxu0 %v77
  %282 = vmatpush.msra.mxu0 %v74
  %283 = vmatpush.msra.mxu0 %v71
  %284 = vmatpush.msra.mxu0 %v68
  %285 = vmatpush.msra.mxu0 %v65
  %286 = vmatpush.msra.mxu0 %v62
  %287 = vmatpush.msra.mxu0 %v59
  %288 = vmatpush.msra.mxu0 %v56
  %289 = vmatpush.msra.mxu0 %v53
  %290 = vmatpush.msra.mxu0 %v50
  %291 = vmatpush.msra.mxu0 %v47
  %292 = vmatpush.msra.mxu0 %v44
  %293 = vmatpush.msra.mxu0 %v41
  %294 = vmatpush.msra.mxu0 %v38
  %295 = vmatpush.msra.mxu0 %v35
  %296 = vmatpush.msra.mxu0 %v32
  %297 = vmatmul.f32.gmra.mxu0 %v278
  %v298 = vpop.f32.mrf.mxu0
  %v299 = vadd.f32 %v161, %v298
  %300 = vdwg.mxu0
  %301 = vmatpush.msra.mxu0 %v78
  %302 = vmatpush.msra.mxu0 %v75
  %303 = vmatpush.msra.mxu0 %v72
  %304 = vmatpush.msra.mxu0 %v69
  %305 = vmatpush.msra.mxu0 %v66
  %306 = vmatpush.msra.mxu0 %v63
  %307 = vmatpush.msra.mxu0 %v60
  %308 = vmatpush.msra.mxu0 %v57
  %309 = vmatpush.msra.mxu0 %v54
  %310 = vmatpush.msra.mxu0 %v51
  %311 = vmatpush.msra.mxu0 %v48
  %312 = vmatpush.msra.mxu0 %v45
  %313 = vmatpush.msra.mxu0 %v42
  %314 = vmatpush.msra.mxu0 %v39
  %315 = vmatpush.msra.mxu0 %v36
  %316 = vmatpush.msra.mxu0 %v33
  %317 = vmatmul.f32.gmra.mxu0 %v278
  %v318 = vpop.f32.mrf.mxu0
  %v319 = vadd.f32 %v162, %v318
  %320 = vdwg.mxu0
  %321 = vmatpush.msra.mxu0 %v79
  %322 = vmatpush.msra.mxu0 %v76
  %323 = vmatpush.msra.mxu0 %v73
  %324 = vmatpush.msra.mxu0 %v70
  %325 = vmatpush.msra.mxu0 %v67
  %326 = vmatpush.msra.mxu0 %v64
  %327 = vmatpush.msra.mxu0 %v61
  %328 = vmatpush.msra.mxu0 %v58
  %329 = vmatpush.msra.mxu0 %v55
  %330 = vmatpush.msra.mxu0 %v52
  %331 = vmatpush.msra.mxu0 %v49
  %332 = vmatpush.msra.mxu0 %v46
  %333 = vmatpush.msra.mxu0 %v43
  %334 = vmatpush.msra.mxu0 %v40
  %335 = vmatpush.msra.mxu0 %v37
  %336 = vmatpush.msra.mxu0 %v34
  %337 = vmatmul.f32.gmra.mxu0 %v278
  %v338 = vpop.f32.mrf.mxu0
  %v339 = vadd.f32 %v163, %v338
  %340 = vdwg.mxu0
  %v341 = vadd.f32 %v280, %v299
  %v342 = vxor.u32 %v341, 2147483648
  %v343 = vmul.f32 %v342, 1.442695
  %v344 = vpow.pop %v343
  %v345 = vadd.f32 %v344, 1.0
  %v346 = vrcp.pop %v345
  %v347 = vmul.f32 %v345, %v346
  %v348 = vsub.f32 1.0, %v347
  %v349 = vmul.f32 %v346, %v348
  %v350 = vadd.f32 %v346, %v349
  %vm351 = vweird.f32 %v345
  %vm352 = vweird.f32 %v346
  %vm353 = vmor %vm351, %vm352
  %v354 = vsel %vm353, %v346, %v350
  %v355 = vand.u32 2147483647, %v345
  %vm356 = vcmp.eq.f32.partialorder %v355, 8.507059e+37
  %v357 = vand.u32 %v345, 2147483648
  %v358 = vor.u32 1.1754944e-38, %v357
  %v359 = vsel %vm356, %v358, %v354
  %v360 = vmul.f32 1.0, %v359
  %v362 = vrot.slane %v280, 2
  %v364 = vadd.f32 %v362, %v319
  %v365 = vxor.u32 %v364, 2147483648
  %v366 = vmul.f32 %v365, 1.442695
  %v367 = vpow.pop %v366
  %v368 = vadd.f32 %v367, 1.0
  %v369 = vrcp.pop %v368
  %v370 = vmul.f32 %v368, %v369
  %v371 = vsub.f32 1.0, %v370
  %v372 = vmul.f32 %v369, %v371
  %v373 = vadd.f32 %v369, %v372
  %vm374 = vweird.f32 %v368
  %vm375 = vweird.f32 %v369
  %vm376 = vmor %vm374, %vm375
  %v377 = vsel %vm376, %v369, %v373
  %v378 = vand.u32 2147483647, %v368
  %vm379 = vcmp.eq.f32.partialorder %v378, 8.507059e+37
  %v380 = vand.u32 %v368, 2147483648
  %v381 = vor.u32 1.1754944e-38, %v380
  %v382 = vsel %vm379, %v381, %v377
  %v383 = vmul.f32 1.0, %v382
  %v384 = vmul.f32 %v360, %v339
  %v385 = vrot.slane %v280, 4
  %v387 = vadd.f32 %v385, %v384
  %v388 = vtanh.pop %v387
  %v389 = vsub.f32 1.0, %v383
  %v390 = vmul.f32 %v389, %v388
  %v391 = vmul.f32 %v383, %v278
  %v392 = vadd.f32 %v390, %v391
  %s393 = scalar_lea.vmem %s0, 12
  %v394 = vld [vmem:[%s393] sm:$0x3f]
  %395 = vmatpush.msra.mxu0 %v77
  %396 = vmatpush.msra.mxu0 %v74
  %397 = vmatpush.msra.mxu0 %v71
  %398 = vmatpush.msra.mxu0 %v68
  %399 = vmatpush.msra.mxu0 %v65
  %400 = vmatpush.msra.mxu0 %v62
  %401 = vmatpush.msra.mxu0 %v59
  %402 = vmatpush.msra.mxu0 %v56
  %403 = vmatpush.msra.mxu0 %v53
  %404 = vmatpush.msra.mxu0 %v50
  %405 = vmatpush.msra.mxu0 %v47
  %406 = vmatpush.msra.mxu0 %v44
  %407 = vmatpush.msra.mxu0 %v41
  %408 = vmatpush.msra.mxu0 %v38
  %409 = vmatpush.msra.mxu0 %v35
  %410 = vmatpush.msra.mxu0 %v32
  %411 = vmatmul.f32.gmra.mxu0 %v392
  %v412 = vpop.f32.mrf.mxu0
  %v413 = vadd.f32 %v161, %v412
  %414 = vdwg.mxu0
  %415 = vmatpush.msra.mxu0 %v78
  %416 = vmatpush.msra.mxu0 %v75
  %417 = vmatpush.msra.mxu0 %v72
  %418 = vmatpush.msra.mxu0 %v69
  %419 = vmatpush.msra.mxu0 %v66
  %420 = vmatpush.msra.mxu0 %v63
  %421 = vmatpush.msra.mxu0 %v60
  %422 = vmatpush.msra.mxu0 %v57
  %423 = vmatpush.msra.mxu0 %v54
  %424 = vmatpush.msra.mxu0 %v51
  %425 = vmatpush.msra.mxu0 %v48
  %426 = vmatpush.msra.mxu0 %v45
  %427 = vmatpush.msra.mxu0 %v42
  %428 = vmatpush.msra.mxu0 %v39
  %429 = vmatpush.msra.mxu0 %v36
  %430 = vmatpush.msra.mxu0 %v33
  %431 = vmatmul.f32.gmra.mxu0 %v392
  %v432 = vpop.f32.mrf.mxu0
  %v433 = vadd.f32 %v162, %v432
  %434 = vdwg.mxu0
  %435 = vmatpush.msra.mxu0 %v79
  %436 = vmatpush.msra.mxu0 %v76
  %437 = vmatpush.msra.mxu0 %v73
  %438 = vmatpush.msra.mxu0 %v70
  %439 = vmatpush.msra.mxu0 %v67
  %440 = vmatpush.msra.mxu0 %v64
  %441 = vmatpush.msra.mxu0 %v61
  %442 = vmatpush.msra.mxu0 %v58
  %443 = vmatpush.msra.mxu0 %v55
  %444 = vmatpush.msra.mxu0 %v52
  %445 = vmatpush.msra.mxu0 %v49
  %446 = vmatpush.msra.mxu0 %v46
  %447 = vmatpush.msra.mxu0 %v43
  %448 = vmatpush.msra.mxu0 %v40
  %449 = vmatpush.msra.mxu0 %v37
  %450 = vmatpush.msra.mxu0 %v34
  %451 = vmatmul.f32.gmra.mxu0 %v392
  %v452 = vpop.f32.mrf.mxu0
  %v453 = vadd.f32 %v163, %v452
  %454 = vdwg.mxu0
  %v455 = vadd.f32 %v394, %v413
  %v456 = vxor.u32 %v455, 2147483648
  %v457 = vmul.f32 %v456, 1.442695
  %v458 = vpow.pop %v457
  %v459 = vadd.f32 %v458, 1.0
  %v460 = vrcp.pop %v459
  %v461 = vmul.f32 %v459, %v460
  %v462 = vsub.f32 1.0, %v461
  %v463 = vmul.f32 %v460, %v462
  %v464 = vadd.f32 %v460, %v463
  %vm465 = vweird.f32 %v459
  %vm466 = vweird.f32 %v460
  %vm467 = vmor %vm465, %vm466
  %v468 = vsel %vm467, %v460, %v464
  %v469 = vand.u32 2147483647, %v459
  %vm470 = vcmp.eq.f32.partialorder %v469, 8.507059e+37
  %v471 = vand.u32 %v459, 2147483648
  %v472 = vor.u32 1.1754944e-38, %v471
  %v473 = vsel %vm470, %v472, %v468
  %v474 = vmul.f32 1.0, %v473
  %v476 = vrot.slane %v394, 2
  %v478 = vadd.f32 %v476, %v433
  %v479 = vxor.u32 %v478, 2147483648
  %v480 = vmul.f32 %v479, 1.442695
  %v481 = vpow.pop %v480
  %v482 = vadd.f32 %v481, 1.0
  %v483 = vrcp.pop %v482
  %v484 = vmul.f32 %v482, %v483
  %v485 = vsub.f32 1.0, %v484
  %v486 = vmul.f32 %v483, %v485
  %v487 = vadd.f32 %v483, %v486
  %vm488 = vweird.f32 %v482
  %vm489 = vweird.f32 %v483
  %vm490 = vmor %vm488, %vm489
  %v491 = vsel %vm490, %v483, %v487
  %v492 = vand.u32 2147483647, %v482
  %vm493 = vcmp.eq.f32.partialorder %v492, 8.507059e+37
  %v494 = vand.u32 %v482, 2147483648
  %v495 = vor.u32 1.1754944e-38, %v494
  %v496 = vsel %vm493, %v495, %v491
  %v497 = vmul.f32 1.0, %v496
  %v498 = vmul.f32 %v474, %v453
  %v499 = vrot.slane %v394, 4
  %v501 = vadd.f32 %v499, %v498
  %v502 = vtanh.pop %v501
  %v503 = vsub.f32 1.0, %v497
  %v504 = vmul.f32 %v503, %v502
  %v505 = vmul.f32 %v497, %v392
  %v506 = vadd.f32 %v504, %v505
  %s507 = scalar_lea.vmem %s0, 18
  %v508 = vld [vmem:[%s507] sm:$0x3f]
  %509 = vmatpush.msra.mxu0 %v77
  %510 = vmatpush.msra.mxu0 %v74
  %511 = vmatpush.msra.mxu0 %v71
  %512 = vmatpush.msra.mxu0 %v68
  %513 = vmatpush.msra.mxu0 %v65
  %514 = vmatpush.msra.mxu0 %v62
  %515 = vmatpush.msra.mxu0 %v59
  %516 = vmatpush.msra.mxu0 %v56
  %517 = vmatpush.msra.mxu0 %v53
  %518 = vmatpush.msra.mxu0 %v50
  %519 = vmatpush.msra.mxu0 %v47
  %520 = vmatpush.msra.mxu0 %v44
  %521 = vmatpush.msra.mxu0 %v41
  %522 = vmatpush.msra.mxu0 %v38
  %523 = vmatpush.msra.mxu0 %v35
  %524 = vmatpush.msra.mxu0 %v32
  %525 = vmatmul.f32.gmra.mxu0 %v506
  %v526 = vpop.f32.mrf.mxu0
  %v527 = vadd.f32 %v161, %v526
  %528 = vdwg.mxu0
  %529 = vmatpush.msra.mxu0 %v78
  %530 = vmatpush.msra.mxu0 %v75
  %531 = vmatpush.msra.mxu0 %v72
  %532 = vmatpush.msra.mxu0 %v69
  %533 = vmatpush.msra.mxu0 %v66
  %534 = vmatpush.msra.mxu0 %v63
  %535 = vmatpush.msra.mxu0 %v60
  %536 = vmatpush.msra.mxu0 %v57
  %537 = vmatpush.msra.mxu0 %v54
  %538 = vmatpush.msra.mxu0 %v51
  %539 = vmatpush.msra.mxu0 %v48
  %540 = vmatpush.msra.mxu0 %v45
  %541 = vmatpush.msra.mxu0 %v42
  %542 = vmatpush.msra.mxu0 %v39
  %543 = vmatpush.msra.mxu0 %v36
  %544 = vmatpush.msra.mxu0 %v33
  %545 = vmatmul.f32.gmra.mxu0 %v506
  %v546 = vpop.f32.mrf.mxu0
  %v547 = vadd.f32 %v162, %v546
  %548 = vdwg.mxu0
  %549 = vmatpush.msra.mxu0 %v79
  %550 = vmatpush.msra.mxu0 %v76
  %551 = vmatpush.msra.mxu0 %v73
  %552 = vmatpush.msra.mxu0 %v70
  %553 = vmatpush.msra.mxu0 %v67
  %554 = vmatpush.msra.mxu0 %v64
  %555 = vmatpush.msra.mxu0 %v61
  %556 = vmatpush.msra.mxu0 %v58
  %557 = vmatpush.msra.mxu0 %v55
  %558 = vmatpush.msra.mxu0 %v52
  %559 = vmatpush.msra.mxu0 %v49
  %560 = vmatpush.msra.mxu0 %v46
  %561 = vmatpush.msra.mxu0 %v43
  %562 = vmatpush.msra.mxu0 %v40
  %563 = vmatpush.msra.mxu0 %v37
  %564 = vmatpush.msra.mxu0 %v34
  %565 = vmatmul.f32.gmra.mxu0 %v506
  %v566 = vpop.f32.mrf.mxu0
  %v567 = vadd.f32 %v163, %v566
  %568 = vdwg.mxu0
  %v569 = vadd.f32 %v508, %v527
  %v570 = vxor.u32 %v569, 2147483648
  %v571 = vmul.f32 %v570, 1.442695
  %v572 = vpow.pop %v571
  %v573 = vadd.f32 %v572, 1.0
  %v574 = vrcp.pop %v573
  %v575 = vmul.f32 %v573, %v574
  %v576 = vsub.f32 1.0, %v575
  %v577 = vmul.f32 %v574, %v576
  %v578 = vadd.f32 %v574, %v577
  %vm579 = vweird.f32 %v573
  %vm580 = vweird.f32 %v574
  %vm581 = vmor %vm579, %vm580
  %v582 = vsel %vm581, %v574, %v578
  %v583 = vand.u32 2147483647, %v573
  %vm584 = vcmp.eq.f32.partialorder %v583, 8.507059e+37
  %v585 = vand.u32 %v573, 2147483648
  %v586 = vor.u32 1.1754944e-38, %v585
  %v587 = vsel %vm584, %v586, %v582
  %v588 = vmul.f32 1.0, %v587
  %v590 = vrot.slane %v508, 2
  %v592 = vadd.f32 %v590, %v547
  %v593 = vxor.u32 %v592, 2147483648
  %v594 = vmul.f32 %v593, 1.442695
  %v595 = vpow.pop %v594
  %v596 = vadd.f32 %v595, 1.0
  %v597 = vrcp.pop %v596
  %v598 = vmul.f32 %v596, %v597
  %v599 = vsub.f32 1.0, %v598
  %v600 = vmul.f32 %v597, %v599
  %v601 = vadd.f32 %v597, %v600
  %vm602 = vweird.f32 %v596
  %vm603 = vweird.f32 %v597
  %vm604 = vmor %vm602, %vm603
  %v605 = vsel %vm604, %v597, %v601
  %v606 = vand.u32 2147483647, %v596
  %vm607 = vcmp.eq.f32.partialorder %v606, 8.507059e+37
  %v608 = vand.u32 %v596, 2147483648
  %v609 = vor.u32 1.1754944e-38, %v608
  %v610 = vsel %vm607, %v609, %v605
  %v611 = vmul.f32 1.0, %v610
  %v612 = vmul.f32 %v588, %v567
  %v613 = vrot.slane %v508, 4
  %v615 = vadd.f32 %v613, %v612
  %v616 = vtanh.pop %v615
  %v617 = vsub.f32 1.0, %v611
  %v618 = vmul.f32 %v617, %v616
  %v619 = vmul.f32 %v611, %v506
  %v620 = vadd.f32 %v618, %v619
  %s621 = scalar_lea.vmem %s0, 24
  %v622 = vld [vmem:[%s621] sm:$0x3f]
  %623 = vmatpush.msra.mxu0 %v77
  %624 = vmatpush.msra.mxu0 %v74
  %625 = vmatpush.msra.mxu0 %v71
  %626 = vmatpush.msra.mxu0 %v68
  %627 = vmatpush.msra.mxu0 %v65
  %628 = vmatpush.msra.mxu0 %v62
  %629 = vmatpush.msra.mxu0 %v59
  %630 = vmatpush.msra.mxu0 %v56
  %631 = vmatpush.msra.mxu0 %v53
  %632 = vmatpush.msra.mxu0 %v50
  %633 = vmatpush.msra.mxu0 %v47
  %634 = vmatpush.msra.mxu0 %v44
  %635 = vmatpush.msra.mxu0 %v41
  %636 = vmatpush.msra.mxu0 %v38
  %637 = vmatpush.msra.mxu0 %v35
  %638 = vmatpush.msra.mxu0 %v32
  %639 = vmatmul.f32.gmra.mxu0 %v620
  %v640 = vpop.f32.mrf.mxu0
  %v641 = vadd.f32 %v161, %v640
  %642 = vdwg.mxu0
  %643 = vmatpush.msra.mxu0 %v78
  %644 = vmatpush.msra.mxu0 %v75
  %645 = vmatpush.msra.mxu0 %v72
  %646 = vmatpush.msra.mxu0 %v69
  %647 = vmatpush.msra.mxu0 %v66
  %648 = vmatpush.msra.mxu0 %v63
  %649 = vmatpush.msra.mxu0 %v60
  %650 = vmatpush.msra.mxu0 %v57
  %651 = vmatpush.msra.mxu0 %v54
  %652 = vmatpush.msra.mxu0 %v51
  %653 = vmatpush.msra.mxu0 %v48
  %654 = vmatpush.msra.mxu0 %v45
  %655 = vmatpush.msra.mxu0 %v42
  %656 = vmatpush.msra.mxu0 %v39
  %657 = vmatpush.msra.mxu0 %v36
  %658 = vmatpush.msra.mxu0 %v33
  %659 = vmatmul.f32.gmra.mxu0 %v620
  %v660 = vpop.f32.mrf.mxu0
  %v661 = vadd.f32 %v162, %v660
  %662 = vdwg.mxu0
  %663 = vmatpush.msra.mxu0 %v79
  %664 = vmatpush.msra.mxu0 %v76
  %665 = vmatpush.msra.mxu0 %v73
  %666 = vmatpush.msra.mxu0 %v70
  %667 = vmatpush.msra.mxu0 %v67
  %668 = vmatpush.msra.mxu0 %v64
  %669 = vmatpush.msra.mxu0 %v61
  %670 = vmatpush.msra.mxu0 %v58
  %671 = vmatpush.msra.mxu0 %v55
  %672 = vmatpush.msra.mxu0 %v52
  %673 = vmatpush.msra.mxu0 %v49
  %674 = vmatpush.msra.mxu0 %v46
  %675 = vmatpush.msra.mxu0 %v43
  %676 = vmatpush.msra.mxu0 %v40
  %677 = vmatpush.msra.mxu0 %v37
  %678 = vmatpush.msra.mxu0 %v34
  %679 = vmatmul.f32.gmra.mxu0 %v620
  %v680 = vpop.f32.mrf.mxu0
  %v681 = vadd.f32 %v163, %v680
  %682 = vdwg.mxu0
  %v683 = vadd.f32 %v622, %v641
  %v684 = vxor.u32 %v683, 2147483648
  %v685 = vmul.f32 %v684, 1.442695
  %v686 = vpow.pop %v685
  %v687 = vadd.f32 %v686, 1.0
  %v688 = vrcp.pop %v687
  %v689 = vmul.f32 %v687, %v688
  %v690 = vsub.f32 1.0, %v689
  %v691 = vmul.f32 %v688, %v690
  %v692 = vadd.f32 %v688, %v691
  %vm693 = vweird.f32 %v687
  %vm694 = vweird.f32 %v688
  %vm695 = vmor %vm693, %vm694
  %v696 = vsel %vm695, %v688, %v692
  %v697 = vand.u32 2147483647, %v687
  %vm698 = vcmp.eq.f32.partialorder %v697, 8.507059e+37
  %v699 = vand.u32 %v687, 2147483648
  %v700 = vor.u32 1.1754944e-38, %v699
  %v701 = vsel %vm698, %v700, %v696
  %v702 = vmul.f32 1.0, %v701
  %v704 = vrot.slane %v622, 2
  %v706 = vadd.f32 %v704, %v661
  %v707 = vxor.u32 %v706, 2147483648
  %v708 = vmul.f32 %v707, 1.442695
  %v709 = vpow.pop %v708
  %v710 = vadd.f32 %v709, 1.0
  %v711 = vrcp.pop %v710
  %v712 = vmul.f32 %v710, %v711
  %v713 = vsub.f32 1.0, %v712
  %v714 = vmul.f32 %v711, %v713
  %v715 = vadd.f32 %v711, %v714
  %vm716 = vweird.f32 %v710
  %vm717 = vweird.f32 %v711
  %vm718 = vmor %vm716, %vm717
  %v719 = vsel %vm718, %v711, %v715
  %v720 = vand.u32 2147483647, %v710
  %vm721 = vcmp.eq.f32.partialorder %v720, 8.507059e+37
  %v722 = vand.u32 %v710, 2147483648
  %v723 = vor.u32 1.1754944e-38, %v722
  %v724 = vsel %vm721, %v723, %v719
  %v725 = vmul.f32 1.0, %v724
  %v726 = vmul.f32 %v702, %v681
  %v727 = vrot.slane %v622, 4
  %v729 = vadd.f32 %v727, %v726
  %v730 = vtanh.pop %v729
  %v731 = vsub.f32 1.0, %v725
  %v732 = vmul.f32 %v731, %v730
  %v733 = vmul.f32 %v725, %v620
  %v734 = vadd.f32 %v732, %v733
  %s735 = scalar_lea.vmem %s0, 30
  %v736 = vld [vmem:[%s735] sm:$0x3f]
  %737 = vmatpush.msra.mxu0 %v77
  %738 = vmatpush.msra.mxu0 %v74
  %739 = vmatpush.msra.mxu0 %v71
  %740 = vmatpush.msra.mxu0 %v68
  %741 = vmatpush.msra.mxu0 %v65
  %742 = vmatpush.msra.mxu0 %v62
  %743 = vmatpush.msra.mxu0 %v59
  %744 = vmatpush.msra.mxu0 %v56
  %745 = vmatpush.msra.mxu0 %v53
  %746 = vmatpush.msra.mxu0 %v50
  %747 = vmatpush.msra.mxu0 %v47
  %748 = vmatpush.msra.mxu0 %v44
  %749 = vmatpush.msra.mxu0 %v41
  %750 = vmatpush.msra.mxu0 %v38
  %751 = vmatpush.msra.mxu0 %v35
  %752 = vmatpush.msra.mxu0 %v32
  %753 = vmatmul.f32.gmra.mxu0 %v734
  %v754 = vpop.f32.mrf.mxu0
  %v755 = vadd.f32 %v161, %v754
  %756 = vdwg.mxu0
  %757 = vmatpush.msra.mxu0 %v78
  %758 = vmatpush.msra.mxu0 %v75
  %759 = vmatpush.msra.mxu0 %v72
  %760 = vmatpush.msra.mxu0 %v69
  %761 = vmatpush.msra.mxu0 %v66
  %762 = vmatpush.msra.mxu0 %v63
  %763 = vmatpush.msra.mxu0 %v60
  %764 = vmatpush.msra.mxu0 %v57
  %765 = vmatpush.msra.mxu0 %v54
  %766 = vmatpush.msra.mxu0 %v51
  %767 = vmatpush.msra.mxu0 %v48
  %768 = vmatpush.msra.mxu0 %v45
  %769 = vmatpush.msra.mxu0 %v42
  %770 = vmatpush.msra.mxu0 %v39
  %771 = vmatpush.msra.mxu0 %v36
  %772 = vmatpush.msra.mxu0 %v33
  %773 = vmatmul.f32.gmra.mxu0 %v734
  %v774 = vpop.f32.mrf.mxu0
  %v775 = vadd.f32 %v162, %v774
  %776 = vdwg.mxu0
  %777 = vmatpush.msra.mxu0 %v79
  %778 = vmatpush.msra.mxu0 %v76
  %779 = vmatpush.msra.mxu0 %v73
  %780 = vmatpush.msra.mxu0 %v70
  %781 = vmatpush.msra.mxu0 %v67
  %782 = vmatpush.msra.mxu0 %v64
  %783 = vmatpush.msra.mxu0 %v61
  %784 = vmatpush.msra.mxu0 %v58
  %785 = vmatpush.msra.mxu0 %v55
  %786 = vmatpush.msra.mxu0 %v52
  %787 = vmatpush.msra.mxu0 %v49
  %788 = vmatpush.msra.mxu0 %v46
  %789 = vmatpush.msra.mxu0 %v43
  %790 = vmatpush.msra.mxu0 %v40
  %791 = vmatpush.msra.mxu0 %v37
  %792 = vmatpush.msra.mxu0 %v34
  %793 = vmatmul.f32.gmra.mxu0 %v734
  %v794 = vpop.f32.mrf.mxu0
  %v795 = vadd.f32 %v163, %v794
  %796 = vdwg.mxu0
  %v797 = vadd.f32 %v736, %v755
  %v798 = vxor.u32 %v797, 2147483648
  %v799 = vmul.f32 %v798, 1.442695
  %v800 = vpow.pop %v799
  %v801 = vadd.f32 %v800, 1.0
  %v802 = vrcp.pop %v801
  %v803 = vmul.f32 %v801, %v802
  %v804 = vsub.f32 1.0, %v803
  %v805 = vmul.f32 %v802, %v804
  %v806 = vadd.f32 %v802, %v805
  %vm807 = vweird.f32 %v801
  %vm808 = vweird.f32 %v802
  %vm809 = vmor %vm807, %vm808
  %v810 = vsel %vm809, %v802, %v806
  %v811 = vand.u32 2147483647, %v801
  %vm812 = vcmp.eq.f32.partialorder %v811, 8.507059e+37
  %v813 = vand.u32 %v801, 2147483648
  %v814 = vor.u32 1.1754944e-38, %v813
  %v815 = vsel %vm812, %v814, %v810
  %v816 = vmul.f32 1.0, %v815
  %v818 = vrot.slane %v736, 2
  %v820 = vadd.f32 %v818, %v775
  %v821 = vxor.u32 %v820, 2147483648
  %v822 = vmul.f32 %v821, 1.442695
  %v823 = vpow.pop %v822
  %v824 = vadd.f32 %v823, 1.0
  %v825 = vrcp.pop %v824
  %v826 = vmul.f32 %v824, %v825
  %v827 = vsub.f32 1.0, %v826
  %v828 = vmul.f32 %v825, %v827
  %v829 = vadd.f32 %v825, %v828
  %vm830 = vweird.f32 %v824
  %vm831 = vweird.f32 %v825
  %vm832 = vmor %vm830, %vm831
  %v833 = vsel %vm832, %v825, %v829
  %v834 = vand.u32 2147483647, %v824
  %vm835 = vcmp.eq.f32.partialorder %v834, 8.507059e+37
  %v836 = vand.u32 %v824, 2147483648
  %v837 = vor.u32 1.1754944e-38, %v836
  %v838 = vsel %vm835, %v837, %v833
  %v839 = vmul.f32 1.0, %v838
  %v840 = vmul.f32 %v816, %v795
  %v841 = vrot.slane %v736, 4
  %v843 = vadd.f32 %v841, %v840
  %v844 = vtanh.pop %v843
  %v845 = vsub.f32 1.0, %v839
  %v846 = vmul.f32 %v845, %v844
  %v847 = vmul.f32 %v839, %v734
  %v848 = vadd.f32 %v846, %v847
  %s849 = scalar_lea.vmem %s0, 36
  %v850 = vld [vmem:[%s849] sm:$0x3f]
  %851 = vmatpush.msra.mxu0 %v77
  %852 = vmatpush.msra.mxu0 %v74
  %853 = vmatpush.msra.mxu0 %v71
  %854 = vmatpush.msra.mxu0 %v68
  %855 = vmatpush.msra.mxu0 %v65
  %856 = vmatpush.msra.mxu0 %v62
  %857 = vmatpush.msra.mxu0 %v59
  %858 = vmatpush.msra.mxu0 %v56
  %859 = vmatpush.msra.mxu0 %v53
  %860 = vmatpush.msra.mxu0 %v50
  %861 = vmatpush.msra.mxu0 %v47
  %862 = vmatpush.msra.mxu0 %v44
  %863 = vmatpush.msra.mxu0 %v41
  %864 = vmatpush.msra.mxu0 %v38
  %865 = vmatpush.msra.mxu0 %v35
  %866 = vmatpush.msra.mxu0 %v32
  %867 = vmatmul.f32.gmra.mxu0 %v848
  %v868 = vpop.f32.mrf.mxu0
  %v869 = vadd.f32 %v161, %v868
  %870 = vdwg.mxu0
  %871 = vmatpush.msra.mxu0 %v78
  %872 = vmatpush.msra.mxu0 %v75
  %873 = vmatpush.msra.mxu0 %v72
  %874 = vmatpush.msra.mxu0 %v69
  %875 = vmatpush.msra.mxu0 %v66
  %876 = vmatpush.msra.mxu0 %v63
  %877 = vmatpush.msra.mxu0 %v60
  %878 = vmatpush.msra.mxu0 %v57
  %879 = vmatpush.msra.mxu0 %v54
  %880 = vmatpush.msra.mxu0 %v51
  %881 = vmatpush.msra.mxu0 %v48
  %882 = vmatpush.msra.mxu0 %v45
  %883 = vmatpush.msra.mxu0 %v42
  %884 = vmatpush.msra.mxu0 %v39
  %885 = vmatpush.msra.mxu0 %v36
  %886 = vmatpush.msra.mxu0 %v33
  %887 = vmatmul.f32.gmra.mxu0 %v848
  %v888 = vpop.f32.mrf.mxu0
  %v889 = vadd.f32 %v162, %v888
  %890 = vdwg.mxu0
  %891 = vmatpush.msra.mxu0 %v79
  %892 = vmatpush.msra.mxu0 %v76
  %893 = vmatpush.msra.mxu0 %v73
  %894 = vmatpush.msra.mxu0 %v70
  %895 = vmatpush.msra.mxu0 %v67
  %896 = vmatpush.msra.mxu0 %v64
  %897 = vmatpush.msra.mxu0 %v61
  %898 = vmatpush.msra.mxu0 %v58
  %899 = vmatpush.msra.mxu0 %v55
  %900 = vmatpush.msra.mxu0 %v52
  %901 = vmatpush.msra.mxu0 %v49
  %902 = vmatpush.msra.mxu0 %v46
  %903 = vmatpush.msra.mxu0 %v43
  %904 = vmatpush.msra.mxu0 %v40
  %905 = vmatpush.msra.mxu0 %v37
  %906 = vmatpush.msra.mxu0 %v34
  %907 = vmatmul.f32.gmra.mxu0 %v848
  %v908 = vpop.f32.mrf.mxu0
  %v909 = vadd.f32 %v163, %v908
  %910 = vdwg.mxu0
  %v911 = vadd.f32 %v850, %v869
  %v912 = vxor.u32 %v911, 2147483648
  %v913 = vmul.f32 %v912, 1.442695
  %v914 = vpow.pop %v913
  %v915 = vadd.f32 %v914, 1.0
  %v916 = vrcp.pop %v915
  %v917 = vmul.f32 %v915, %v916
  %v918 = vsub.f32 1.0, %v917
  %v919 = vmul.f32 %v916, %v918
  %v920 = vadd.f32 %v916, %v919
  %vm921 = vweird.f32 %v915
  %vm922 = vweird.f32 %v916
  %vm923 = vmor %vm921, %vm922
  %v924 = vsel %vm923, %v916, %v920
  %v925 = vand.u32 2147483647, %v915
  %vm926 = vcmp.eq.f32.partialorder %v925, 8.507059e+37
  %v927 = vand.u32 %v915, 2147483648
  %v928 = vor.u32 1.1754944e-38, %v927
  %v929 = vsel %vm926, %v928, %v924
  %v930 = vmul.f32 1.0, %v929
  %v932 = vrot.slane %v850, 2
  %v934 = vadd.f32 %v932, %v889
  %v935 = vxor.u32 %v934, 2147483648
  %v936 = vmul.f32 %v935, 1.442695
  %v937 = vpow.pop %v936
  %v938 = vadd.f32 %v937, 1.0
  %v939 = vrcp.pop %v938
  %v940 = vmul.f32 %v938, %v939
  %v941 = vsub.f32 1.0, %v940
  %v942 = vmul.f32 %v939, %v941
  %v943 = vadd.f32 %v939, %v942
  %vm944 = vweird.f32 %v938
  %vm945 = vweird.f32 %v939
  %vm946 = vmor %vm944, %vm945
  %v947 = vsel %vm946, %v939, %v943
  %v948 = vand.u32 2147483647, %v938
  %vm949 = vcmp.eq.f32.partialorder %v948, 8.507059e+37
  %v950 = vand.u32 %v938, 2147483648
  %v951 = vor.u32 1.1754944e-38, %v950
  %v952 = vsel %vm949, %v951, %v947
  %v953 = vmul.f32 1.0, %v952
  %v954 = vmul.f32 %v930, %v909
  %v955 = vrot.slane %v850, 4
  %v957 = vadd.f32 %v955, %v954
  %v958 = vtanh.pop %v957
  %v959 = vsub.f32 1.0, %v953
  %v960 = vmul.f32 %v959, %v958
  %v961 = vmul.f32 %v953, %v848
  %v962 = vadd.f32 %v960, %v961
  %s963 = scalar_lea.vmem %s0, 42
  %v964 = vld [vmem:[%s963] sm:$0x3f]
  %965 = vmatpush.msra.mxu0 %v77
  %966 = vmatpush.msra.mxu0 %v74
  %967 = vmatpush.msra.mxu0 %v71
  %968 = vmatpush.msra.mxu0 %v68
  %969 = vmatpush.msra.mxu0 %v65
  %970 = vmatpush.msra.mxu0 %v62
  %971 = vmatpush.msra.mxu0 %v59
  %972 = vmatpush.msra.mxu0 %v56
  %973 = vmatpush.msra.mxu0 %v53
  %974 = vmatpush.msra.mxu0 %v50
  %975 = vmatpush.msra.mxu0 %v47
  %976 = vmatpush.msra.mxu0 %v44
  %977 = vmatpush.msra.mxu0 %v41
  %978 = vmatpush.msra.mxu0 %v38
  %979 = vmatpush.msra.mxu0 %v35
  %980 = vmatpush.msra.mxu0 %v32
  %981 = vmatmul.f32.gmra.mxu0 %v962
  %v982 = vpop.f32.mrf.mxu0
  %v983 = vadd.f32 %v161, %v982
  %984 = vdwg.mxu0
  %985 = vmatpush.msra.mxu0 %v78
  %986 = vmatpush.msra.mxu0 %v75
  %987 = vmatpush.msra.mxu0 %v72
  %988 = vmatpush.msra.mxu0 %v69
  %989 = vmatpush.msra.mxu0 %v66
  %990 = vmatpush.msra.mxu0 %v63
  %991 = vmatpush.msra.mxu0 %v60
  %992 = vmatpush.msra.mxu0 %v57
  %993 = vmatpush.msra.mxu0 %v54
  %994 = vmatpush.msra.mxu0 %v51
  %995 = vmatpush.msra.mxu0 %v48
  %996 = vmatpush.msra.mxu0 %v45
  %997 = vmatpush.msra.mxu0 %v42
  %998 = vmatpush.msra.mxu0 %v39
  %999 = vmatpush.msra.mxu0 %v36
  %1000 = vmatpush.msra.mxu0 %v33
  %1001 = vmatmul.f32.gmra.mxu0 %v962
  %v1002 = vpop.f32.mrf.mxu0
  %v1003 = vadd.f32 %v162, %v1002
  %1004 = vdwg.mxu0
  %1005 = vmatpush.msra.mxu0 %v79
  %1006 = vmatpush.msra.mxu0 %v76
  %1007 = vmatpush.msra.mxu0 %v73
  %1008 = vmatpush.msra.mxu0 %v70
  %1009 = vmatpush.msra.mxu0 %v67
  %1010 = vmatpush.msra.mxu0 %v64
  %1011 = vmatpush.msra.mxu0 %v61
  %1012 = vmatpush.msra.mxu0 %v58
  %1013 = vmatpush.msra.mxu0 %v55
  %1014 = vmatpush.msra.mxu0 %v52
  %1015 = vmatpush.msra.mxu0 %v49
  %1016 = vmatpush.msra.mxu0 %v46
  %1017 = vmatpush.msra.mxu0 %v43
  %1018 = vmatpush.msra.mxu0 %v40
  %1019 = vmatpush.msra.mxu0 %v37
  %1020 = vmatpush.msra.mxu0 %v34
  %1021 = vmatmul.f32.gmra.mxu0 %v962
  %v1022 = vpop.f32.mrf.mxu0
  %v1023 = vadd.f32 %v163, %v1022
  %1024 = vdwg.mxu0
  %v1025 = vadd.f32 %v964, %v983
  %v1026 = vxor.u32 %v1025, 2147483648
  %v1027 = vmul.f32 %v1026, 1.442695
  %v1028 = vpow.pop %v1027
  %v1029 = vadd.f32 %v1028, 1.0
  %v1030 = vrcp.pop %v1029
  %v1031 = vmul.f32 %v1029, %v1030
  %v1032 = vsub.f32 1.0, %v1031
  %v1033 = vmul.f32 %v1030, %v1032
  %v1034 = vadd.f32 %v1030, %v1033
  %vm1035 = vweird.f32 %v1029
  %vm1036 = vweird.f32 %v1030
  %vm1037 = vmor %vm1035, %vm1036
  %v1038 = vsel %vm1037, %v1030, %v1034
  %v1039 = vand.u32 2147483647, %v1029
  %vm1040 = vcmp.eq.f32.partialorder %v1039, 8.507059e+37
  %v1041 = vand.u32 %v1029, 2147483648
  %v1042 = vor.u32 1.1754944e-38, %v1041
  %v1043 = vsel %vm1040, %v1042, %v1038
  %v1044 = vmul.f32 1.0, %v1043
  %v1046 = vrot.slane %v964, 2
  %v1048 = vadd.f32 %v1046, %v1003
  %v1049 = vxor.u32 %v1048, 2147483648
  %v1050 = vmul.f32 %v1049, 1.442695
  %v1051 = vpow.pop %v1050
  %v1052 = vadd.f32 %v1051, 1.0
  %v1053 = vrcp.pop %v1052
  %v1054 = vmul.f32 %v1052, %v1053
  %v1055 = vsub.f32 1.0, %v1054
  %v1056 = vmul.f32 %v1053, %v1055
  %v1057 = vadd.f32 %v1053, %v1056
  %vm1058 = vweird.f32 %v1052
  %vm1059 = vweird.f32 %v1053
  %vm1060 = vmor %vm1058, %vm1059
  %v1061 = vsel %vm1060, %v1053, %v1057
  %v1062 = vand.u32 2147483647, %v1052
  %vm1063 = vcmp.eq.f32.partialorder %v1062, 8.507059e+37
  %v1064 = vand.u32 %v1052, 2147483648
  %v1065 = vor.u32 1.1754944e-38, %v1064
  %v1066 = vsel %vm1063, %v1065, %v1061
  %v1067 = vmul.f32 1.0, %v1066
  %v1068 = vmul.f32 %v1044, %v1023
  %v1069 = vrot.slane %v964, 4
  %v1071 = vadd.f32 %v1069, %v1068
  %v1072 = vtanh.pop %v1071
  %v1073 = vsub.f32 1.0, %v1067
  %v1074 = vmul.f32 %v1073, %v1072
  %v1075 = vmul.f32 %v1067, %v962
  %v1076 = vadd.f32 %v1074, %v1075
  %v1077 = vlaneseq
  %v1078 = vand.u32 %v1077, 127
  %v1079 = vld [vmem:[%s3] sm:$0x3]
  %vm1080 = vcmask 261120
  %v1082 = vsel %vm1080, %v1079, 0
  %1084 = vmatpush.msra.mxu0 0.0
  %1085 = vmatpush.msra.mxu0 0.0
  %1086 = vmatpush.msra.mxu0 0.0
  %1087 = vmatpush.msra.mxu0 0.0
  %1088 = vmatpush.msra.mxu0 0.0
  %1089 = vmatpush.msra.mxu0 0.0
  %1090 = vmatpush.msra.mxu0 0.0
  %1091 = vmatpush.msra.mxu0 0.0
  %1092 = vmatpush.msra.mxu0 0.0
  %1093 = vmatpush.msra.mxu0 0.0
  %1094 = vmatpush.msra.mxu0 0.0
  %1095 = vmatpush.msra.mxu0 0.0
  %1096 = vmatpush.msra.mxu0 %v90
  %1097 = vmatpush.msra.mxu0 %v87
  %1098 = vmatpush.msra.mxu0 %v84
  %1099 = vmatpush.msra.mxu0 %v81
  %1100 = vmatmul.f32.gmra.mxu0 %v1082
  %v1101 = vpop.f32.mrf.mxu0
  %v1102 = vadd.f32 0.0, %v1101
  %1103 = vdwg.mxu0
  %1104 = vmatpush.msra.mxu0 0.0
  %1105 = vmatpush.msra.mxu0 0.0
  %1106 = vmatpush.msra.mxu0 0.0
  %1107 = vmatpush.msra.mxu0 0.0
  %1108 = vmatpush.msra.mxu0 0.0
  %1109 = vmatpush.msra.mxu0 0.0
  %1110 = vmatpush.msra.mxu0 0.0
  %1111 = vmatpush.msra.mxu0 0.0
  %1112 = vmatpush.msra.mxu0 0.0
  %1113 = vmatpush.msra.mxu0 0.0
  %1114 = vmatpush.msra.mxu0 0.0
  %1115 = vmatpush.msra.mxu0 0.0
  %1116 = vmatpush.msra.mxu0 %v91
  %1117 = vmatpush.msra.mxu0 %v88
  %1118 = vmatpush.msra.mxu0 %v85
  %1119 = vmatpush.msra.mxu0 %v82
  %1120 = vmatmul.f32.gmra.mxu0 %v1082
  %v1121 = vpop.f32.mrf.mxu0
  %v1122 = vadd.f32 0.0, %v1121
  %1123 = vdwg.mxu0
  %1124 = vmatpush.msra.mxu0 0.0
  %1125 = vmatpush.msra.mxu0 0.0
  %1126 = vmatpush.msra.mxu0 0.0
  %1127 = vmatpush.msra.mxu0 0.0
  %1128 = vmatpush.msra.mxu0 0.0
  %1129 = vmatpush.msra.mxu0 0.0
  %1130 = vmatpush.msra.mxu0 0.0
  %1131 = vmatpush.msra.mxu0 0.0
  %1132 = vmatpush.msra.mxu0 0.0
  %1133 = vmatpush.msra.mxu0 0.0
  %1134 = vmatpush.msra.mxu0 0.0
  %1135 = vmatpush.msra.mxu0 0.0
  %1136 = vmatpush.msra.mxu0 %v92
  %1137 = vmatpush.msra.mxu0 %v89
  %1138 = vmatpush.msra.mxu0 %v86
  %1139 = vmatpush.msra.mxu0 %v83
  %1140 = vmatmul.f32.gmra.mxu0 %v1082
  %v1141 = vpop.f32.mrf.mxu0
  %v1142 = vadd.f32 0.0, %v1141
  %1143 = vdwg.mxu0
  %v1145 = vperm.slane %v141, 0
  %v1146 = vperm.slane %v141, 1
  %v1147 = vperm.slane %v141, 2
  %1151 = vmatpush.msra.mxu0 %v138
  %1152 = vmatpush.msra.mxu0 %v135
  %1153 = vmatpush.msra.mxu0 %v132
  %1154 = vmatpush.msra.mxu0 %v129
  %1155 = vmatpush.msra.mxu0 %v126
  %1156 = vmatpush.msra.mxu0 %v123
  %1157 = vmatpush.msra.mxu0 %v120
  %1158 = vmatpush.msra.mxu0 %v117
  %1159 = vmatpush.msra.mxu0 %v114
  %1160 = vmatpush.msra.mxu0 %v111
  %1161 = vmatpush.msra.mxu0 %v108
  %1162 = vmatpush.msra.mxu0 %v105
  %1163 = vmatpush.msra.mxu0 %v102
  %1164 = vmatpush.msra.mxu0 %v99
  %1165 = vmatpush.msra.mxu0 %v96
  %1166 = vmatpush.msra.mxu0 %v93
  %1167 = vmatmul.f32.gmra.mxu0 %v1076
  %v1168 = vpop.f32.mrf.mxu0
  %v1169 = vadd.f32 %v1145, %v1168
  %1170 = vdwg.mxu0
  %1171 = vmatpush.msra.mxu0 %v139
  %1172 = vmatpush.msra.mxu0 %v136
  %1173 = vmatpush.msra.mxu0 %v133
  %1174 = vmatpush.msra.mxu0 %v130
  %1175 = vmatpush.msra.mxu0 %v127
  %1176 = vmatpush.msra.mxu0 %v124
  %1177 = vmatpush.msra.mxu0 %v121
  %1178 = vmatpush.msra.mxu0 %v118
  %1179 = vmatpush.msra.mxu0 %v115
  %1180 = vmatpush.msra.mxu0 %v112
  %1181 = vmatpush.msra.mxu0 %v109
  %1182 = vmatpush.msra.mxu0 %v106
  %1183 = vmatpush.msra.mxu0 %v103
  %1184 = vmatpush.msra.mxu0 %v100
  %1185 = vmatpush.msra.mxu0 %v97
  %1186 = vmatpush.msra.mxu0 %v94
  %1187 = vmatmul.f32.gmra.mxu0 %v1076
  %v1188 = vpop.f32.mrf.mxu0
  %v1189 = vadd.f32 %v1146, %v1188
  %1190 = vdwg.mxu0
  %1191 = vmatpush.msra.mxu0 %v140
  %1192 = vmatpush.msra.mxu0 %v137
  %1193 = vmatpush.msra.mxu0 %v134
  %1194 = vmatpush.msra.mxu0 %v131
  %1195 = vmatpush.msra.mxu0 %v128
  %1196 = vmatpush.msra.mxu0 %v125
  %1197 = vmatpush.msra.mxu0 %v122
  %1198 = vmatpush.msra.mxu0 %v119
  %1199 = vmatpush.msra.mxu0 %v116
  %1200 = vmatpush.msra.mxu0 %v113
  %1201 = vmatpush.msra.mxu0 %v110
  %1202 = vmatpush.msra.mxu0 %v107
  %1203 = vmatpush.msra.mxu0 %v104
  %1204 = vmatpush.msra.mxu0 %v101
  %1205 = vmatpush.msra.mxu0 %v98
  %1206 = vmatpush.msra.mxu0 %v95
  %1207 = vmatmul.f32.gmra.mxu0 %v1076
  %v1208 = vpop.f32.mrf.mxu0
  %v1209 = vadd.f32 %v1147, %v1208
  %1210 = vdwg.mxu0
  %v1211 = vadd.f32 %v1102, %v1169
  %v1212 = vxor.u32 %v1211, 2147483648
  %v1213 = vmul.f32 %v1212, 1.442695
  %v1214 = vpow.pop %v1213
  %v1215 = vadd.f32 %v1214, 1.0
  %v1216 = vrcp.pop %v1215
  %v1217 = vmul.f32 %v1215, %v1216
  %v1218 = vsub.f32 1.0, %v1217
  %v1219 = vmul.f32 %v1216, %v1218
  %v1220 = vadd.f32 %v1216, %v1219
  %vm1221 = vweird.f32 %v1215
  %vm1222 = vweird.f32 %v1216
  %vm1223 = vmor %vm1221, %vm1222
  %v1224 = vsel %vm1223, %v1216, %v1220
  %v1225 = vand.u32 2147483647, %v1215
  %vm1226 = vcmp.eq.f32.partialorder %v1225, 8.507059e+37
  %v1227 = vand.u32 %v1215, 2147483648
  %v1228 = vor.u32 1.1754944e-38, %v1227
  %v1229 = vsel %vm1226, %v1228, %v1224
  %v1230 = vmul.f32 1.0, %v1229
  %v1231 = vadd.f32 %v1122, %v1189
  %v1232 = vxor.u32 %v1231, 2147483648
  %v1233 = vmul.f32 %v1232, 1.442695
  %v1234 = vpow.pop %v1233
  %v1235 = vadd.f32 %v1234, 1.0
  %v1236 = vrcp.pop %v1235
  %v1237 = vmul.f32 %v1235, %v1236
  %v1238 = vsub.f32 1.0, %v1237
  %v1239 = vmul.f32 %v1236, %v1238
  %v1240 = vadd.f32 %v1236, %v1239
  %vm1241 = vweird.f32 %v1235
  %vm1242 = vweird.f32 %v1236
  %vm1243 = vmor %vm1241, %vm1242
  %v1244 = vsel %vm1243, %v1236, %v1240
  %v1245 = vand.u32 2147483647, %v1235
  %vm1246 = vcmp.eq.f32.partialorder %v1245, 8.507059e+37
  %v1247 = vand.u32 %v1235, 2147483648
  %v1248 = vor.u32 1.1754944e-38, %v1247
  %v1249 = vsel %vm1246, %v1248, %v1244
  %v1250 = vmul.f32 1.0, %v1249
  %v1251 = vmul.f32 %v1230, %v1209
  %v1252 = vadd.f32 %v1142, %v1251
  %v1253 = vtanh.pop %v1252
  %v1254 = vsub.f32 1.0, %v1250
  %v1255 = vmul.f32 %v1254, %v1253
  %v1256 = vmul.f32 %v1250, %v1076
  %v1257 = vadd.f32 %v1255, %v1256
  %v1259 = vperm.slane %v158, 0
  %1261 = vmatpush.msra.mxu0 %v157
  %1262 = vmatpush.msra.mxu0 %v156
  %1263 = vmatpush.msra.mxu0 %v155
  %1264 = vmatpush.msra.mxu0 %v154
  %1265 = vmatpush.msra.mxu0 %v153
  %1266 = vmatpush.msra.mxu0 %v152
  %1267 = vmatpush.msra.mxu0 %v151
  %1268 = vmatpush.msra.mxu0 %v150
  %1269 = vmatpush.msra.mxu0 %v149
  %1270 = vmatpush.msra.mxu0 %v148
  %1271 = vmatpush.msra.mxu0 %v147
  %1272 = vmatpush.msra.mxu0 %v146
  %1273 = vmatpush.msra.mxu0 %v145
  %1274 = vmatpush.msra.mxu0 %v144
  %1275 = vmatpush.msra.mxu0 %v143
  %1276 = vmatpush.msra.mxu0 %v142
  %1277 = vmatmul.f32.gmra.mxu0 %v1257
  %v1278 = vpop.f32.mrf.mxu0
  %v1279 = vadd.f32 %v1259, %v1278
  %1280 = vdwg.mxu0
  %vm1281 = vcmask 254976
  %v1282 = vsel %vm1281, %v1279, -inf
  %1283 = vmax.xlane.f32.xlu0 %v1282
  %v1284 = vpop.xlane.xlu0 %1283
  %v1285 = vsub.f32 %v1279, %v1284
  %v1286 = vmul.f32 %v1285, 1.442695
  %v1287 = vpow.pop %v1286
  %v1288 = vsel %vm1281, %v1287, 0.0
  %1289 = vadd.xlane.f32.xlu0 %v1288
  %v1290 = vpop.xlane.xlu0 %1289
  %v1291 = vlog2.pop %v1290
  %v1292 = vmul.f32 %v1291, 0.6931472
  %v1293 = vsub.f32 %v1285, %v1292
  %1294 = vst.msk [vmem:[%s9] sm:$0x3] %vm1281, %v1293
  %vm1295 = vcmp.eq.f32.partialorder %v1279, %v1284
  %v1296 = vsel %vm1295, %v1078, 32
  %v1297 = vsel %vm1281, %v1296, 2147483647
  %v1298 = vand.u32 %v1297, 65535
  %v1299 = vshra.s32 %v1297, 16
  %v1300 = vcvt.s32.f32 %v1298
  %v1301 = vcvt.s32.f32 %v1299
  %1302 = vmin.xlane.f32.xlu0 %v1301
  %v1303 = vpop.xlane.xlu0 %1302
  %vm1304 = vcmp.eq.f32.partialorder %v1301, %v1303
  %v1305 = vsel %vm1304, %v1300, inf
  %1306 = vmin.xlane.f32.xlu0 %v1305
  %v1307 = vpop.xlane.xlu0 %1306
  %v1308 = vcvt.f32.s32 %v1307
  %v1309 = vcvt.f32.s32 %v1303
  %v1310 = vshll.u32 %v1309, 16
  %v1311 = vadd.s32 %v1310, %v1308
  %vm1312 = vcmp.eq.s32.totalorder %v1078, %v1311
  %v1313 = vsel %vm1312, 1, 0
  %v1314 = vcvt.s32.f32 %v1313
  %v1316 = vsel %vm1080, %v1314, 0
  %1318 = vmatpush.msra.mxu0 0.0
  %1319 = vmatpush.msra.mxu0 0.0
  %1320 = vmatpush.msra.mxu0 0.0
  %1321 = vmatpush.msra.mxu0 0.0
  %1322 = vmatpush.msra.mxu0 0.0
  %1323 = vmatpush.msra.mxu0 0.0
  %1324 = vmatpush.msra.mxu0 0.0
  %1325 = vmatpush.msra.mxu0 0.0
  %1326 = vmatpush.msra.mxu0 0.0
  %1327 = vmatpush.msra.mxu0 0.0
  %1328 = vmatpush.msra.mxu0 0.0
  %1329 = vmatpush.msra.mxu0 0.0
  %1330 = vmatpush.msra.mxu0 %v90
  %1331 = vmatpush.msra.mxu0 %v87
  %1332 = vmatpush.msra.mxu0 %v84
  %1333 = vmatpush.msra.mxu0 %v81
  %1334 = vmatmul.f32.gmra.mxu0 %v1316
  %v1335 = vpop.f32.mrf.mxu0
  %v1336 = vadd.f32 0.0, %v1335
  %1337 = vdwg.mxu0
  %1338 = vmatpush.msra.mxu0 0.0
  %1339 = vmatpush.msra.mxu0 0.0
  %1340 = vmatpush.msra.mxu0 0.0
  %1341 = vmatpush.msra.mxu0 0.0
  %1342 = vmatpush.msra.mxu0 0.0
  %1343 = vmatpush.msra.mxu0 0.0
  %1344 = vmatpush.msra.mxu0 0.0
  %1345 = vmatpush.msra.mxu0 0.0
  %1346 = vmatpush.msra.mxu0 0.0
  %1347 = vmatpush.msra.mxu0 0.0
  %1348 = vmatpush.msra.mxu0 0.0
  %1349 = vmatpush.msra.mxu0 0.0
  %1350 = vmatpush.msra.mxu0 %v91
  %1351 = vmatpush.msra.mxu0 %v88
  %1352 = vmatpush.msra.mxu0 %v85
  %1353 = vmatpush.msra.mxu0 %v82
  %1354 = vmatmul.f32.gmra.mxu0 %v1316
  %v1355 = vpop.f32.mrf.mxu0
  %v1356 = vadd.f32 0.0, %v1355
  %1357 = vdwg.mxu0
  %1358 = vmatpush.msra.mxu0 0.0
  %1359 = vmatpush.msra.mxu0 0.0
  %1360 = vmatpush.msra.mxu0 0.0
  %1361 = vmatpush.msra.mxu0 0.0
  %1362 = vmatpush.msra.mxu0 0.0
  %1363 = vmatpush.msra.mxu0 0.0
  %1364 = vmatpush.msra.mxu0 0.0
  %1365 = vmatpush.msra.mxu0 0.0
  %1366 = vmatpush.msra.mxu0 0.0
  %1367 = vmatpush.msra.mxu0 0.0
  %1368 = vmatpush.msra.mxu0 0.0
  %1369 = vmatpush.msra.mxu0 0.0
  %1370 = vmatpush.msra.mxu0 %v92
  %1371 = vmatpush.msra.mxu0 %v89
  %1372 = vmatpush.msra.mxu0 %v86
  %1373 = vmatpush.msra.mxu0 %v83
  %1374 = vmatmul.f32.gmra.mxu0 %v1316
  %v1375 = vpop.f32.mrf.mxu0
  %v1376 = vadd.f32 0.0, %v1375
  %1377 = vdwg.mxu0
  %1378 = vmatpush.msra.mxu0 %v138
  %1379 = vmatpush.msra.mxu0 %v135
  %1380 = vmatpush.msra.mxu0 %v132
  %1381 = vmatpush.msra.mxu0 %v129
  %1382 = vmatpush.msra.mxu0 %v126
  %1383 = vmatpush.msra.mxu0 %v123
  %1384 = vmatpush.msra.mxu0 %v120
  %1385 = vmatpush.msra.mxu0 %v117
  %1386 = vmatpush.msra.mxu0 %v114
  %1387 = vmatpush.msra.mxu0 %v111
  %1388 = vmatpush.msra.mxu0 %v108
  %1389 = vmatpush.msra.mxu0 %v105
  %1390 = vmatpush.msra.mxu0 %v102
  %1391 = vmatpush.msra.mxu0 %v99
  %1392 = vmatpush.msra.mxu0 %v96
  %1393 = vmatpush.msra.mxu0 %v93
  %1394 = vmatmul.f32.gmra.mxu0 %v1257
  %v1395 = vpop.f32.mrf.mxu0
  %v1396 = vadd.f32 %v1145, %v1395
  %1397 = vdwg.mxu0
  %1398 = vmatpush.msra.mxu0 %v139
  %1399 = vmatpush.msra.mxu0 %v136
  %1400 = vmatpush.msra.mxu0 %v133
  %1401 = vmatpush.msra.mxu0 %v130
  %1402 = vmatpush.msra.mxu0 %v127
  %1403 = vmatpush.msra.mxu0 %v124
  %1404 = vmatpush.msra.mxu0 %v121
  %1405 = vmatpush.msra.mxu0 %v118
  %1406 = vmatpush.msra.mxu0 %v115
  %1407 = vmatpush.msra.mxu0 %v112
  %1408 = vmatpush.msra.mxu0 %v109
  %1409 = vmatpush.msra.mxu0 %v106
  %1410 = vmatpush.msra.mxu0 %v103
  %1411 = vmatpush.msra.mxu0 %v100
  %1412 = vmatpush.msra.mxu0 %v97
  %1413 = vmatpush.msra.mxu0 %v94
  %1414 = vmatmul.f32.gmra.mxu0 %v1257
  %v1415 = vpop.f32.mrf.mxu0
  %v1416 = vadd.f32 %v1146, %v1415
  %1417 = vdwg.mxu0
  %1418 = vmatpush.msra.mxu0 %v140
  %1419 = vmatpush.msra.mxu0 %v137
  %1420 = vmatpush.msra.mxu0 %v134
  %1421 = vmatpush.msra.mxu0 %v131
  %1422 = vmatpush.msra.mxu0 %v128
  %1423 = vmatpush.msra.mxu0 %v125
  %1424 = vmatpush.msra.mxu0 %v122
  %1425 = vmatpush.msra.mxu0 %v119
  %1426 = vmatpush.msra.mxu0 %v116
  %1427 = vmatpush.msra.mxu0 %v113
  %1428 = vmatpush.msra.mxu0 %v110
  %1429 = vmatpush.msra.mxu0 %v107
  %1430 = vmatpush.msra.mxu0 %v104
  %1431 = vmatpush.msra.mxu0 %v101
  %1432 = vmatpush.msra.mxu0 %v98
  %1433 = vmatpush.msra.mxu0 %v95
  %1434 = vmatmul.f32.gmra.mxu0 %v1257
  %v1435 = vpop.f32.mrf.mxu0
  %v1436 = vadd.f32 %v1147, %v1435
  %1437 = vdwg.mxu0
  %v1438 = vadd.f32 %v1336, %v1396
  %v1439 = vxor.u32 %v1438, 2147483648
  %v1440 = vmul.f32 %v1439, 1.442695
  %v1441 = vpow.pop %v1440
  %v1442 = vadd.f32 %v1441, 1.0
  %v1443 = vrcp.pop %v1442
  %v1444 = vmul.f32 %v1442, %v1443
  %v1445 = vsub.f32 1.0, %v1444
  %v1446 = vmul.f32 %v1443, %v1445
  %v1447 = vadd.f32 %v1443, %v1446
  %vm1448 = vweird.f32 %v1442
  %vm1449 = vweird.f32 %v1443
  %vm1450 = vmor %vm1448, %vm1449
  %v1451 = vsel %vm1450, %v1443, %v1447
  %v1452 = vand.u32 2147483647, %v1442
  %vm1453 = vcmp.eq.f32.partialorder %v1452, 8.507059e+37
  %v1454 = vand.u32 %v1442, 2147483648
  %v1455 = vor.u32 1.1754944e-38, %v1454
  %v1456 = vsel %vm1453, %v1455, %v1451
  %v1457 = vmul.f32 1.0, %v1456
  %v1458 = vadd.f32 %v1356, %v1416
  %v1459 = vxor.u32 %v1458, 2147483648
  %v1460 = vmul.f32 %v1459, 1.442695
  %v1461 = vpow.pop %v1460
  %v1462 = vadd.f32 %v1461, 1.0
  %v1463 = vrcp.pop %v1462
  %v1464 = vmul.f32 %v1462, %v1463
  %v1465 = vsub.f32 1.0, %v1464
  %v1466 = vmul.f32 %v1463, %v1465
  %v1467 = vadd.f32 %v1463, %v1466
  %vm1468 = vweird.f32 %v1462
  %vm1469 = vweird.f32 %v1463
  %vm1470 = vmor %vm1468, %vm1469
  %v1471 = vsel %vm1470, %v1463, %v1467
  %v1472 = vand.u32 2147483647, %v1462
  %vm1473 = vcmp.eq.f32.partialorder %v1472, 8.507059e+37
  %v1474 = vand.u32 %v1462, 2147483648
  %v1475 = vor.u32 1.1754944e-38, %v1474
  %v1476 = vsel %vm1473, %v1475, %v1471
  %v1477 = vmul.f32 1.0, %v1476
  %v1478 = vmul.f32 %v1457, %v1436
  %v1479 = vadd.f32 %v1376, %v1478
  %v1480 = vtanh.pop %v1479
  %v1481 = vsub.f32 1.0, %v1477
  %v1482 = vmul.f32 %v1481, %v1480
  %v1483 = vmul.f32 %v1477, %v1257
  %v1484 = vadd.f32 %v1482, %v1483
  %1485 = vmatpush.msra.mxu0 %v157
  %1486 = vmatpush.msra.mxu0 %v156
  %1487 = vmatpush.msra.mxu0 %v155
  %1488 = vmatpush.msra.mxu0 %v154
  %1489 = vmatpush.msra.mxu0 %v153
  %1490 = vmatpush.msra.mxu0 %v152
  %1491 = vmatpush.msra.mxu0 %v151
  %1492 = vmatpush.msra.mxu0 %v150
  %1493 = vmatpush.msra.mxu0 %v149
  %1494 = vmatpush.msra.mxu0 %v148
  %1495 = vmatpush.msra.mxu0 %v147
  %1496 = vmatpush.msra.mxu0 %v146
  %1497 = vmatpush.msra.mxu0 %v145
  %1498 = vmatpush.msra.mxu0 %v144
  %1499 = vmatpush.msra.mxu0 %v143
  %1500 = vmatpush.msra.mxu0 %v142
  %1501 = vmatmul.f32.gmra.mxu0 %v1484
  %v1502 = vpop.f32.mrf.mxu0
  %v1503 = vadd.f32 %v1259, %v1502
  %1504 = vdwg.mxu0
  %v1505 = vsel %vm1281, %v1503, -inf
  %1506 = vmax.xlane.f32.xlu0 %v1505
  %v1507 = vpop.xlane.xlu0 %1506
  %v1508 = vsub.f32 %v1503, %v1507
  %v1509 = vmul.f32 %v1508, 1.442695
  %v1510 = vpow.pop %v1509
  %v1511 = vsel %vm1281, %v1510, 0.0
  %1512 = vadd.xlane.f32.xlu0 %v1511
  %v1513 = vpop.xlane.xlu0 %1512
  %v1514 = vlog2.pop %v1513
  %v1515 = vmul.f32 %v1514, 0.6931472
  %v1516 = vsub.f32 %v1508, %v1515
  %s1517 = scalar_lea.vmem %s9, 2
  %1518 = vst.msk [vmem:[%s1517] sm:$0x3] %vm1281, %v1516
  %vm1519 = vcmp.eq.f32.partialorder %v1503, %v1507
  %v1520 = vsel %vm1519, %v1078, 32
  %v1521 = vsel %vm1281, %v1520, 2147483647
  %v1522 = vand.u32 %v1521, 65535
  %v1523 = vshra.s32 %v1521, 16
  %v1524 = vcvt.s32.f32 %v1522
  %v1525 = vcvt.s32.f32 %v1523
  %1526 = vmin.xlane.f32.xlu0 %v1525
  %v1527 = vpop.xlane.xlu0 %1526
  %vm1528 = vcmp.eq.f32.partialorder %v1525, %v1527
  %v1529 = vsel %vm1528, %v1524, inf
  %1530 = vmin.xlane.f32.xlu0 %v1529
  %v1531 = vpop.xlane.xlu0 %1530
  %v1532 = vcvt.f32.s32 %v1531
  %v1533 = vcvt.f32.s32 %v1527
  %v1534 = vshll.u32 %v1533, 16
  %v1535 = vadd.s32 %v1534, %v1532
  %vm1536 = vcmp.eq.s32.totalorder %v1078, %v1535
  %v1537 = vsel %vm1536, 1, 0
  %v1538 = vcvt.s32.f32 %v1537
  %v1540 = vsel %vm1080, %v1538, 0
  %1542 = vmatpush.msra.mxu0 0.0
  %1543 = vmatpush.msra.mxu0 0.0
  %1544 = vmatpush.msra.mxu0 0.0
  %1545 = vmatpush.msra.mxu0 0.0
  %1546 = vmatpush.msra.mxu0 0.0
  %1547 = vmatpush.msra.mxu0 0.0
  %1548 = vmatpush.msra.mxu0 0.0
  %1549 = vmatpush.msra.mxu0 0.0
  %1550 = vmatpush.msra.mxu0 0.0
  %1551 = vmatpush.msra.mxu0 0.0
  %1552 = vmatpush.msra.mxu0 0.0
  %1553 = vmatpush.msra.mxu0 0.0
  %1554 = vmatpush.msra.mxu0 %v90
  %1555 = vmatpush.msra.mxu0 %v87
  %1556 = vmatpush.msra.mxu0 %v84
  %1557 = vmatpush.msra.mxu0 %v81
  %1558 = vmatmul.f32.gmra.mxu0 %v1540
  %v1559 = vpop.f32.mrf.mxu0
  %v1560 = vadd.f32 0.0, %v1559
  %1561 = vdwg.mxu0
  %1562 = vmatpush.msra.mxu0 0.0
  %1563 = vmatpush.msra.mxu0 0.0
  %1564 = vmatpush.msra.mxu0 0.0
  %1565 = vmatpush.msra.mxu0 0.0
  %1566 = vmatpush.msra.mxu0 0.0
  %1567 = vmatpush.msra.mxu0 0.0
  %1568 = vmatpush.msra.mxu0 0.0
  %1569 = vmatpush.msra.mxu0 0.0
  %1570 = vmatpush.msra.mxu0 0.0
  %1571 = vmatpush.msra.mxu0 0.0
  %1572 = vmatpush.msra.mxu0 0.0
  %1573 = vmatpush.msra.mxu0 0.0
  %1574 = vmatpush.msra.mxu0 %v91
  %1575 = vmatpush.msra.mxu0 %v88
  %1576 = vmatpush.msra.mxu0 %v85
  %1577 = vmatpush.msra.mxu0 %v82
  %1578 = vmatmul.f32.gmra.mxu0 %v1540
  %v1579 = vpop.f32.mrf.mxu0
  %v1580 = vadd.f32 0.0, %v1579
  %1581 = vdwg.mxu0
  %1582 = vmatpush.msra.mxu0 0.0
  %1583 = vmatpush.msra.mxu0 0.0
  %1584 = vmatpush.msra.mxu0 0.0
  %1585 = vmatpush.msra.mxu0 0.0
  %1586 = vmatpush.msra.mxu0 0.0
  %1587 = vmatpush.msra.mxu0 0.0
  %1588 = vmatpush.msra.mxu0 0.0
  %1589 = vmatpush.msra.mxu0 0.0
  %1590 = vmatpush.msra.mxu0 0.0
  %1591 = vmatpush.msra.mxu0 0.0
  %1592 = vmatpush.msra.mxu0 0.0
  %1593 = vmatpush.msra.mxu0 0.0
  %1594 = vmatpush.msra.mxu0 %v92
  %1595 = vmatpush.msra.mxu0 %v89
  %1596 = vmatpush.msra.mxu0 %v86
  %1597 = vmatpush.msra.mxu0 %v83
  %1598 = vmatmul.f32.gmra.mxu0 %v1540
  %v1599 = vpop.f32.mrf.mxu0
  %v1600 = vadd.f32 0.0, %v1599
  %1601 = vdwg.mxu0
  %1602 = vmatpush.msra.mxu0 %v138
  %1603 = vmatpush.msra.mxu0 %v135
  %1604 = vmatpush.msra.mxu0 %v132
  %1605 = vmatpush.msra.mxu0 %v129
  %1606 = vmatpush.msra.mxu0 %v126
  %1607 = vmatpush.msra.mxu0 %v123
  %1608 = vmatpush.msra.mxu0 %v120
  %1609 = vmatpush.msra.mxu0 %v117
  %1610 = vmatpush.msra.mxu0 %v114
  %1611 = vmatpush.msra.mxu0 %v111
  %1612 = vmatpush.msra.mxu0 %v108
  %1613 = vmatpush.msra.mxu0 %v105
  %1614 = vmatpush.msra.mxu0 %v102
  %1615 = vmatpush.msra.mxu0 %v99
  %1616 = vmatpush.msra.mxu0 %v96
  %1617 = vmatpush.msra.mxu0 %v93
  %1618 = vmatmul.f32.gmra.mxu0 %v1484
  %v1619 = vpop.f32.mrf.mxu0
  %v1620 = vadd.f32 %v1145, %v1619
  %1621 = vdwg.mxu0
  %1622 = vmatpush.msra.mxu0 %v139
  %1623 = vmatpush.msra.mxu0 %v136
  %1624 = vmatpush.msra.mxu0 %v133
  %1625 = vmatpush.msra.mxu0 %v130
  %1626 = vmatpush.msra.mxu0 %v127
  %1627 = vmatpush.msra.mxu0 %v124
  %1628 = vmatpush.msra.mxu0 %v121
  %1629 = vmatpush.msra.mxu0 %v118
  %1630 = vmatpush.msra.mxu0 %v115
  %1631 = vmatpush.msra.mxu0 %v112
  %1632 = vmatpush.msra.mxu0 %v109
  %1633 = vmatpush.msra.mxu0 %v106
  %1634 = vmatpush.msra.mxu0 %v103
  %1635 = vmatpush.msra.mxu0 %v100
  %1636 = vmatpush.msra.mxu0 %v97
  %1637 = vmatpush.msra.mxu0 %v94
  %1638 = vmatmul.f32.gmra.mxu0 %v1484
  %v1639 = vpop.f32.mrf.mxu0
  %v1640 = vadd.f32 %v1146, %v1639
  %1641 = vdwg.mxu0
  %1642 = vmatpush.msra.mxu0 %v140
  %1643 = vmatpush.msra.mxu0 %v137
  %1644 = vmatpush.msra.mxu0 %v134
  %1645 = vmatpush.msra.mxu0 %v131
  %1646 = vmatpush.msra.mxu0 %v128
  %1647 = vmatpush.msra.mxu0 %v125
  %1648 = vmatpush.msra.mxu0 %v122
  %1649 = vmatpush.msra.mxu0 %v119
  %1650 = vmatpush.msra.mxu0 %v116
  %1651 = vmatpush.msra.mxu0 %v113
  %1652 = vmatpush.msra.mxu0 %v110
  %1653 = vmatpush.msra.mxu0 %v107
  %1654 = vmatpush.msra.mxu0 %v104
  %1655 = vmatpush.msra.mxu0 %v101
  %1656 = vmatpush.msra.mxu0 %v98
  %1657 = vmatpush.msra.mxu0 %v95
  %1658 = vmatmul.f32.gmra.mxu0 %v1484
  %v1659 = vpop.f32.mrf.mxu0
  %v1660 = vadd.f32 %v1147, %v1659
  %1661 = vdwg.mxu0
  %v1662 = vadd.f32 %v1560, %v1620
  %v1663 = vxor.u32 %v1662, 2147483648
  %v1664 = vmul.f32 %v1663, 1.442695
  %v1665 = vpow.pop %v1664
  %v1666 = vadd.f32 %v1665, 1.0
  %v1667 = vrcp.pop %v1666
  %v1668 = vmul.f32 %v1666, %v1667
  %v1669 = vsub.f32 1.0, %v1668
  %v1670 = vmul.f32 %v1667, %v1669
  %v1671 = vadd.f32 %v1667, %v1670
  %vm1672 = vweird.f32 %v1666
  %vm1673 = vweird.f32 %v1667
  %vm1674 = vmor %vm1672, %vm1673
  %v1675 = vsel %vm1674, %v1667, %v1671
  %v1676 = vand.u32 2147483647, %v1666
  %vm1677 = vcmp.eq.f32.partialorder %v1676, 8.507059e+37
  %v1678 = vand.u32 %v1666, 2147483648
  %v1679 = vor.u32 1.1754944e-38, %v1678
  %v1680 = vsel %vm1677, %v1679, %v1675
  %v1681 = vmul.f32 1.0, %v1680
  %v1682 = vadd.f32 %v1580, %v1640
  %v1683 = vxor.u32 %v1682, 2147483648
  %v1684 = vmul.f32 %v1683, 1.442695
  %v1685 = vpow.pop %v1684
  %v1686 = vadd.f32 %v1685, 1.0
  %v1687 = vrcp.pop %v1686
  %v1688 = vmul.f32 %v1686, %v1687
  %v1689 = vsub.f32 1.0, %v1688
  %v1690 = vmul.f32 %v1687, %v1689
  %v1691 = vadd.f32 %v1687, %v1690
  %vm1692 = vweird.f32 %v1686
  %vm1693 = vweird.f32 %v1687
  %vm1694 = vmor %vm1692, %vm1693
  %v1695 = vsel %vm1694, %v1687, %v1691
  %v1696 = vand.u32 2147483647, %v1686
  %vm1697 = vcmp.eq.f32.partialorder %v1696, 8.507059e+37
  %v1698 = vand.u32 %v1686, 2147483648
  %v1699 = vor.u32 1.1754944e-38, %v1698
  %v1700 = vsel %vm1697, %v1699, %v1695
  %v1701 = vmul.f32 1.0, %v1700
  %v1702 = vmul.f32 %v1681, %v1660
  %v1703 = vadd.f32 %v1600, %v1702
  %v1704 = vtanh.pop %v1703
  %v1705 = vsub.f32 1.0, %v1701
  %v1706 = vmul.f32 %v1705, %v1704
  %v1707 = vmul.f32 %v1701, %v1484
  %v1708 = vadd.f32 %v1706, %v1707
  %1709 = vmatpush.msra.mxu0 %v157
  %1710 = vmatpush.msra.mxu0 %v156
  %1711 = vmatpush.msra.mxu0 %v155
  %1712 = vmatpush.msra.mxu0 %v154
  %1713 = vmatpush.msra.mxu0 %v153
  %1714 = vmatpush.msra.mxu0 %v152
  %1715 = vmatpush.msra.mxu0 %v151
  %1716 = vmatpush.msra.mxu0 %v150
  %1717 = vmatpush.msra.mxu0 %v149
  %1718 = vmatpush.msra.mxu0 %v148
  %1719 = vmatpush.msra.mxu0 %v147
  %1720 = vmatpush.msra.mxu0 %v146
  %1721 = vmatpush.msra.mxu0 %v145
  %1722 = vmatpush.msra.mxu0 %v144
  %1723 = vmatpush.msra.mxu0 %v143
  %1724 = vmatpush.msra.mxu0 %v142
  %1725 = vmatmul.f32.gmra.mxu0 %v1708
  %v1726 = vpop.f32.mrf.mxu0
  %v1727 = vadd.f32 %v1259, %v1726
  %1728 = vdwg.mxu0
  %v1729 = vsel %vm1281, %v1727, -inf
  %1730 = vmax.xlane.f32.xlu0 %v1729
  %v1731 = vpop.xlane.xlu0 %1730
  %v1732 = vsub.f32 %v1727, %v1731
  %v1733 = vmul.f32 %v1732, 1.442695
  %v1734 = vpow.pop %v1733
  %v1735 = vsel %vm1281, %v1734, 0.0
  %1736 = vadd.xlane.f32.xlu0 %v1735
  %v1737 = vpop.xlane.xlu0 %1736
  %v1738 = vlog2.pop %v1737
  %v1739 = vmul.f32 %v1738, 0.6931472
  %v1740 = vsub.f32 %v1732, %v1739
  %s1741 = scalar_lea.vmem %s9, 4
  %1742 = vst.msk [vmem:[%s1741] sm:$0x3] %vm1281, %v1740
  %vm1743 = vcmp.eq.f32.partialorder %v1727, %v1731
  %v1744 = vsel %vm1743, %v1078, 32
  %v1745 = vsel %vm1281, %v1744, 2147483647
  %v1746 = vand.u32 %v1745, 65535
  %v1747 = vshra.s32 %v1745, 16
  %v1748 = vcvt.s32.f32 %v1746
  %v1749 = vcvt.s32.f32 %v1747
  %1750 = vmin.xlane.f32.xlu0 %v1749
  %v1751 = vpop.xlane.xlu0 %1750
  %vm1752 = vcmp.eq.f32.partialorder %v1749, %v1751
  %v1753 = vsel %vm1752, %v1748, inf
  %1754 = vmin.xlane.f32.xlu0 %v1753
  %v1755 = vpop.xlane.xlu0 %1754
  %v1756 = vcvt.f32.s32 %v1755
  %v1757 = vcvt.f32.s32 %v1751
  %v1758 = vshll.u32 %v1757, 16
  %v1759 = vadd.s32 %v1758, %v1756
  %vm1760 = vcmp.eq.s32.totalorder %v1078, %v1759
  %v1761 = vsel %vm1760, 1, 0
  %v1762 = vcvt.s32.f32 %v1761
  %v1764 = vsel %vm1080, %v1762, 0
  %1766 = vmatpush.msra.mxu0 0.0
  %1767 = vmatpush.msra.mxu0 0.0
  %1768 = vmatpush.msra.mxu0 0.0
  %1769 = vmatpush.msra.mxu0 0.0
  %1770 = vmatpush.msra.mxu0 0.0
  %1771 = vmatpush.msra.mxu0 0.0
  %1772 = vmatpush.msra.mxu0 0.0
  %1773 = vmatpush.msra.mxu0 0.0
  %1774 = vmatpush.msra.mxu0 0.0
  %1775 = vmatpush.msra.mxu0 0.0
  %1776 = vmatpush.msra.mxu0 0.0
  %1777 = vmatpush.msra.mxu0 0.0
  %1778 = vmatpush.msra.mxu0 %v90
  %1779 = vmatpush.msra.mxu0 %v87
  %1780 = vmatpush.msra.mxu0 %v84
  %1781 = vmatpush.msra.mxu0 %v81
  %1782 = vmatmul.f32.gmra.mxu0 %v1764
  %v1783 = vpop.f32.mrf.mxu0
  %v1784 = vadd.f32 0.0, %v1783
  %1785 = vdwg.mxu0
  %1786 = vmatpush.msra.mxu0 0.0
  %1787 = vmatpush.msra.mxu0 0.0
  %1788 = vmatpush.msra.mxu0 0.0
  %1789 = vmatpush.msra.mxu0 0.0
  %1790 = vmatpush.msra.mxu0 0.0
  %1791 = vmatpush.msra.mxu0 0.0
  %1792 = vmatpush.msra.mxu0 0.0
  %1793 = vmatpush.msra.mxu0 0.0
  %1794 = vmatpush.msra.mxu0 0.0
  %1795 = vmatpush.msra.mxu0 0.0
  %1796 = vmatpush.msra.mxu0 0.0
  %1797 = vmatpush.msra.mxu0 0.0
  %1798 = vmatpush.msra.mxu0 %v91
  %1799 = vmatpush.msra.mxu0 %v88
  %1800 = vmatpush.msra.mxu0 %v85
  %1801 = vmatpush.msra.mxu0 %v82
  %1802 = vmatmul.f32.gmra.mxu0 %v1764
  %v1803 = vpop.f32.mrf.mxu0
  %v1804 = vadd.f32 0.0, %v1803
  %1805 = vdwg.mxu0
  %1806 = vmatpush.msra.mxu0 0.0
  %1807 = vmatpush.msra.mxu0 0.0
  %1808 = vmatpush.msra.mxu0 0.0
  %1809 = vmatpush.msra.mxu0 0.0
  %1810 = vmatpush.msra.mxu0 0.0
  %1811 = vmatpush.msra.mxu0 0.0
  %1812 = vmatpush.msra.mxu0 0.0
  %1813 = vmatpush.msra.mxu0 0.0
  %1814 = vmatpush.msra.mxu0 0.0
  %1815 = vmatpush.msra.mxu0 0.0
  %1816 = vmatpush.msra.mxu0 0.0
  %1817 = vmatpush.msra.mxu0 0.0
  %1818 = vmatpush.msra.mxu0 %v92
  %1819 = vmatpush.msra.mxu0 %v89
  %1820 = vmatpush.msra.mxu0 %v86
  %1821 = vmatpush.msra.mxu0 %v83
  %1822 = vmatmul.f32.gmra.mxu0 %v1764
  %v1823 = vpop.f32.mrf.mxu0
  %v1824 = vadd.f32 0.0, %v1823
  %1825 = vdwg.mxu0
  %1826 = vmatpush.msra.mxu0 %v138
  %1827 = vmatpush.msra.mxu0 %v135
  %1828 = vmatpush.msra.mxu0 %v132
  %1829 = vmatpush.msra.mxu0 %v129
  %1830 = vmatpush.msra.mxu0 %v126
  %1831 = vmatpush.msra.mxu0 %v123
  %1832 = vmatpush.msra.mxu0 %v120
  %1833 = vmatpush.msra.mxu0 %v117
  %1834 = vmatpush.msra.mxu0 %v114
  %1835 = vmatpush.msra.mxu0 %v111
  %1836 = vmatpush.msra.mxu0 %v108
  %1837 = vmatpush.msra.mxu0 %v105
  %1838 = vmatpush.msra.mxu0 %v102
  %1839 = vmatpush.msra.mxu0 %v99
  %1840 = vmatpush.msra.mxu0 %v96
  %1841 = vmatpush.msra.mxu0 %v93
  %1842 = vmatmul.f32.gmra.mxu0 %v1708
  %v1843 = vpop.f32.mrf.mxu0
  %v1844 = vadd.f32 %v1145, %v1843
  %1845 = vdwg.mxu0
  %1846 = vmatpush.msra.mxu0 %v139
  %1847 = vmatpush.msra.mxu0 %v136
  %1848 = vmatpush.msra.mxu0 %v133
  %1849 = vmatpush.msra.mxu0 %v130
  %1850 = vmatpush.msra.mxu0 %v127
  %1851 = vmatpush.msra.mxu0 %v124
  %1852 = vmatpush.msra.mxu0 %v121
  %1853 = vmatpush.msra.mxu0 %v118
  %1854 = vmatpush.msra.mxu0 %v115
  %1855 = vmatpush.msra.mxu0 %v112
  %1856 = vmatpush.msra.mxu0 %v109
  %1857 = vmatpush.msra.mxu0 %v106
  %1858 = vmatpush.msra.mxu0 %v103
  %1859 = vmatpush.msra.mxu0 %v100
  %1860 = vmatpush.msra.mxu0 %v97
  %1861 = vmatpush.msra.mxu0 %v94
  %1862 = vmatmul.f32.gmra.mxu0 %v1708
  %v1863 = vpop.f32.mrf.mxu0
  %v1864 = vadd.f32 %v1146, %v1863
  %1865 = vdwg.mxu0
  %1866 = vmatpush.msra.mxu0 %v140
  %1867 = vmatpush.msra.mxu0 %v137
  %1868 = vmatpush.msra.mxu0 %v134
  %1869 = vmatpush.msra.mxu0 %v131
  %1870 = vmatpush.msra.mxu0 %v128
  %1871 = vmatpush.msra.mxu0 %v125
  %1872 = vmatpush.msra.mxu0 %v122
  %1873 = vmatpush.msra.mxu0 %v119
  %1874 = vmatpush.msra.mxu0 %v116
  %1875 = vmatpush.msra.mxu0 %v113
  %1876 = vmatpush.msra.mxu0 %v110
  %1877 = vmatpush.msra.mxu0 %v107
  %1878 = vmatpush.msra.mxu0 %v104
  %1879 = vmatpush.msra.mxu0 %v101
  %1880 = vmatpush.msra.mxu0 %v98
  %1881 = vmatpush.msra.mxu0 %v95
  %1882 = vmatmul.f32.gmra.mxu0 %v1708
  %v1883 = vpop.f32.mrf.mxu0
  %v1884 = vadd.f32 %v1147, %v1883
  %1885 = vdwg.mxu0
  %v1886 = vadd.f32 %v1784, %v1844
  %v1887 = vxor.u32 %v1886, 2147483648
  %v1888 = vmul.f32 %v1887, 1.442695
  %v1889 = vpow.pop %v1888
  %v1890 = vadd.f32 %v1889, 1.0
  %v1891 = vrcp.pop %v1890
  %v1892 = vmul.f32 %v1890, %v1891
  %v1893 = vsub.f32 1.0, %v1892
  %v1894 = vmul.f32 %v1891, %v1893
  %v1895 = vadd.f32 %v1891, %v1894
  %vm1896 = vweird.f32 %v1890
  %vm1897 = vweird.f32 %v1891
  %vm1898 = vmor %vm1896, %vm1897
  %v1899 = vsel %vm1898, %v1891, %v1895
  %v1900 = vand.u32 2147483647, %v1890
  %vm1901 = vcmp.eq.f32.partialorder %v1900, 8.507059e+37
  %v1902 = vand.u32 %v1890, 2147483648
  %v1903 = vor.u32 1.1754944e-38, %v1902
  %v1904 = vsel %vm1901, %v1903, %v1899
  %v1905 = vmul.f32 1.0, %v1904
  %v1906 = vadd.f32 %v1804, %v1864
  %v1907 = vxor.u32 %v1906, 2147483648
  %v1908 = vmul.f32 %v1907, 1.442695
  %v1909 = vpow.pop %v1908
  %v1910 = vadd.f32 %v1909, 1.0
  %v1911 = vrcp.pop %v1910
  %v1912 = vmul.f32 %v1910, %v1911
  %v1913 = vsub.f32 1.0, %v1912
  %v1914 = vmul.f32 %v1911, %v1913
  %v1915 = vadd.f32 %v1911, %v1914
  %vm1916 = vweird.f32 %v1910
  %vm1917 = vweird.f32 %v1911
  %vm1918 = vmor %vm1916, %vm1917
  %v1919 = vsel %vm1918, %v1911, %v1915
  %v1920 = vand.u32 2147483647, %v1910
  %vm1921 = vcmp.eq.f32.partialorder %v1920, 8.507059e+37
  %v1922 = vand.u32 %v1910, 2147483648
  %v1923 = vor.u32 1.1754944e-38, %v1922
  %v1924 = vsel %vm1921, %v1923, %v1919
  %v1925 = vmul.f32 1.0, %v1924
  %v1926 = vmul.f32 %v1905, %v1884
  %v1927 = vadd.f32 %v1824, %v1926
  %v1928 = vtanh.pop %v1927
  %v1929 = vsub.f32 1.0, %v1925
  %v1930 = vmul.f32 %v1929, %v1928
  %v1931 = vmul.f32 %v1925, %v1708
  %v1932 = vadd.f32 %v1930, %v1931
  %1933 = vmatpush.msra.mxu0 %v157
  %1934 = vmatpush.msra.mxu0 %v156
  %1935 = vmatpush.msra.mxu0 %v155
  %1936 = vmatpush.msra.mxu0 %v154
  %1937 = vmatpush.msra.mxu0 %v153
  %1938 = vmatpush.msra.mxu0 %v152
  %1939 = vmatpush.msra.mxu0 %v151
  %1940 = vmatpush.msra.mxu0 %v150
  %1941 = vmatpush.msra.mxu0 %v149
  %1942 = vmatpush.msra.mxu0 %v148
  %1943 = vmatpush.msra.mxu0 %v147
  %1944 = vmatpush.msra.mxu0 %v146
  %1945 = vmatpush.msra.mxu0 %v145
  %1946 = vmatpush.msra.mxu0 %v144
  %1947 = vmatpush.msra.mxu0 %v143
  %1948 = vmatpush.msra.mxu0 %v142
  %1949 = vmatmul.f32.gmra.mxu0 %v1932
  %v1950 = vpop.f32.mrf.mxu0
  %v1951 = vadd.f32 %v1259, %v1950
  %1952 = vdwg.mxu0
  %v1953 = vsel %vm1281, %v1951, -inf
  %1954 = vmax.xlane.f32.xlu0 %v1953
  %v1955 = vpop.xlane.xlu0 %1954
  %v1956 = vsub.f32 %v1951, %v1955
  %v1957 = vmul.f32 %v1956, 1.442695
  %v1958 = vpow.pop %v1957
  %v1959 = vsel %vm1281, %v1958, 0.0
  %1960 = vadd.xlane.f32.xlu0 %v1959
  %v1961 = vpop.xlane.xlu0 %1960
  %v1962 = vlog2.pop %v1961
  %v1963 = vmul.f32 %v1962, 0.6931472
  %v1964 = vsub.f32 %v1956, %v1963
  %s1965 = scalar_lea.vmem %s9, 6
  %1966 = vst.msk [vmem:[%s1965] sm:$0x3] %vm1281, %v1964
  %vm1967 = vcmp.eq.f32.partialorder %v1951, %v1955
  %v1968 = vsel %vm1967, %v1078, 32
  %v1969 = vsel %vm1281, %v1968, 2147483647
  %v1970 = vand.u32 %v1969, 65535
  %v1971 = vshra.s32 %v1969, 16
  %v1972 = vcvt.s32.f32 %v1970
  %v1973 = vcvt.s32.f32 %v1971
  %1974 = vmin.xlane.f32.xlu0 %v1973
  %v1975 = vpop.xlane.xlu0 %1974
  %vm1976 = vcmp.eq.f32.partialorder %v1973, %v1975
  %v1977 = vsel %vm1976, %v1972, inf
  %1978 = vmin.xlane.f32.xlu0 %v1977
  %v1979 = vpop.xlane.xlu0 %1978
  %v1980 = vcvt.f32.s32 %v1979
  %v1981 = vcvt.f32.s32 %v1975
  %v1982 = vshll.u32 %v1981, 16
  %v1983 = vadd.s32 %v1982, %v1980
  %vm1984 = vcmp.eq.s32.totalorder %v1078, %v1983
  %v1985 = vsel %vm1984, 1, 0
  %v1986 = vcvt.s32.f32 %v1985
  %v1988 = vsel %vm1080, %v1986, 0
  %1990 = vmatpush.msra.mxu0 0.0
  %1991 = vmatpush.msra.mxu0 0.0
  %1992 = vmatpush.msra.mxu0 0.0
  %1993 = vmatpush.msra.mxu0 0.0
  %1994 = vmatpush.msra.mxu0 0.0
  %1995 = vmatpush.msra.mxu0 0.0
  %1996 = vmatpush.msra.mxu0 0.0
  %1997 = vmatpush.msra.mxu0 0.0
  %1998 = vmatpush.msra.mxu0 0.0
  %1999 = vmatpush.msra.mxu0 0.0
  %2000 = vmatpush.msra.mxu0 0.0
  %2001 = vmatpush.msra.mxu0 0.0
  %2002 = vmatpush.msra.mxu0 %v90
  %2003 = vmatpush.msra.mxu0 %v87
  %2004 = vmatpush.msra.mxu0 %v84
  %2005 = vmatpush.msra.mxu0 %v81
  %2006 = vmatmul.f32.gmra.mxu0 %v1988
  %v2007 = vpop.f32.mrf.mxu0
  %v2008 = vadd.f32 0.0, %v2007
  %2009 = vdwg.mxu0
  %2010 = vmatpush.msra.mxu0 0.0
  %2011 = vmatpush.msra.mxu0 0.0
  %2012 = vmatpush.msra.mxu0 0.0
  %2013 = vmatpush.msra.mxu0 0.0
  %2014 = vmatpush.msra.mxu0 0.0
  %2015 = vmatpush.msra.mxu0 0.0
  %2016 = vmatpush.msra.mxu0 0.0
  %2017 = vmatpush.msra.mxu0 0.0
  %2018 = vmatpush.msra.mxu0 0.0
  %2019 = vmatpush.msra.mxu0 0.0
  %2020 = vmatpush.msra.mxu0 0.0
  %2021 = vmatpush.msra.mxu0 0.0
  %2022 = vmatpush.msra.mxu0 %v91
  %2023 = vmatpush.msra.mxu0 %v88
  %2024 = vmatpush.msra.mxu0 %v85
  %2025 = vmatpush.msra.mxu0 %v82
  %2026 = vmatmul.f32.gmra.mxu0 %v1988
  %v2027 = vpop.f32.mrf.mxu0
  %v2028 = vadd.f32 0.0, %v2027
  %2029 = vdwg.mxu0
  %2030 = vmatpush.msra.mxu0 0.0
  %2031 = vmatpush.msra.mxu0 0.0
  %2032 = vmatpush.msra.mxu0 0.0
  %2033 = vmatpush.msra.mxu0 0.0
  %2034 = vmatpush.msra.mxu0 0.0
  %2035 = vmatpush.msra.mxu0 0.0
  %2036 = vmatpush.msra.mxu0 0.0
  %2037 = vmatpush.msra.mxu0 0.0
  %2038 = vmatpush.msra.mxu0 0.0
  %2039 = vmatpush.msra.mxu0 0.0
  %2040 = vmatpush.msra.mxu0 0.0
  %2041 = vmatpush.msra.mxu0 0.0
  %2042 = vmatpush.msra.mxu0 %v92
  %2043 = vmatpush.msra.mxu0 %v89
  %2044 = vmatpush.msra.mxu0 %v86
  %2045 = vmatpush.msra.mxu0 %v83
  %2046 = vmatmul.f32.gmra.mxu0 %v1988
  %v2047 = vpop.f32.mrf.mxu0
  %v2048 = vadd.f32 0.0, %v2047
  %2049 = vdwg.mxu0
  %2050 = vmatpush.msra.mxu0 %v138
  %2051 = vmatpush.msra.mxu0 %v135
  %2052 = vmatpush.msra.mxu0 %v132
  %2053 = vmatpush.msra.mxu0 %v129
  %2054 = vmatpush.msra.mxu0 %v126
  %2055 = vmatpush.msra.mxu0 %v123
  %2056 = vmatpush.msra.mxu0 %v120
  %2057 = vmatpush.msra.mxu0 %v117
  %2058 = vmatpush.msra.mxu0 %v114
  %2059 = vmatpush.msra.mxu0 %v111
  %2060 = vmatpush.msra.mxu0 %v108
  %2061 = vmatpush.msra.mxu0 %v105
  %2062 = vmatpush.msra.mxu0 %v102
  %2063 = vmatpush.msra.mxu0 %v99
  %2064 = vmatpush.msra.mxu0 %v96
  %2065 = vmatpush.msra.mxu0 %v93
  %2066 = vmatmul.f32.gmra.mxu0 %v1932
  %v2067 = vpop.f32.mrf.mxu0
  %v2068 = vadd.f32 %v1145, %v2067
  %2069 = vdwg.mxu0
  %2070 = vmatpush.msra.mxu0 %v139
  %2071 = vmatpush.msra.mxu0 %v136
  %2072 = vmatpush.msra.mxu0 %v133
  %2073 = vmatpush.msra.mxu0 %v130
  %2074 = vmatpush.msra.mxu0 %v127
  %2075 = vmatpush.msra.mxu0 %v124
  %2076 = vmatpush.msra.mxu0 %v121
  %2077 = vmatpush.msra.mxu0 %v118
  %2078 = vmatpush.msra.mxu0 %v115
  %2079 = vmatpush.msra.mxu0 %v112
  %2080 = vmatpush.msra.mxu0 %v109
  %2081 = vmatpush.msra.mxu0 %v106
  %2082 = vmatpush.msra.mxu0 %v103
  %2083 = vmatpush.msra.mxu0 %v100
  %2084 = vmatpush.msra.mxu0 %v97
  %2085 = vmatpush.msra.mxu0 %v94
  %2086 = vmatmul.f32.gmra.mxu0 %v1932
  %v2087 = vpop.f32.mrf.mxu0
  %v2088 = vadd.f32 %v1146, %v2087
  %2089 = vdwg.mxu0
  %2090 = vmatpush.msra.mxu0 %v140
  %2091 = vmatpush.msra.mxu0 %v137
  %2092 = vmatpush.msra.mxu0 %v134
  %2093 = vmatpush.msra.mxu0 %v131
  %2094 = vmatpush.msra.mxu0 %v128
  %2095 = vmatpush.msra.mxu0 %v125
  %2096 = vmatpush.msra.mxu0 %v122
  %2097 = vmatpush.msra.mxu0 %v119
  %2098 = vmatpush.msra.mxu0 %v116
  %2099 = vmatpush.msra.mxu0 %v113
  %2100 = vmatpush.msra.mxu0 %v110
  %2101 = vmatpush.msra.mxu0 %v107
  %2102 = vmatpush.msra.mxu0 %v104
  %2103 = vmatpush.msra.mxu0 %v101
  %2104 = vmatpush.msra.mxu0 %v98
  %2105 = vmatpush.msra.mxu0 %v95
  %2106 = vmatmul.f32.gmra.mxu0 %v1932
  %v2107 = vpop.f32.mrf.mxu0
  %v2108 = vadd.f32 %v1147, %v2107
  %2109 = vdwg.mxu0
  %v2110 = vadd.f32 %v2008, %v2068
  %v2111 = vxor.u32 %v2110, 2147483648
  %v2112 = vmul.f32 %v2111, 1.442695
  %v2113 = vpow.pop %v2112
  %v2114 = vadd.f32 %v2113, 1.0
  %v2115 = vrcp.pop %v2114
  %v2116 = vmul.f32 %v2114, %v2115
  %v2117 = vsub.f32 1.0, %v2116
  %v2118 = vmul.f32 %v2115, %v2117
  %v2119 = vadd.f32 %v2115, %v2118
  %vm2120 = vweird.f32 %v2114
  %vm2121 = vweird.f32 %v2115
  %vm2122 = vmor %vm2120, %vm2121
  %v2123 = vsel %vm2122, %v2115, %v2119
  %v2124 = vand.u32 2147483647, %v2114
  %vm2125 = vcmp.eq.f32.partialorder %v2124, 8.507059e+37
  %v2126 = vand.u32 %v2114, 2147483648
  %v2127 = vor.u32 1.1754944e-38, %v2126
  %v2128 = vsel %vm2125, %v2127, %v2123
  %v2129 = vmul.f32 1.0, %v2128
  %v2130 = vadd.f32 %v2028, %v2088
  %v2131 = vxor.u32 %v2130, 2147483648
  %v2132 = vmul.f32 %v2131, 1.442695
  %v2133 = vpow.pop %v2132
  %v2134 = vadd.f32 %v2133, 1.0
  %v2135 = vrcp.pop %v2134
  %v2136 = vmul.f32 %v2134, %v2135
  %v2137 = vsub.f32 1.0, %v2136
  %v2138 = vmul.f32 %v2135, %v2137
  %v2139 = vadd.f32 %v2135, %v2138
  %vm2140 = vweird.f32 %v2134
  %vm2141 = vweird.f32 %v2135
  %vm2142 = vmor %vm2140, %vm2141
  %v2143 = vsel %vm2142, %v2135, %v2139
  %v2144 = vand.u32 2147483647, %v2134
  %vm2145 = vcmp.eq.f32.partialorder %v2144, 8.507059e+37
  %v2146 = vand.u32 %v2134, 2147483648
  %v2147 = vor.u32 1.1754944e-38, %v2146
  %v2148 = vsel %vm2145, %v2147, %v2143
  %v2149 = vmul.f32 1.0, %v2148
  %v2150 = vmul.f32 %v2129, %v2108
  %v2151 = vadd.f32 %v2048, %v2150
  %v2152 = vtanh.pop %v2151
  %v2153 = vsub.f32 1.0, %v2149
  %v2154 = vmul.f32 %v2153, %v2152
  %v2155 = vmul.f32 %v2149, %v1932
  %v2156 = vadd.f32 %v2154, %v2155
  %2157 = vmatpush.msra.mxu0 %v157
  %2158 = vmatpush.msra.mxu0 %v156
  %2159 = vmatpush.msra.mxu0 %v155
  %2160 = vmatpush.msra.mxu0 %v154
  %2161 = vmatpush.msra.mxu0 %v153
  %2162 = vmatpush.msra.mxu0 %v152
  %2163 = vmatpush.msra.mxu0 %v151
  %2164 = vmatpush.msra.mxu0 %v150
  %2165 = vmatpush.msra.mxu0 %v149
  %2166 = vmatpush.msra.mxu0 %v148
  %2167 = vmatpush.msra.mxu0 %v147
  %2168 = vmatpush.msra.mxu0 %v146
  %2169 = vmatpush.msra.mxu0 %v145
  %2170 = vmatpush.msra.mxu0 %v144
  %2171 = vmatpush.msra.mxu0 %v143
  %2172 = vmatpush.msra.mxu0 %v142
  %2173 = vmatmul.f32.gmra.mxu0 %v2156
  %v2174 = vpop.f32.mrf.mxu0
  %v2175 = vadd.f32 %v1259, %v2174
  %2176 = vdwg.mxu0
  %v2177 = vsel %vm1281, %v2175, -inf
  %2178 = vmax.xlane.f32.xlu0 %v2177
  %v2179 = vpop.xlane.xlu0 %2178
  %v2180 = vsub.f32 %v2175, %v2179
  %v2181 = vmul.f32 %v2180, 1.442695
  %v2182 = vpow.pop %v2181
  %v2183 = vsel %vm1281, %v2182, 0.0
  %2184 = vadd.xlane.f32.xlu0 %v2183
  %v2185 = vpop.xlane.xlu0 %2184
  %v2186 = vlog2.pop %v2185
  %v2187 = vmul.f32 %v2186, 0.6931472
  %v2188 = vsub.f32 %v2180, %v2187
  %s2189 = scalar_lea.vmem %s9, 8
  %2190 = vst.msk [vmem:[%s2189] sm:$0x3] %vm1281, %v2188
  %vm2191 = vcmp.eq.f32.partialorder %v2175, %v2179
  %v2192 = vsel %vm2191, %v1078, 32
  %v2193 = vsel %vm1281, %v2192, 2147483647
  %v2194 = vand.u32 %v2193, 65535
  %v2195 = vshra.s32 %v2193, 16
  %v2196 = vcvt.s32.f32 %v2194
  %v2197 = vcvt.s32.f32 %v2195
  %2198 = vmin.xlane.f32.xlu0 %v2197
  %v2199 = vpop.xlane.xlu0 %2198
  %vm2200 = vcmp.eq.f32.partialorder %v2197, %v2199
  %v2201 = vsel %vm2200, %v2196, inf
  %2202 = vmin.xlane.f32.xlu0 %v2201
  %v2203 = vpop.xlane.xlu0 %2202
  %v2204 = vcvt.f32.s32 %v2203
  %v2205 = vcvt.f32.s32 %v2199
  %v2206 = vshll.u32 %v2205, 16
  %v2207 = vadd.s32 %v2206, %v2204
  %vm2208 = vcmp.eq.s32.totalorder %v1078, %v2207
  %v2209 = vsel %vm2208, 1, 0
  %v2210 = vcvt.s32.f32 %v2209
  %v2212 = vsel %vm1080, %v2210, 0
  %2214 = vmatpush.msra.mxu0 0.0
  %2215 = vmatpush.msra.mxu0 0.0
  %2216 = vmatpush.msra.mxu0 0.0
  %2217 = vmatpush.msra.mxu0 0.0
  %2218 = vmatpush.msra.mxu0 0.0
  %2219 = vmatpush.msra.mxu0 0.0
  %2220 = vmatpush.msra.mxu0 0.0
  %2221 = vmatpush.msra.mxu0 0.0
  %2222 = vmatpush.msra.mxu0 0.0
  %2223 = vmatpush.msra.mxu0 0.0
  %2224 = vmatpush.msra.mxu0 0.0
  %2225 = vmatpush.msra.mxu0 0.0
  %2226 = vmatpush.msra.mxu0 %v90
  %2227 = vmatpush.msra.mxu0 %v87
  %2228 = vmatpush.msra.mxu0 %v84
  %2229 = vmatpush.msra.mxu0 %v81
  %2230 = vmatmul.f32.gmra.mxu0 %v2212
  %v2231 = vpop.f32.mrf.mxu0
  %v2232 = vadd.f32 0.0, %v2231
  %2233 = vdwg.mxu0
  %2234 = vmatpush.msra.mxu0 0.0
  %2235 = vmatpush.msra.mxu0 0.0
  %2236 = vmatpush.msra.mxu0 0.0
  %2237 = vmatpush.msra.mxu0 0.0
  %2238 = vmatpush.msra.mxu0 0.0
  %2239 = vmatpush.msra.mxu0 0.0
  %2240 = vmatpush.msra.mxu0 0.0
  %2241 = vmatpush.msra.mxu0 0.0
  %2242 = vmatpush.msra.mxu0 0.0
  %2243 = vmatpush.msra.mxu0 0.0
  %2244 = vmatpush.msra.mxu0 0.0
  %2245 = vmatpush.msra.mxu0 0.0
  %2246 = vmatpush.msra.mxu0 %v91
  %2247 = vmatpush.msra.mxu0 %v88
  %2248 = vmatpush.msra.mxu0 %v85
  %2249 = vmatpush.msra.mxu0 %v82
  %2250 = vmatmul.f32.gmra.mxu0 %v2212
  %v2251 = vpop.f32.mrf.mxu0
  %v2252 = vadd.f32 0.0, %v2251
  %2253 = vdwg.mxu0
  %2254 = vmatpush.msra.mxu0 0.0
  %2255 = vmatpush.msra.mxu0 0.0
  %2256 = vmatpush.msra.mxu0 0.0
  %2257 = vmatpush.msra.mxu0 0.0
  %2258 = vmatpush.msra.mxu0 0.0
  %2259 = vmatpush.msra.mxu0 0.0
  %2260 = vmatpush.msra.mxu0 0.0
  %2261 = vmatpush.msra.mxu0 0.0
  %2262 = vmatpush.msra.mxu0 0.0
  %2263 = vmatpush.msra.mxu0 0.0
  %2264 = vmatpush.msra.mxu0 0.0
  %2265 = vmatpush.msra.mxu0 0.0
  %2266 = vmatpush.msra.mxu0 %v92
  %2267 = vmatpush.msra.mxu0 %v89
  %2268 = vmatpush.msra.mxu0 %v86
  %2269 = vmatpush.msra.mxu0 %v83
  %2270 = vmatmul.f32.gmra.mxu0 %v2212
  %v2271 = vpop.f32.mrf.mxu0
  %v2272 = vadd.f32 0.0, %v2271
  %2273 = vdwg.mxu0
  %2274 = vmatpush.msra.mxu0 %v138
  %2275 = vmatpush.msra.mxu0 %v135
  %2276 = vmatpush.msra.mxu0 %v132
  %2277 = vmatpush.msra.mxu0 %v129
  %2278 = vmatpush.msra.mxu0 %v126
  %2279 = vmatpush.msra.mxu0 %v123
  %2280 = vmatpush.msra.mxu0 %v120
  %2281 = vmatpush.msra.mxu0 %v117
  %2282 = vmatpush.msra.mxu0 %v114
  %2283 = vmatpush.msra.mxu0 %v111
  %2284 = vmatpush.msra.mxu0 %v108
  %2285 = vmatpush.msra.mxu0 %v105
  %2286 = vmatpush.msra.mxu0 %v102
  %2287 = vmatpush.msra.mxu0 %v99
  %2288 = vmatpush.msra.mxu0 %v96
  %2289 = vmatpush.msra.mxu0 %v93
  %2290 = vmatmul.f32.gmra.mxu0 %v2156
  %v2291 = vpop.f32.mrf.mxu0
  %v2292 = vadd.f32 %v1145, %v2291
  %2293 = vdwg.mxu0
  %2294 = vmatpush.msra.mxu0 %v139
  %2295 = vmatpush.msra.mxu0 %v136
  %2296 = vmatpush.msra.mxu0 %v133
  %2297 = vmatpush.msra.mxu0 %v130
  %2298 = vmatpush.msra.mxu0 %v127
  %2299 = vmatpush.msra.mxu0 %v124
  %2300 = vmatpush.msra.mxu0 %v121
  %2301 = vmatpush.msra.mxu0 %v118
  %2302 = vmatpush.msra.mxu0 %v115
  %2303 = vmatpush.msra.mxu0 %v112
  %2304 = vmatpush.msra.mxu0 %v109
  %2305 = vmatpush.msra.mxu0 %v106
  %2306 = vmatpush.msra.mxu0 %v103
  %2307 = vmatpush.msra.mxu0 %v100
  %2308 = vmatpush.msra.mxu0 %v97
  %2309 = vmatpush.msra.mxu0 %v94
  %2310 = vmatmul.f32.gmra.mxu0 %v2156
  %v2311 = vpop.f32.mrf.mxu0
  %v2312 = vadd.f32 %v1146, %v2311
  %2313 = vdwg.mxu0
  %2314 = vmatpush.msra.mxu0 %v140
  %2315 = vmatpush.msra.mxu0 %v137
  %2316 = vmatpush.msra.mxu0 %v134
  %2317 = vmatpush.msra.mxu0 %v131
  %2318 = vmatpush.msra.mxu0 %v128
  %2319 = vmatpush.msra.mxu0 %v125
  %2320 = vmatpush.msra.mxu0 %v122
  %2321 = vmatpush.msra.mxu0 %v119
  %2322 = vmatpush.msra.mxu0 %v116
  %2323 = vmatpush.msra.mxu0 %v113
  %2324 = vmatpush.msra.mxu0 %v110
  %2325 = vmatpush.msra.mxu0 %v107
  %2326 = vmatpush.msra.mxu0 %v104
  %2327 = vmatpush.msra.mxu0 %v101
  %2328 = vmatpush.msra.mxu0 %v98
  %2329 = vmatpush.msra.mxu0 %v95
  %2330 = vmatmul.f32.gmra.mxu0 %v2156
  %v2331 = vpop.f32.mrf.mxu0
  %v2332 = vadd.f32 %v1147, %v2331
  %2333 = vdwg.mxu0
  %v2334 = vadd.f32 %v2232, %v2292
  %v2335 = vxor.u32 %v2334, 2147483648
  %v2336 = vmul.f32 %v2335, 1.442695
  %v2337 = vpow.pop %v2336
  %v2338 = vadd.f32 %v2337, 1.0
  %v2339 = vrcp.pop %v2338
  %v2340 = vmul.f32 %v2338, %v2339
  %v2341 = vsub.f32 1.0, %v2340
  %v2342 = vmul.f32 %v2339, %v2341
  %v2343 = vadd.f32 %v2339, %v2342
  %vm2344 = vweird.f32 %v2338
  %vm2345 = vweird.f32 %v2339
  %vm2346 = vmor %vm2344, %vm2345
  %v2347 = vsel %vm2346, %v2339, %v2343
  %v2348 = vand.u32 2147483647, %v2338
  %vm2349 = vcmp.eq.f32.partialorder %v2348, 8.507059e+37
  %v2350 = vand.u32 %v2338, 2147483648
  %v2351 = vor.u32 1.1754944e-38, %v2350
  %v2352 = vsel %vm2349, %v2351, %v2347
  %v2353 = vmul.f32 1.0, %v2352
  %v2354 = vadd.f32 %v2252, %v2312
  %v2355 = vxor.u32 %v2354, 2147483648
  %v2356 = vmul.f32 %v2355, 1.442695
  %v2357 = vpow.pop %v2356
  %v2358 = vadd.f32 %v2357, 1.0
  %v2359 = vrcp.pop %v2358
  %v2360 = vmul.f32 %v2358, %v2359
  %v2361 = vsub.f32 1.0, %v2360
  %v2362 = vmul.f32 %v2359, %v2361
  %v2363 = vadd.f32 %v2359, %v2362
  %vm2364 = vweird.f32 %v2358
  %vm2365 = vweird.f32 %v2359
  %vm2366 = vmor %vm2364, %vm2365
  %v2367 = vsel %vm2366, %v2359, %v2363
  %v2368 = vand.u32 2147483647, %v2358
  %vm2369 = vcmp.eq.f32.partialorder %v2368, 8.507059e+37
  %v2370 = vand.u32 %v2358, 2147483648
  %v2371 = vor.u32 1.1754944e-38, %v2370
  %v2372 = vsel %vm2369, %v2371, %v2367
  %v2373 = vmul.f32 1.0, %v2372
  %v2374 = vmul.f32 %v2353, %v2332
  %v2375 = vadd.f32 %v2272, %v2374
  %v2376 = vtanh.pop %v2375
  %v2377 = vsub.f32 1.0, %v2373
  %v2378 = vmul.f32 %v2377, %v2376
  %v2379 = vmul.f32 %v2373, %v2156
  %v2380 = vadd.f32 %v2378, %v2379
  %2381 = vmatpush.msra.mxu0 %v157
  %2382 = vmatpush.msra.mxu0 %v156
  %2383 = vmatpush.msra.mxu0 %v155
  %2384 = vmatpush.msra.mxu0 %v154
  %2385 = vmatpush.msra.mxu0 %v153
  %2386 = vmatpush.msra.mxu0 %v152
  %2387 = vmatpush.msra.mxu0 %v151
  %2388 = vmatpush.msra.mxu0 %v150
  %2389 = vmatpush.msra.mxu0 %v149
  %2390 = vmatpush.msra.mxu0 %v148
  %2391 = vmatpush.msra.mxu0 %v147
  %2392 = vmatpush.msra.mxu0 %v146
  %2393 = vmatpush.msra.mxu0 %v145
  %2394 = vmatpush.msra.mxu0 %v144
  %2395 = vmatpush.msra.mxu0 %v143
  %2396 = vmatpush.msra.mxu0 %v142
  %2397 = vmatmul.f32.gmra.mxu0 %v2380
  %v2398 = vpop.f32.mrf.mxu0
  %v2399 = vadd.f32 %v1259, %v2398
  %2400 = vdwg.mxu0
  %v2401 = vsel %vm1281, %v2399, -inf
  %2402 = vmax.xlane.f32.xlu0 %v2401
  %v2403 = vpop.xlane.xlu0 %2402
  %v2404 = vsub.f32 %v2399, %v2403
  %v2405 = vmul.f32 %v2404, 1.442695
  %v2406 = vpow.pop %v2405
  %v2407 = vsel %vm1281, %v2406, 0.0
  %2408 = vadd.xlane.f32.xlu0 %v2407
  %v2409 = vpop.xlane.xlu0 %2408
  %v2410 = vlog2.pop %v2409
  %v2411 = vmul.f32 %v2410, 0.6931472
  %v2412 = vsub.f32 %v2404, %v2411
  %s2413 = scalar_lea.vmem %s9, 10
  %2414 = vst.msk [vmem:[%s2413] sm:$0x3] %vm1281, %v2412
  %vm2415 = vcmp.eq.f32.partialorder %v2399, %v2403
  %v2416 = vsel %vm2415, %v1078, 32
  %v2417 = vsel %vm1281, %v2416, 2147483647
  %v2418 = vand.u32 %v2417, 65535
  %v2419 = vshra.s32 %v2417, 16
  %v2420 = vcvt.s32.f32 %v2418
  %v2421 = vcvt.s32.f32 %v2419
  %2422 = vmin.xlane.f32.xlu0 %v2421
  %v2423 = vpop.xlane.xlu0 %2422
  %vm2424 = vcmp.eq.f32.partialorder %v2421, %v2423
  %v2425 = vsel %vm2424, %v2420, inf
  %2426 = vmin.xlane.f32.xlu0 %v2425
  %v2427 = vpop.xlane.xlu0 %2426
  %v2428 = vcvt.f32.s32 %v2427
  %v2429 = vcvt.f32.s32 %v2423
  %v2430 = vshll.u32 %v2429, 16
  %v2431 = vadd.s32 %v2430, %v2428
  %vm2432 = vcmp.eq.s32.totalorder %v1078, %v2431
  %v2433 = vsel %vm2432, 1, 0
  %v2434 = vcvt.s32.f32 %v2433
  %v2436 = vsel %vm1080, %v2434, 0
  %2438 = vmatpush.msra.mxu0 0.0
  %2439 = vmatpush.msra.mxu0 0.0
  %2440 = vmatpush.msra.mxu0 0.0
  %2441 = vmatpush.msra.mxu0 0.0
  %2442 = vmatpush.msra.mxu0 0.0
  %2443 = vmatpush.msra.mxu0 0.0
  %2444 = vmatpush.msra.mxu0 0.0
  %2445 = vmatpush.msra.mxu0 0.0
  %2446 = vmatpush.msra.mxu0 0.0
  %2447 = vmatpush.msra.mxu0 0.0
  %2448 = vmatpush.msra.mxu0 0.0
  %2449 = vmatpush.msra.mxu0 0.0
  %2450 = vmatpush.msra.mxu0 %v90
  %2451 = vmatpush.msra.mxu0 %v87
  %2452 = vmatpush.msra.mxu0 %v84
  %2453 = vmatpush.msra.mxu0 %v81
  %2454 = vmatmul.f32.gmra.mxu0 %v2436
  %v2455 = vpop.f32.mrf.mxu0
  %v2456 = vadd.f32 0.0, %v2455
  %2457 = vdwg.mxu0
  %2458 = vmatpush.msra.mxu0 0.0
  %2459 = vmatpush.msra.mxu0 0.0
  %2460 = vmatpush.msra.mxu0 0.0
  %2461 = vmatpush.msra.mxu0 0.0
  %2462 = vmatpush.msra.mxu0 0.0
  %2463 = vmatpush.msra.mxu0 0.0
  %2464 = vmatpush.msra.mxu0 0.0
  %2465 = vmatpush.msra.mxu0 0.0
  %2466 = vmatpush.msra.mxu0 0.0
  %2467 = vmatpush.msra.mxu0 0.0
  %2468 = vmatpush.msra.mxu0 0.0
  %2469 = vmatpush.msra.mxu0 0.0
  %2470 = vmatpush.msra.mxu0 %v91
  %2471 = vmatpush.msra.mxu0 %v88
  %2472 = vmatpush.msra.mxu0 %v85
  %2473 = vmatpush.msra.mxu0 %v82
  %2474 = vmatmul.f32.gmra.mxu0 %v2436
  %v2475 = vpop.f32.mrf.mxu0
  %v2476 = vadd.f32 0.0, %v2475
  %2477 = vdwg.mxu0
  %2478 = vmatpush.msra.mxu0 0.0
  %2479 = vmatpush.msra.mxu0 0.0
  %2480 = vmatpush.msra.mxu0 0.0
  %2481 = vmatpush.msra.mxu0 0.0
  %2482 = vmatpush.msra.mxu0 0.0
  %2483 = vmatpush.msra.mxu0 0.0
  %2484 = vmatpush.msra.mxu0 0.0
  %2485 = vmatpush.msra.mxu0 0.0
  %2486 = vmatpush.msra.mxu0 0.0
  %2487 = vmatpush.msra.mxu0 0.0
  %2488 = vmatpush.msra.mxu0 0.0
  %2489 = vmatpush.msra.mxu0 0.0
  %2490 = vmatpush.msra.mxu0 %v92
  %2491 = vmatpush.msra.mxu0 %v89
  %2492 = vmatpush.msra.mxu0 %v86
  %2493 = vmatpush.msra.mxu0 %v83
  %2494 = vmatmul.f32.gmra.mxu0 %v2436
  %v2495 = vpop.f32.mrf.mxu0
  %v2496 = vadd.f32 0.0, %v2495
  %2497 = vdwg.mxu0
  %2498 = vmatpush.msra.mxu0 %v138
  %2499 = vmatpush.msra.mxu0 %v135
  %2500 = vmatpush.msra.mxu0 %v132
  %2501 = vmatpush.msra.mxu0 %v129
  %2502 = vmatpush.msra.mxu0 %v126
  %2503 = vmatpush.msra.mxu0 %v123
  %2504 = vmatpush.msra.mxu0 %v120
  %2505 = vmatpush.msra.mxu0 %v117
  %2506 = vmatpush.msra.mxu0 %v114
  %2507 = vmatpush.msra.mxu0 %v111
  %2508 = vmatpush.msra.mxu0 %v108
  %2509 = vmatpush.msra.mxu0 %v105
  %2510 = vmatpush.msra.mxu0 %v102
  %2511 = vmatpush.msra.mxu0 %v99
  %2512 = vmatpush.msra.mxu0 %v96
  %2513 = vmatpush.msra.mxu0 %v93
  %2514 = vmatmul.f32.gmra.mxu0 %v2380
  %v2515 = vpop.f32.mrf.mxu0
  %v2516 = vadd.f32 %v1145, %v2515
  %2517 = vdwg.mxu0
  %2518 = vmatpush.msra.mxu0 %v139
  %2519 = vmatpush.msra.mxu0 %v136
  %2520 = vmatpush.msra.mxu0 %v133
  %2521 = vmatpush.msra.mxu0 %v130
  %2522 = vmatpush.msra.mxu0 %v127
  %2523 = vmatpush.msra.mxu0 %v124
  %2524 = vmatpush.msra.mxu0 %v121
  %2525 = vmatpush.msra.mxu0 %v118
  %2526 = vmatpush.msra.mxu0 %v115
  %2527 = vmatpush.msra.mxu0 %v112
  %2528 = vmatpush.msra.mxu0 %v109
  %2529 = vmatpush.msra.mxu0 %v106
  %2530 = vmatpush.msra.mxu0 %v103
  %2531 = vmatpush.msra.mxu0 %v100
  %2532 = vmatpush.msra.mxu0 %v97
  %2533 = vmatpush.msra.mxu0 %v94
  %2534 = vmatmul.f32.gmra.mxu0 %v2380
  %v2535 = vpop.f32.mrf.mxu0
  %v2536 = vadd.f32 %v1146, %v2535
  %2537 = vdwg.mxu0
  %2538 = vmatpush.msra.mxu0 %v140
  %2539 = vmatpush.msra.mxu0 %v137
  %2540 = vmatpush.msra.mxu0 %v134
  %2541 = vmatpush.msra.mxu0 %v131
  %2542 = vmatpush.msra.mxu0 %v128
  %2543 = vmatpush.msra.mxu0 %v125
  %2544 = vmatpush.msra.mxu0 %v122
  %2545 = vmatpush.msra.mxu0 %v119
  %2546 = vmatpush.msra.mxu0 %v116
  %2547 = vmatpush.msra.mxu0 %v113
  %2548 = vmatpush.msra.mxu0 %v110
  %2549 = vmatpush.msra.mxu0 %v107
  %2550 = vmatpush.msra.mxu0 %v104
  %2551 = vmatpush.msra.mxu0 %v101
  %2552 = vmatpush.msra.mxu0 %v98
  %2553 = vmatpush.msra.mxu0 %v95
  %2554 = vmatmul.f32.gmra.mxu0 %v2380
  %v2555 = vpop.f32.mrf.mxu0
  %v2556 = vadd.f32 %v1147, %v2555
  %2557 = vdwg.mxu0
  %v2558 = vadd.f32 %v2456, %v2516
  %v2559 = vxor.u32 %v2558, 2147483648
  %v2560 = vmul.f32 %v2559, 1.442695
  %v2561 = vpow.pop %v2560
  %v2562 = vadd.f32 %v2561, 1.0
  %v2563 = vrcp.pop %v2562
  %v2564 = vmul.f32 %v2562, %v2563
  %v2565 = vsub.f32 1.0, %v2564
  %v2566 = vmul.f32 %v2563, %v2565
  %v2567 = vadd.f32 %v2563, %v2566
  %vm2568 = vweird.f32 %v2562
  %vm2569 = vweird.f32 %v2563
  %vm2570 = vmor %vm2568, %vm2569
  %v2571 = vsel %vm2570, %v2563, %v2567
  %v2572 = vand.u32 2147483647, %v2562
  %vm2573 = vcmp.eq.f32.partialorder %v2572, 8.507059e+37
  %v2574 = vand.u32 %v2562, 2147483648
  %v2575 = vor.u32 1.1754944e-38, %v2574
  %v2576 = vsel %vm2573, %v2575, %v2571
  %v2577 = vmul.f32 1.0, %v2576
  %v2578 = vadd.f32 %v2476, %v2536
  %v2579 = vxor.u32 %v2578, 2147483648
  %v2580 = vmul.f32 %v2579, 1.442695
  %v2581 = vpow.pop %v2580
  %v2582 = vadd.f32 %v2581, 1.0
  %v2583 = vrcp.pop %v2582
  %v2584 = vmul.f32 %v2582, %v2583
  %v2585 = vsub.f32 1.0, %v2584
  %v2586 = vmul.f32 %v2583, %v2585
  %v2587 = vadd.f32 %v2583, %v2586
  %vm2588 = vweird.f32 %v2582
  %vm2589 = vweird.f32 %v2583
  %vm2590 = vmor %vm2588, %vm2589
  %v2591 = vsel %vm2590, %v2583, %v2587
  %v2592 = vand.u32 2147483647, %v2582
  %vm2593 = vcmp.eq.f32.partialorder %v2592, 8.507059e+37
  %v2594 = vand.u32 %v2582, 2147483648
  %v2595 = vor.u32 1.1754944e-38, %v2594
  %v2596 = vsel %vm2593, %v2595, %v2591
  %v2597 = vmul.f32 1.0, %v2596
  %v2598 = vmul.f32 %v2577, %v2556
  %v2599 = vadd.f32 %v2496, %v2598
  %v2600 = vtanh.pop %v2599
  %v2601 = vsub.f32 1.0, %v2597
  %v2602 = vmul.f32 %v2601, %v2600
  %v2603 = vmul.f32 %v2597, %v2380
  %v2604 = vadd.f32 %v2602, %v2603
  %2605 = vmatpush.msra.mxu0 %v157
  %2606 = vmatpush.msra.mxu0 %v156
  %2607 = vmatpush.msra.mxu0 %v155
  %2608 = vmatpush.msra.mxu0 %v154
  %2609 = vmatpush.msra.mxu0 %v153
  %2610 = vmatpush.msra.mxu0 %v152
  %2611 = vmatpush.msra.mxu0 %v151
  %2612 = vmatpush.msra.mxu0 %v150
  %2613 = vmatpush.msra.mxu0 %v149
  %2614 = vmatpush.msra.mxu0 %v148
  %2615 = vmatpush.msra.mxu0 %v147
  %2616 = vmatpush.msra.mxu0 %v146
  %2617 = vmatpush.msra.mxu0 %v145
  %2618 = vmatpush.msra.mxu0 %v144
  %2619 = vmatpush.msra.mxu0 %v143
  %2620 = vmatpush.msra.mxu0 %v142
  %2621 = vmatmul.f32.gmra.mxu0 %v2604
  %v2622 = vpop.f32.mrf.mxu0
  %v2623 = vadd.f32 %v1259, %v2622
  %2624 = vdwg.mxu0
  %v2625 = vsel %vm1281, %v2623, -inf
  %2626 = vmax.xlane.f32.xlu0 %v2625
  %v2627 = vpop.xlane.xlu0 %2626
  %v2628 = vsub.f32 %v2623, %v2627
  %v2629 = vmul.f32 %v2628, 1.442695
  %v2630 = vpow.pop %v2629
  %v2631 = vsel %vm1281, %v2630, 0.0
  %2632 = vadd.xlane.f32.xlu0 %v2631
  %v2633 = vpop.xlane.xlu0 %2632
  %v2634 = vlog2.pop %v2633
  %v2635 = vmul.f32 %v2634, 0.6931472
  %v2636 = vsub.f32 %v2628, %v2635
  %s2637 = scalar_lea.vmem %s9, 12
  %2638 = vst.msk [vmem:[%s2637] sm:$0x3] %vm1281, %v2636
  %vm2639 = vcmp.eq.f32.partialorder %v2623, %v2627
  %v2640 = vsel %vm2639, %v1078, 32
  %v2641 = vsel %vm1281, %v2640, 2147483647
  %v2642 = vand.u32 %v2641, 65535
  %v2643 = vshra.s32 %v2641, 16
  %v2644 = vcvt.s32.f32 %v2642
  %v2645 = vcvt.s32.f32 %v2643
  %2646 = vmin.xlane.f32.xlu0 %v2645
  %v2647 = vpop.xlane.xlu0 %2646
  %vm2648 = vcmp.eq.f32.partialorder %v2645, %v2647
  %v2649 = vsel %vm2648, %v2644, inf
  %2650 = vmin.xlane.f32.xlu0 %v2649
  %v2651 = vpop.xlane.xlu0 %2650
  %v2652 = vcvt.f32.s32 %v2651
  %v2653 = vcvt.f32.s32 %v2647
  %v2654 = vshll.u32 %v2653, 16
  %v2655 = vadd.s32 %v2654, %v2652
  %vm2656 = vcmp.eq.s32.totalorder %v1078, %v2655
  %v2657 = vsel %vm2656, 1, 0
  %v2658 = vcvt.s32.f32 %v2657
  %v2660 = vsel %vm1080, %v2658, 0
  %2662 = vmatpush.msra.mxu0 0.0
  %2663 = vmatpush.msra.mxu0 0.0
  %2664 = vmatpush.msra.mxu0 0.0
  %2665 = vmatpush.msra.mxu0 0.0
  %2666 = vmatpush.msra.mxu0 0.0
  %2667 = vmatpush.msra.mxu0 0.0
  %2668 = vmatpush.msra.mxu0 0.0
  %2669 = vmatpush.msra.mxu0 0.0
  %2670 = vmatpush.msra.mxu0 0.0
  %2671 = vmatpush.msra.mxu0 0.0
  %2672 = vmatpush.msra.mxu0 0.0
  %2673 = vmatpush.msra.mxu0 0.0
  %2674 = vmatpush.msra.mxu0 %v90
  %2675 = vmatpush.msra.mxu0 %v87
  %2676 = vmatpush.msra.mxu0 %v84
  %2677 = vmatpush.msra.mxu0 %v81
  %2678 = vmatmul.f32.gmra.mxu0 %v2660
  %v2679 = vpop.f32.mrf.mxu0
  %v2680 = vadd.f32 0.0, %v2679
  %2681 = vdwg.mxu0
  %2682 = vmatpush.msra.mxu0 0.0
  %2683 = vmatpush.msra.mxu0 0.0
  %2684 = vmatpush.msra.mxu0 0.0
  %2685 = vmatpush.msra.mxu0 0.0
  %2686 = vmatpush.msra.mxu0 0.0
  %2687 = vmatpush.msra.mxu0 0.0
  %2688 = vmatpush.msra.mxu0 0.0
  %2689 = vmatpush.msra.mxu0 0.0
  %2690 = vmatpush.msra.mxu0 0.0
  %2691 = vmatpush.msra.mxu0 0.0
  %2692 = vmatpush.msra.mxu0 0.0
  %2693 = vmatpush.msra.mxu0 0.0
  %2694 = vmatpush.msra.mxu0 %v91
  %2695 = vmatpush.msra.mxu0 %v88
  %2696 = vmatpush.msra.mxu0 %v85
  %2697 = vmatpush.msra.mxu0 %v82
  %2698 = vmatmul.f32.gmra.mxu0 %v2660
  %v2699 = vpop.f32.mrf.mxu0
  %v2700 = vadd.f32 0.0, %v2699
  %2701 = vdwg.mxu0
  %2702 = vmatpush.msra.mxu0 0.0
  %2703 = vmatpush.msra.mxu0 0.0
  %2704 = vmatpush.msra.mxu0 0.0
  %2705 = vmatpush.msra.mxu0 0.0
  %2706 = vmatpush.msra.mxu0 0.0
  %2707 = vmatpush.msra.mxu0 0.0
  %2708 = vmatpush.msra.mxu0 0.0
  %2709 = vmatpush.msra.mxu0 0.0
  %2710 = vmatpush.msra.mxu0 0.0
  %2711 = vmatpush.msra.mxu0 0.0
  %2712 = vmatpush.msra.mxu0 0.0
  %2713 = vmatpush.msra.mxu0 0.0
  %2714 = vmatpush.msra.mxu0 %v92
  %2715 = vmatpush.msra.mxu0 %v89
  %2716 = vmatpush.msra.mxu0 %v86
  %2717 = vmatpush.msra.mxu0 %v83
  %2718 = vmatmul.f32.gmra.mxu0 %v2660
  %v2719 = vpop.f32.mrf.mxu0
  %v2720 = vadd.f32 0.0, %v2719
  %2721 = vdwg.mxu0
  %2722 = vmatpush.msra.mxu0 %v138
  %2723 = vmatpush.msra.mxu0 %v135
  %2724 = vmatpush.msra.mxu0 %v132
  %2725 = vmatpush.msra.mxu0 %v129
  %2726 = vmatpush.msra.mxu0 %v126
  %2727 = vmatpush.msra.mxu0 %v123
  %2728 = vmatpush.msra.mxu0 %v120
  %2729 = vmatpush.msra.mxu0 %v117
  %2730 = vmatpush.msra.mxu0 %v114
  %2731 = vmatpush.msra.mxu0 %v111
  %2732 = vmatpush.msra.mxu0 %v108
  %2733 = vmatpush.msra.mxu0 %v105
  %2734 = vmatpush.msra.mxu0 %v102
  %2735 = vmatpush.msra.mxu0 %v99
  %2736 = vmatpush.msra.mxu0 %v96
  %2737 = vmatpush.msra.mxu0 %v93
  %2738 = vmatmul.f32.gmra.mxu0 %v2604
  %v2739 = vpop.f32.mrf.mxu0
  %v2740 = vadd.f32 %v1145, %v2739
  %2741 = vdwg.mxu0
  %2742 = vmatpush.msra.mxu0 %v139
  %2743 = vmatpush.msra.mxu0 %v136
  %2744 = vmatpush.msra.mxu0 %v133
  %2745 = vmatpush.msra.mxu0 %v130
  %2746 = vmatpush.msra.mxu0 %v127
  %2747 = vmatpush.msra.mxu0 %v124
  %2748 = vmatpush.msra.mxu0 %v121
  %2749 = vmatpush.msra.mxu0 %v118
  %2750 = vmatpush.msra.mxu0 %v115
  %2751 = vmatpush.msra.mxu0 %v112
  %2752 = vmatpush.msra.mxu0 %v109
  %2753 = vmatpush.msra.mxu0 %v106
  %2754 = vmatpush.msra.mxu0 %v103
  %2755 = vmatpush.msra.mxu0 %v100
  %2756 = vmatpush.msra.mxu0 %v97
  %2757 = vmatpush.msra.mxu0 %v94
  %2758 = vmatmul.f32.gmra.mxu0 %v2604
  %v2759 = vpop.f32.mrf.mxu0
  %v2760 = vadd.f32 %v1146, %v2759
  %2761 = vdwg.mxu0
  %2762 = vmatpush.msra.mxu0 %v140
  %2763 = vmatpush.msra.mxu0 %v137
  %2764 = vmatpush.msra.mxu0 %v134
  %2765 = vmatpush.msra.mxu0 %v131
  %2766 = vmatpush.msra.mxu0 %v128
  %2767 = vmatpush.msra.mxu0 %v125
  %2768 = vmatpush.msra.mxu0 %v122
  %2769 = vmatpush.msra.mxu0 %v119
  %2770 = vmatpush.msra.mxu0 %v116
  %2771 = vmatpush.msra.mxu0 %v113
  %2772 = vmatpush.msra.mxu0 %v110
  %2773 = vmatpush.msra.mxu0 %v107
  %2774 = vmatpush.msra.mxu0 %v104
  %2775 = vmatpush.msra.mxu0 %v101
  %2776 = vmatpush.msra.mxu0 %v98
  %2777 = vmatpush.msra.mxu0 %v95
  %2778 = vmatmul.f32.gmra.mxu0 %v2604
  %v2779 = vpop.f32.mrf.mxu0
  %v2780 = vadd.f32 %v1147, %v2779
  %2781 = vdwg.mxu0
  %v2782 = vadd.f32 %v2680, %v2740
  %v2783 = vxor.u32 %v2782, 2147483648
  %v2784 = vmul.f32 %v2783, 1.442695
  %v2785 = vpow.pop %v2784
  %v2786 = vadd.f32 %v2785, 1.0
  %v2787 = vrcp.pop %v2786
  %v2788 = vmul.f32 %v2786, %v2787
  %v2789 = vsub.f32 1.0, %v2788
  %v2790 = vmul.f32 %v2787, %v2789
  %v2791 = vadd.f32 %v2787, %v2790
  %vm2792 = vweird.f32 %v2786
  %vm2793 = vweird.f32 %v2787
  %vm2794 = vmor %vm2792, %vm2793
  %v2795 = vsel %vm2794, %v2787, %v2791
  %v2796 = vand.u32 2147483647, %v2786
  %vm2797 = vcmp.eq.f32.partialorder %v2796, 8.507059e+37
  %v2798 = vand.u32 %v2786, 2147483648
  %v2799 = vor.u32 1.1754944e-38, %v2798
  %v2800 = vsel %vm2797, %v2799, %v2795
  %v2801 = vmul.f32 1.0, %v2800
  %v2802 = vadd.f32 %v2700, %v2760
  %v2803 = vxor.u32 %v2802, 2147483648
  %v2804 = vmul.f32 %v2803, 1.442695
  %v2805 = vpow.pop %v2804
  %v2806 = vadd.f32 %v2805, 1.0
  %v2807 = vrcp.pop %v2806
  %v2808 = vmul.f32 %v2806, %v2807
  %v2809 = vsub.f32 1.0, %v2808
  %v2810 = vmul.f32 %v2807, %v2809
  %v2811 = vadd.f32 %v2807, %v2810
  %vm2812 = vweird.f32 %v2806
  %vm2813 = vweird.f32 %v2807
  %vm2814 = vmor %vm2812, %vm2813
  %v2815 = vsel %vm2814, %v2807, %v2811
  %v2816 = vand.u32 2147483647, %v2806
  %vm2817 = vcmp.eq.f32.partialorder %v2816, 8.507059e+37
  %v2818 = vand.u32 %v2806, 2147483648
  %v2819 = vor.u32 1.1754944e-38, %v2818
  %v2820 = vsel %vm2817, %v2819, %v2815
  %v2821 = vmul.f32 1.0, %v2820
  %v2822 = vmul.f32 %v2801, %v2780
  %v2823 = vadd.f32 %v2720, %v2822
  %v2824 = vtanh.pop %v2823
  %v2825 = vsub.f32 1.0, %v2821
  %v2826 = vmul.f32 %v2825, %v2824
  %v2827 = vmul.f32 %v2821, %v2604
  %v2828 = vadd.f32 %v2826, %v2827
  %2829 = vmatpush.msra.mxu0 %v157
  %2830 = vmatpush.msra.mxu0 %v156
  %2831 = vmatpush.msra.mxu0 %v155
  %2832 = vmatpush.msra.mxu0 %v154
  %2833 = vmatpush.msra.mxu0 %v153
  %2834 = vmatpush.msra.mxu0 %v152
  %2835 = vmatpush.msra.mxu0 %v151
  %2836 = vmatpush.msra.mxu0 %v150
  %2837 = vmatpush.msra.mxu0 %v149
  %2838 = vmatpush.msra.mxu0 %v148
  %2839 = vmatpush.msra.mxu0 %v147
  %2840 = vmatpush.msra.mxu0 %v146
  %2841 = vmatpush.msra.mxu0 %v145
  %2842 = vmatpush.msra.mxu0 %v144
  %2843 = vmatpush.msra.mxu0 %v143
  %2844 = vmatpush.msra.mxu0 %v142
  %2845 = vmatmul.f32.gmra.mxu0 %v2828
  %v2846 = vpop.f32.mrf.mxu0
  %v2847 = vadd.f32 %v1259, %v2846
  %2848 = vdwg.mxu0
  %v2849 = vsel %vm1281, %v2847, -inf
  %2850 = vmax.xlane.f32.xlu0 %v2849
  %v2851 = vpop.xlane.xlu0 %2850
  %v2852 = vsub.f32 %v2847, %v2851
  %v2853 = vmul.f32 %v2852, 1.442695
  %v2854 = vpow.pop %v2853
  %v2855 = vsel %vm1281, %v2854, 0.0
  %2856 = vadd.xlane.f32.xlu0 %v2855
  %v2857 = vpop.xlane.xlu0 %2856
  %v2858 = vlog2.pop %v2857
  %v2859 = vmul.f32 %v2858, 0.6931472
  %v2860 = vsub.f32 %v2852, %v2859
  %s2861 = scalar_lea.vmem %s9, 14
  %2862 = vst.msk [vmem:[%s2861] sm:$0x3] %vm1281, %v2860
  // Predicated region
  $region38: #{seq2seq_forward.1} parent=0 // pred_check
    _
  $region39: #{seq2seq_forward.1} parent=0 // pred_check_branch
    %2864 = sbr.rel (0) target = $region41
  $region40: #{seq2seq_forward.1} parent=0 // pred_region
    _
  $region41: #{seq2seq_forward.1} parent=0 // pred_fallthru
    _
  // Predicated region
  $region42: #{seq2seq_forward.1} parent=0 // pred_check
    _
  $region43: #{seq2seq_forward.1} parent=0 // pred_check_branch
    %2866 = sbr.rel (0) target = $region45
  $region44: #{seq2seq_forward.1} parent=0 // pred_region
    _
  $region45: #{seq2seq_forward.1} parent=0 // pred_fallthru
    _

</llo_original>
